<compile_context>
chip_gen: v7x
topology: tpu7x:2x2x1
jax: 0.10.0
libtpu: 0.0.40
codegen_flags: <defaults>
</compile_context>

<pallas_src>
import jax
import jax.numpy as jnp
from jax import lax
from jax.experimental import pallas as pl
from jax.experimental.pallas import tpu as pltpu

# ---- scaled-down CLIP-ViT-style config (synthetic; NOT a checkpoint load) ----
IMG = 28                      # stand-in for 224
PATCH = 14                    # same patch size as CLIP-ViT-L/14
CHANNELS = 3
GH = GW = IMG // PATCH        # 2 x 2 patch grid
NUM_PATCHES = GH * GW         # 4
SEQ_LEN = NUM_PATCHES + 1     # CLS + patches = 5
S_PAD = 8                     # token rows padded to a sublane multiple (attention-masked)

VIS_DIM = 128                 # stand-in for 1024 (lane-dense: multiple of 128)
NUM_HEADS = 4
HEAD_DIM = VIS_DIM // NUM_HEADS
MLP_DIM = 4 * VIS_DIM
NUM_LAYERS = 2                # stand-in for 24
HIDDEN_SIZE = 32              # config.hidden_size
HIDDEN_PAD = 128              # lane-dense padded output width (sliced afterwards)
LN_EPS = 1e-5

PATCH_K = CHANNELS * PATCH * PATCH      # 588
PATCH_K_PAD = 640                       # padded to a multiple of 128
NEG_INF = -1e30

CLIP_MEAN = jnp.array([0.48145466, 0.4578275, 0.40821073], dtype=jnp.float32)
CLIP_STD = jnp.array([0.26862954, 0.26130258, 0.27577711], dtype=jnp.float32)


# =============================== fused Pallas kernel ===============================

def _fused_vit_kernel(pslab_ref, emb_ref, mask_ref, patch_w_ref,
                      preg_ref, preb_ref,
                      ln1g_ref, ln1b_ref, wqkv_ref, bqkv_ref, wo_ref, bo_ref,
                      ln2g_ref, ln2b_ref, w1_ref, b1_ref, w2_ref, b2_ref,
                      projw_ref, projb_ref,
                      out_ref, h_ref, attn_ref):
    """grid = (group, layer).  h_ref carries the folded-batch activation slab
    (rows = images_per_group * S_PAD) across the layer axis in VMEM."""
    l = pl.program_id(1)

    def layer_norm(x, g, b):
        mean = jnp.mean(x, axis=-1, keepdims=True)
        var = jnp.mean(jnp.square(x - mean), axis=-1, keepdims=True)
        return (x - mean) * lax.rsqrt(var + LN_EPS) * g + b

    # ---- embeddings + pre-LN: only on the first layer step of each group ----
    @pl.when(l == 0)
    def _():
        # One matmul patch-embeds every folded image (zero slab rows -> zero pe rows).
        pe = jnp.dot(pslab_ref[0], patch_w_ref[...],
                     preferred_element_type=jnp.float32)            # (M, D) f32
        # emb_ref already holds pos embeddings tiled per image with CLS merged into row 0.
        h_ref[...] = layer_norm(pe + emb_ref[...], preg_ref[...], preb_ref[...])

    # ---- encoder layer l (pre-LN transformer block) ----
    h = h_ref[...]                                                   # (M, D) f32
    resid = h
    x = layer_norm(h, ln1g_ref[0], ln1b_ref[0])
    # 1/sqrt(head_dim) is pre-folded into the Q columns of wqkv.
    qkv = (jnp.dot(x.astype(jnp.bfloat16), wqkv_ref[0],
                   preferred_element_type=jnp.float32)
           + bqkv_ref[0]).astype(jnp.bfloat16)                       # (M, 3D) bf16

    bias = mask_ref[...]                                             # (M, M) additive mask
    for hi in range(NUM_HEADS):
        lo = hi * HEAD_DIM
        q = qkv[:, lo:lo + HEAD_DIM]
        k = qkv[:, VIS_DIM + lo:VIS_DIM + lo + HEAD_DIM]
        v = qkv[:, 2 * VIS_DIM + lo:2 * VIS_DIM + lo + HEAD_DIM]
        s = jnp.dot(q, k.T, preferred_element_type=jnp.float32) + bias
        s = s - jnp.max(s, axis=-1, keepdims=True)
        p = jnp.exp(s)                                               # f32 softmax
        inv = pl.reciprocal(jnp.sum(p, axis=-1, keepdims=True), approx=True)
        o = jnp.dot(p.astype(jnp.bfloat16), v,
                    preferred_element_type=jnp.float32) * inv        # (M, Dh) f32
        # Lane-offset concat buffer: output projection becomes ONE K=128 matmul.
        attn_ref[:, lo:lo + HEAD_DIM] = o.astype(jnp.bfloat16)

    attn = jnp.dot(attn_ref[...], wo_ref[0], preferred_element_type=jnp.float32)
    h = resid + attn + bo_ref[0]

    # ---- MLP block (pre-LN, quick_gelu) ----
    resid = h
    x = layer_norm(h, ln2g_ref[0], ln2b_ref[0])
    x = jnp.dot(x.astype(jnp.bfloat16), w1_ref[0],
                preferred_element_type=jnp.float32) + b1_ref[0]
    x = x * jax.nn.sigmoid(1.702 * x)                                # quick_gelu in f32
    x = jnp.dot(x.astype(jnp.bfloat16), w2_ref[0],
                preferred_element_type=jnp.float32) + b2_ref[0]
    h = resid + x
    h_ref[...] = h

    # ---- final projection (self.proj) fused at the last layer step ----
    @pl.when(l == NUM_LAYERS - 1)
    def _():
        out_ref[0] = jnp.dot(h.astype(jnp.bfloat16), projw_ref[...],
                             preferred_element_type=jnp.float32) + projb_ref[...]


# ================================ Model glue =================================

def clip_preprocess(images_nchw):
    # TODO(synk): CLIPProcessor's bicubic resize-to-224 + center-crop has no clean Pallas
    # equivalent; synthetic inputs are generated at the target resolution already.
    x = images_nchw.astype(jnp.float32) / 255.0
    mean = CLIP_MEAN.reshape(1, CHANNELS, 1, 1)
    std = CLIP_STD.reshape(1, CHANNELS, 1, 1)
    return (x - mean) / std


def image_feature_extractor_forward(image_raw_inputs, params, num_groups=1):
    """num_groups: leading 'parallel' grid axis. Use 1 on single-TC chips (v5e/v6e,
    maximum batch fold); use 2 on v7x to shard the folded batch over both TensorCores.
    Must divide the batch size."""
    pixel_values = clip_preprocess(image_raw_inputs)                 # NCHW
    B = pixel_values.shape[0]
    assert B % num_groups == 0
    bg = B // num_groups                                             # images per group
    mg = bg * S_PAD                                                  # folded rows per group

    # Patch-embedding conv (stride=kernel=PATCH, bias=False) == patch-extract + matmul.
    # Patchify in the XLA wrapper (layout plumbing only), lay out as a token-row slab
    # (row 0 = CLS slot, rows SEQ_LEN..S_PAD-1 = padding -> zero rows), pad K to lanes, bf16.
    patches = pixel_values.reshape(B, CHANNELS, GH, PATCH, GW, PATCH)
    patches = patches.transpose(0, 2, 4, 1, 3, 5).reshape(B, NUM_PATCHES, PATCH_K)
    pslab = jnp.pad(patches, ((0, 0), (1, S_PAD - 1 - NUM_PATCHES),
                              (0, PATCH_K_PAD - PATCH_K))).astype(jnp.bfloat16)
    pslab = pslab.reshape(num_groups, mg, PATCH_K_PAD)

    # CLS + positional embeddings merged and tiled to the folded row layout.
    base = params['pos_emb'].at[0:1, :].add(params['class_emb'])     # (S_PAD, D)
    emb_base = jnp.tile(base, (bg, 1))                               # (mg, D) f32

    # Block-diagonal additive attention mask: no cross-image attention; padded token
    # rows (SEQ_LEN..S_PAD-1 of each image) are masked out as keys.
    qi = jnp.arange(mg)[:, None]
    kj = jnp.arange(mg)[None, :]
    mask = jnp.where((qi // S_PAD == kj // S_PAD) & (kj % S_PAD < SEQ_LEN),
                     0.0, NEG_INF).astype(jnp.float32)               # (mg, mg)

    def const_spec(shape):
        return pl.BlockSpec(shape, lambda g, l: (0,) * len(shape))

    def layer_spec(shape):
        return pl.BlockSpec((1,) + shape, lambda g, l: (l, 0, 0))

    in_specs = [
        pl.BlockSpec((1, mg, PATCH_K_PAD), lambda g, l: (g, 0, 0)),  # patch slab
        const_spec((mg, VIS_DIM)),              # emb_base (pos + CLS, tiled)
        const_spec((mg, mg)),                   # additive attention mask
        const_spec((PATCH_K_PAD, VIS_DIM)),     # patch_w
        const_spec((1, VIS_DIM)),               # pre_ln_g
        const_spec((1, VIS_DIM)),               # pre_ln_b
        layer_spec((1, VIS_DIM)),               # ln1_g
        layer_spec((1, VIS_DIM)),               # ln1_b
        layer_spec((VIS_DIM, 3 * VIS_DIM)),     # wqkv (fused q/k/v, Q pre-scaled)
        layer_spec((1, 3 * VIS_DIM)),           # bqkv
        layer_spec((VIS_DIM, VIS_DIM)),         # wo
        layer_spec((1, VIS_DIM)),               # bo
        layer_spec((1, VIS_DIM)),               # ln2_g
        layer_spec((1, VIS_DIM)),               # ln2_b
        layer_spec((VIS_DIM, MLP_DIM)),         # w1
        layer_spec((1, MLP_DIM)),               # b1
        layer_spec((MLP_DIM, VIS_DIM)),         # w2
        layer_spec((1, VIS_DIM)),               # b2
        const_spec((VIS_DIM, HIDDEN_PAD)),      # proj_w (padded cols zero)
        const_spec((1, HIDDEN_PAD)),            # proj_b
    ]

    out = pl.pallas_call(
        _fused_vit_kernel,
        out_shape=jax.ShapeDtypeStruct((num_groups, mg, HIDDEN_PAD), jnp.float32),
        grid=(num_groups, NUM_LAYERS),
        in_specs=in_specs,
        out_specs=pl.BlockSpec((1, mg, HIDDEN_PAD), lambda g, l: (g, 0, 0)),
        scratch_shapes=[pltpu.VMEM((mg, VIS_DIM), jnp.float32),    # activation carry
                        pltpu.VMEM((mg, VIS_DIM), jnp.bfloat16)],  # head-concat buffer
        compiler_params=pltpu.CompilerParams(
            dimension_semantics=("parallel", "arbitrary")),
    )(pslab, emb_base, mask, params['patch_w'],
      params['pre_ln_g'], params['pre_ln_b'],
      params['ln1_g'], params['ln1_b'], params['wqkv'], params['bqkv'],
      params['wo'], params['bo'], params['ln2_g'], params['ln2_b'],
      params['w1'], params['b1'], params['w2'], params['b2'],
      params['proj_w'], params['proj_b'])

    # Strip the token / hidden padding (last_hidden_state @ proj already applied in-kernel).
    out = out.reshape(B, S_PAD, HIDDEN_PAD)
    return out[:, :SEQ_LEN, :HIDDEN_SIZE]


# ============================ deterministic init =============================

def init_params(key):
    def normal(k, shape, scale=0.02):
        return scale * jax.random.normal(k, shape, dtype=jnp.float32)

    keys = iter(jax.random.split(key, 64))

    patch_w = normal(next(keys), (PATCH_K, VIS_DIM))
    patch_w = jnp.pad(patch_w, ((0, PATCH_K_PAD - PATCH_K), (0, 0))).astype(jnp.bfloat16)

    pos_emb = normal(next(keys), (SEQ_LEN, VIS_DIM))
    pos_emb = jnp.pad(pos_emb, ((0, S_PAD - SEQ_LEN), (0, 0)))

    proj_w = normal(next(keys), (VIS_DIM, HIDDEN_SIZE))
    proj_w = jnp.pad(proj_w, ((0, 0), (0, HIDDEN_PAD - HIDDEN_SIZE))).astype(jnp.bfloat16)
    proj_b = jnp.pad(normal(next(keys), (1, HIDDEN_SIZE)),
                     ((0, 0), (0, HIDDEN_PAD - HIDDEN_SIZE)))

    attn_scale = HEAD_DIM ** -0.5
    wqkv, wo, w1, w2 = [], [], [], []
    for _ in range(NUM_LAYERS):
        w = normal(next(keys), (VIS_DIM, 3 * VIS_DIM))
        # Fold 1/sqrt(head_dim) into the Q columns (the Q bias, zero here, would also
        # need pre-scaling when loading a real checkpoint).
        w = w.at[:, :VIS_DIM].multiply(attn_scale)
        wqkv.append(w)
        wo.append(normal(next(keys), (VIS_DIM, VIS_DIM)))
        w1.append(normal(next(keys), (VIS_DIM, MLP_DIM)))
        w2.append(normal(next(keys), (MLP_DIM, VIS_DIM)))

    return {
        'patch_w': patch_w,
        'class_emb': normal(next(keys), (1, VIS_DIM)),
        'pos_emb': pos_emb,
        'pre_ln_g': jnp.ones((1, VIS_DIM), jnp.float32),
        'pre_ln_b': jnp.zeros((1, VIS_DIM), jnp.float32),
        'ln1_g': jnp.ones((NUM_LAYERS, 1, VIS_DIM), jnp.float32),
        'ln1_b': jnp.zeros((NUM_LAYERS, 1, VIS_DIM), jnp.float32),
        'ln2_g': jnp.ones((NUM_LAYERS, 1, VIS_DIM), jnp.float32),
        'ln2_b': jnp.zeros((NUM_LAYERS, 1, VIS_DIM), jnp.float32),
        'wqkv': jnp.stack(wqkv).astype(jnp.bfloat16),
        'bqkv': jnp.zeros((NUM_LAYERS, 1, 3 * VIS_DIM), jnp.float32),
        'wo': jnp.stack(wo).astype(jnp.bfloat16),
        'bo': jnp.zeros((NUM_LAYERS, 1, VIS_DIM), jnp.float32),
        'w1': jnp.stack(w1).astype(jnp.bfloat16),
        'b1': jnp.zeros((NUM_LAYERS, 1, MLP_DIM), jnp.float32),
        'w2': jnp.stack(w2).astype(jnp.bfloat16),
        'b2': jnp.zeros((NUM_LAYERS, 1, VIS_DIM), jnp.float32),
        'proj_w': proj_w,
        'proj_b': proj_b,
    }


if __name__ == "__main__":
    key = jax.random.PRNGKey(0)
    pkey, ikey = jax.random.split(key)
    params = init_params(pkey)

    # Raw image inputs (values in [0, 255)), NCHW like the PyTorch module expects.
    image_raw_inputs = jax.random.uniform(
        ikey, (2, CHANNELS, IMG, IMG), minval=0.0, maxval=255.0, dtype=jnp.float32)

    # Default path: fully batch-folded, grid = (1, NUM_LAYERS).
    fwd = jax.jit(lambda x: image_feature_extractor_forward(x, params, num_groups=1))
    out = fwd(image_raw_inputs)
    jax.block_until_ready(out)
    assert out.shape == (2, SEQ_LEN, HIDDEN_SIZE), out.shape
    assert out.dtype == jnp.float32
    assert bool(jnp.all(jnp.isfinite(out)))

    # v7x path: same kernel, folded batch split across 2 parallel groups (one per TC).
    fwd2 = jax.jit(lambda x: image_feature_extractor_forward(x, params, num_groups=2))
    out2 = fwd2(image_raw_inputs)
    jax.block_until_ready(out2)
    assert bool(jnp.allclose(out, out2, atol=2e-3, rtol=2e-3))

    print("KERNEL_OK")
</pallas_src>

<mosaic_0001>
module attributes {stable_mosaic.version = 11 : i64} {
  func.func @_fused_vit_kernel(%arg0: i32, %arg1: i32, %arg2: memref<1x16x640xbf16, #tpu.memory_space<vmem>>, %arg3: memref<16x128xf32, #tpu.memory_space<vmem>>, %arg4: memref<16x16xf32, #tpu.memory_space<vmem>>, %arg5: memref<640x128xbf16, #tpu.memory_space<vmem>>, %arg6: memref<1x128xf32, #tpu.memory_space<vmem>>, %arg7: memref<1x128xf32, #tpu.memory_space<vmem>>, %arg8: memref<1x1x128xf32, #tpu.memory_space<vmem>>, %arg9: memref<1x1x128xf32, #tpu.memory_space<vmem>>, %arg10: memref<1x128x384xbf16, #tpu.memory_space<vmem>>, %arg11: memref<1x1x384xf32, #tpu.memory_space<vmem>>, %arg12: memref<1x128x128xbf16, #tpu.memory_space<vmem>>, %arg13: memref<1x1x128xf32, #tpu.memory_space<vmem>>, %arg14: memref<1x1x128xf32, #tpu.memory_space<vmem>>, %arg15: memref<1x1x128xf32, #tpu.memory_space<vmem>>, %arg16: memref<1x128x512xbf16, #tpu.memory_space<vmem>>, %arg17: memref<1x1x512xf32, #tpu.memory_space<vmem>>, %arg18: memref<1x512x128xbf16, #tpu.memory_space<vmem>>, %arg19: memref<1x1x128xf32, #tpu.memory_space<vmem>>, %arg20: memref<128x128xbf16, #tpu.memory_space<vmem>>, %arg21: memref<1x128xf32, #tpu.memory_space<vmem>>, %arg22: memref<1x16x128xf32, #tpu.memory_space<vmem>>, %arg23: memref<16x128xf32, #tpu.memory_space<vmem>>, %arg24: memref<16x128xbf16, #tpu.memory_space<vmem>>) attributes {dimension_semantics = [#tpu.dimension_semantics<parallel>, #tpu.dimension_semantics<arbitrary>], iteration_bounds = array<i64: 1, 2>, scalar_prefetch = 0 : i64, scratch_operands = 2 : i64, tpu.core_type = #tpu.core_type<tc>, window_params = [{transform_indices = @transform_0, window_bounds = array<i64: 1, 16, 640>}, {pipeline_mode = #tpu.pipeline_mode<synchronous>, transform_indices = @transform_1, window_bounds = array<i64: 16, 128>}, {pipeline_mode = #tpu.pipeline_mode<synchronous>, transform_indices = @transform_2, window_bounds = array<i64: 16, 16>}, {pipeline_mode = #tpu.pipeline_mode<synchronous>, transform_indices = @transform_3, window_bounds = array<i64: 640, 128>}, {pipeline_mode = #tpu.pipeline_mode<synchronous>, transform_indices = @transform_4, window_bounds = array<i64: 1, 128>}, {pipeline_mode = #tpu.pipeline_mode<synchronous>, transform_indices = @transform_5, window_bounds = array<i64: 1, 128>}, {transform_indices = @transform_6, window_bounds = array<i64: 1, 1, 128>}, {transform_indices = @transform_7, window_bounds = array<i64: 1, 1, 128>}, {transform_indices = @transform_8, window_bounds = array<i64: 1, 128, 384>}, {transform_indices = @transform_9, window_bounds = array<i64: 1, 1, 384>}, {transform_indices = @transform_10, window_bounds = array<i64: 1, 128, 128>}, {transform_indices = @transform_11, window_bounds = array<i64: 1, 1, 128>}, {transform_indices = @transform_12, window_bounds = array<i64: 1, 1, 128>}, {transform_indices = @transform_13, window_bounds = array<i64: 1, 1, 128>}, {transform_indices = @transform_14, window_bounds = array<i64: 1, 128, 512>}, {transform_indices = @transform_15, window_bounds = array<i64: 1, 1, 512>}, {transform_indices = @transform_16, window_bounds = array<i64: 1, 512, 128>}, {transform_indices = @transform_17, window_bounds = array<i64: 1, 1, 128>}, {pipeline_mode = #tpu.pipeline_mode<synchronous>, transform_indices = @transform_18, window_bounds = array<i64: 128, 128>}, {pipeline_mode = #tpu.pipeline_mode<synchronous>, transform_indices = @transform_19, window_bounds = array<i64: 1, 128>}, {transform_indices = @transform_20, window_bounds = array<i64: 1, 16, 128>}]} {
    %c0_i32 = arith.constant 0 : i32
    %0 = arith.cmpi eq, %arg1, %c0_i32 : i32
    %1 = arith.extui %0 : i1 to i32
    %c0_i32_0 = arith.constant 0 : i32
    %2 = arith.cmpi ne, %1, %c0_i32_0 : i32
    scf.if %2 {
      %c0_81 = arith.constant 0 : index
      %c0_82 = arith.constant 0 : index
      %c0_83 = arith.constant 0 : index
      %184 = vector.load %arg2[%c0_81, %c0_82, %c0_83] : memref<1x16x640xbf16, #tpu.memory_space<vmem>>, vector<1x16x640xbf16>
      %185 = vector.shape_cast %184 : vector<1x16x640xbf16> to vector<16x640xbf16>
      %c0_84 = arith.constant 0 : index
      %c0_85 = arith.constant 0 : index
      %186 = vector.load %arg5[%c0_84, %c0_85] : memref<640x128xbf16, #tpu.memory_space<vmem>>, vector<640x128xbf16>
      %cst_86 = arith.constant dense<0.000000e+00> : vector<16x128xf32>
      %187 = tpu.matmul %185, %186, %cst_86 {dimension_numbers = #tpu.dot_dimension_numbers<[1], [0], [0], [1], [0, 0, 1, 1], [], []>} : vector<16x640xbf16>, vector<640x128xbf16>, vector<16x128xf32> -> vector<16x128xf32>
      %c0_87 = arith.constant 0 : index
      %c0_88 = arith.constant 0 : index
      %188 = vector.load %arg3[%c0_87, %c0_88] : memref<16x128xf32, #tpu.memory_space<vmem>>, vector<16x128xf32>
      %189 = arith.addf %187, %188 : vector<16x128xf32>
      %c0_89 = arith.constant 0 : index
      %c0_90 = arith.constant 0 : index
      %190 = vector.load %arg6[%c0_89, %c0_90] : memref<1x128xf32, #tpu.memory_space<vmem>>, vector<1x128xf32>
      %c0_91 = arith.constant 0 : index
      %c0_92 = arith.constant 0 : index
      %191 = vector.load %arg7[%c0_91, %c0_92] : memref<1x128xf32, #tpu.memory_space<vmem>>, vector<1x128xf32>
      %cst_93 = arith.constant dense<0.000000e+00> : vector<16xf32>
      %192 = vector.multi_reduction <add>, %189, %cst_93 [1] : vector<16x128xf32> to vector<16xf32>
      %193 = vector.shape_cast %192 : vector<16xf32> to vector<16x1xf32>
      %cst_94 = arith.constant 1.280000e+02 : f32
      %194 = vector.broadcast %cst_94 : f32 to vector<16x1xf32>
      %195 = arith.divf %193, %194 : vector<16x1xf32>
      %196 = vector.broadcast %195 : vector<16x1xf32> to vector<16x128xf32>
      %197 = arith.subf %189, %196 : vector<16x128xf32>
      %198 = arith.mulf %197, %197 : vector<16x128xf32>
      %cst_95 = arith.constant dense<0.000000e+00> : vector<16xf32>
      %199 = vector.multi_reduction <add>, %198, %cst_95 [1] : vector<16x128xf32> to vector<16xf32>
      %200 = vector.shape_cast %199 : vector<16xf32> to vector<16x1xf32>
      %cst_96 = arith.constant 1.280000e+02 : f32
      %201 = vector.broadcast %cst_96 : f32 to vector<16x1xf32>
      %202 = arith.divf %200, %201 : vector<16x1xf32>
      %203 = vector.broadcast %195 : vector<16x1xf32> to vector<16x128xf32>
      %204 = arith.subf %189, %203 : vector<16x128xf32>
      %cst_97 = arith.constant 9.99999974E-6 : f32
      %205 = vector.broadcast %cst_97 : f32 to vector<16x1xf32>
      %206 = arith.addf %202, %205 : vector<16x1xf32>
      %207 = math.rsqrt %206 : vector<16x1xf32>
      %208 = vector.broadcast %207 : vector<16x1xf32> to vector<16x128xf32>
      %209 = arith.mulf %204, %208 : vector<16x128xf32>
      %210 = vector.broadcast %190 : vector<1x128xf32> to vector<16x128xf32>
      %211 = arith.mulf %209, %210 : vector<16x128xf32>
      %212 = vector.broadcast %191 : vector<1x128xf32> to vector<16x128xf32>
      %213 = arith.addf %211, %212 : vector<16x128xf32>
      %c0_98 = arith.constant 0 : index
      %c0_99 = arith.constant 0 : index
      %214 = vector.load %arg23[%c0_98, %c0_99] : memref<16x128xf32, #tpu.memory_space<vmem>>, vector<16x128xf32>
      tpu.vector_store %arg23[%c0_98, %c0_99], %213 {strides = array<i32>} : memref<16x128xf32, #tpu.memory_space<vmem>>, vector<16x128xf32>,
    } else {
    }
    %c0 = arith.constant 0 : index
    %c0_1 = arith.constant 0 : index
    %3 = vector.load %arg23[%c0, %c0_1] : memref<16x128xf32, #tpu.memory_space<vmem>>, vector<16x128xf32>
    %c0_2 = arith.constant 0 : index
    %c0_3 = arith.constant 0 : index
    %c0_4 = arith.constant 0 : index
    %4 = vector.load %arg8[%c0_2, %c0_3, %c0_4] : memref<1x1x128xf32, #tpu.memory_space<vmem>>, vector<1x1x128xf32>
    %5 = vector.shape_cast %4 : vector<1x1x128xf32> to vector<1x128xf32>
    %c0_5 = arith.constant 0 : index
    %c0_6 = arith.constant 0 : index
    %c0_7 = arith.constant 0 : index
    %6 = vector.load %arg9[%c0_5, %c0_6, %c0_7] : memref<1x1x128xf32, #tpu.memory_space<vmem>>, vector<1x1x128xf32>
    %7 = vector.shape_cast %6 : vector<1x1x128xf32> to vector<1x128xf32>
    %cst = arith.constant dense<0.000000e+00> : vector<16xf32>
    %8 = vector.multi_reduction <add>, %3, %cst [1] : vector<16x128xf32> to vector<16xf32>
    %9 = vector.shape_cast %8 : vector<16xf32> to vector<16x1xf32>
    %cst_8 = arith.constant 1.280000e+02 : f32
    %10 = vector.broadcast %cst_8 : f32 to vector<16x1xf32>
    %11 = arith.divf %9, %10 : vector<16x1xf32>
    %12 = vector.broadcast %11 : vector<16x1xf32> to vector<16x128xf32>
    %13 = arith.subf %3, %12 : vector<16x128xf32>
    %14 = arith.mulf %13, %13 : vector<16x128xf32>
    %cst_9 = arith.constant dense<0.000000e+00> : vector<16xf32>
    %15 = vector.multi_reduction <add>, %14, %cst_9 [1] : vector<16x128xf32> to vector<16xf32>
    %16 = vector.shape_cast %15 : vector<16xf32> to vector<16x1xf32>
    %cst_10 = arith.constant 1.280000e+02 : f32
    %17 = vector.broadcast %cst_10 : f32 to vector<16x1xf32>
    %18 = arith.divf %16, %17 : vector<16x1xf32>
    %19 = vector.broadcast %11 : vector<16x1xf32> to vector<16x128xf32>
    %20 = arith.subf %3, %19 : vector<16x128xf32>
    %cst_11 = arith.constant 9.99999974E-6 : f32
    %21 = vector.broadcast %cst_11 : f32 to vector<16x1xf32>
    %22 = arith.addf %18, %21 : vector<16x1xf32>
    %23 = math.rsqrt %22 : vector<16x1xf32>
    %24 = vector.broadcast %23 : vector<16x1xf32> to vector<16x128xf32>
    %25 = arith.mulf %20, %24 : vector<16x128xf32>
    %26 = vector.broadcast %5 : vector<1x128xf32> to vector<16x128xf32>
    %27 = arith.mulf %25, %26 : vector<16x128xf32>
    %28 = vector.broadcast %7 : vector<1x128xf32> to vector<16x128xf32>
    %29 = arith.addf %27, %28 : vector<16x128xf32>
    %30 = arith.truncf %29 : vector<16x128xf32> to vector<16x128xbf16>
    %c0_12 = arith.constant 0 : index
    %c0_13 = arith.constant 0 : index
    %c0_14 = arith.constant 0 : index
    %31 = vector.load %arg10[%c0_12, %c0_13, %c0_14] : memref<1x128x384xbf16, #tpu.memory_space<vmem>>, vector<1x128x384xbf16>
    %32 = vector.shape_cast %31 : vector<1x128x384xbf16> to vector<128x384xbf16>
    %cst_15 = arith.constant dense<0.000000e+00> : vector<16x384xf32>
    %33 = tpu.matmul %30, %32, %cst_15 {dimension_numbers = #tpu.dot_dimension_numbers<[1], [0], [0], [1], [0, 0, 1, 1], [], []>} : vector<16x128xbf16>, vector<128x384xbf16>, vector<16x384xf32> -> vector<16x384xf32>
    %c0_16 = arith.constant 0 : index
    %c0_17 = arith.constant 0 : index
    %c0_18 = arith.constant 0 : index
    %34 = vector.load %arg11[%c0_16, %c0_17, %c0_18] : memref<1x1x384xf32, #tpu.memory_space<vmem>>, vector<1x1x384xf32>
    %35 = vector.shape_cast %34 : vector<1x1x384xf32> to vector<1x384xf32>
    %36 = vector.broadcast %35 : vector<1x384xf32> to vector<16x384xf32>
    %37 = arith.addf %33, %36 : vector<16x384xf32>
    %38 = arith.truncf %37 : vector<16x384xf32> to vector<16x384xbf16>
    %c0_19 = arith.constant 0 : index
    %c0_20 = arith.constant 0 : index
    %39 = vector.load %arg4[%c0_19, %c0_20] : memref<16x16xf32, #tpu.memory_space<vmem>>, vector<16x16xf32>
    %40 = vector.extract_strided_slice %38 {offsets = [0, 0], sizes = [16, 32], strides = [1, 1]} : vector<16x384xbf16> to vector<16x32xbf16>
    %41 = vector.extract_strided_slice %38 {offsets = [0, 128], sizes = [16, 32], strides = [1, 1]} : vector<16x384xbf16> to vector<16x32xbf16>
    %42 = vector.extract_strided_slice %38 {offsets = [0, 256], sizes = [16, 32], strides = [1, 1]} : vector<16x384xbf16> to vector<16x32xbf16>
    %43 = tpu.transpose %41, [1, 0] : vector<16x32xbf16> -> vector<32x16xbf16>
    %cst_21 = arith.constant dense<0.000000e+00> : vector<16x16xf32>
    %44 = tpu.matmul %40, %43, %cst_21 {dimension_numbers = #tpu.dot_dimension_numbers<[1], [0], [0], [1], [0, 0, 1, 1], [], []>} : vector<16x32xbf16>, vector<32x16xbf16>, vector<16x16xf32> -> vector<16x16xf32>
    %45 = arith.addf %44, %39 : vector<16x16xf32>
    %cst_22 = arith.constant dense<0xFF800000> : vector<16xf32>
    %46 = vector.multi_reduction <maximumf>, %45, %cst_22 [1] : vector<16x16xf32> to vector<16xf32>
    %47 = vector.shape_cast %46 : vector<16xf32> to vector<16x1xf32>
    %48 = vector.broadcast %47 : vector<16x1xf32> to vector<16x16xf32>
    %49 = arith.subf %45, %48 : vector<16x16xf32>
    %50 = math.exp %49 : vector<16x16xf32>
    %cst_23 = arith.constant dense<0.000000e+00> : vector<16xf32>
    %51 = vector.multi_reduction <add>, %50, %cst_23 [1] : vector<16x16xf32> to vector<16xf32>
    %52 = vector.shape_cast %51 : vector<16xf32> to vector<16x1xf32>
    %53 = tpu.reciprocal %52 {approx = true} : vector<16x1xf32> -> vector<16x1xf32>
    %54 = arith.truncf %50 : vector<16x16xf32> to vector<16x16xbf16>
    %cst_24 = arith.constant dense<0.000000e+00> : vector<16x32xf32>
    %55 = tpu.matmul %54, %42, %cst_24 {dimension_numbers = #tpu.dot_dimension_numbers<[1], [0], [0], [1], [0, 0, 1, 1], [], []>} : vector<16x16xbf16>, vector<16x32xbf16>, vector<16x32xf32> -> vector<16x32xf32>
    %56 = vector.broadcast %53 : vector<16x1xf32> to vector<16x32xf32>
    %57 = arith.mulf %55, %56 : vector<16x32xf32>
    %58 = arith.truncf %57 : vector<16x32xf32> to vector<16x32xbf16>
    %c0_25 = arith.constant 0 : index
    %c0_26 = arith.constant 0 : index
    %59 = vector.load %arg24[%c0_25, %c0_26] : memref<16x128xbf16, #tpu.memory_space<vmem>>, vector<16x32xbf16>
    tpu.vector_store %arg24[%c0_25, %c0_26], %58 {strides = array<i32>} : memref<16x128xbf16, #tpu.memory_space<vmem>>, vector<16x32xbf16>,
    %60 = vector.extract_strided_slice %38 {offsets = [0, 32], sizes = [16, 32], strides = [1, 1]} : vector<16x384xbf16> to vector<16x32xbf16>
    %61 = vector.extract_strided_slice %38 {offsets = [0, 160], sizes = [16, 32], strides = [1, 1]} : vector<16x384xbf16> to vector<16x32xbf16>
    %62 = vector.extract_strided_slice %38 {offsets = [0, 288], sizes = [16, 32], strides = [1, 1]} : vector<16x384xbf16> to vector<16x32xbf16>
    %63 = tpu.transpose %61, [1, 0] : vector<16x32xbf16> -> vector<32x16xbf16>
    %cst_27 = arith.constant dense<0.000000e+00> : vector<16x16xf32>
    %64 = tpu.matmul %60, %63, %cst_27 {dimension_numbers = #tpu.dot_dimension_numbers<[1], [0], [0], [1], [0, 0, 1, 1], [], []>} : vector<16x32xbf16>, vector<32x16xbf16>, vector<16x16xf32> -> vector<16x16xf32>
    %65 = arith.addf %64, %39 : vector<16x16xf32>
    %cst_28 = arith.constant dense<0xFF800000> : vector<16xf32>
    %66 = vector.multi_reduction <maximumf>, %65, %cst_28 [1] : vector<16x16xf32> to vector<16xf32>
    %67 = vector.shape_cast %66 : vector<16xf32> to vector<16x1xf32>
    %68 = vector.broadcast %67 : vector<16x1xf32> to vector<16x16xf32>
    %69 = arith.subf %65, %68 : vector<16x16xf32>
    %70 = math.exp %69 : vector<16x16xf32>
    %cst_29 = arith.constant dense<0.000000e+00> : vector<16xf32>
    %71 = vector.multi_reduction <add>, %70, %cst_29 [1] : vector<16x16xf32> to vector<16xf32>
    %72 = vector.shape_cast %71 : vector<16xf32> to vector<16x1xf32>
    %73 = tpu.reciprocal %72 {approx = true} : vector<16x1xf32> -> vector<16x1xf32>
    %74 = arith.truncf %70 : vector<16x16xf32> to vector<16x16xbf16>
    %cst_30 = arith.constant dense<0.000000e+00> : vector<16x32xf32>
    %75 = tpu.matmul %74, %62, %cst_30 {dimension_numbers = #tpu.dot_dimension_numbers<[1], [0], [0], [1], [0, 0, 1, 1], [], []>} : vector<16x16xbf16>, vector<16x32xbf16>, vector<16x32xf32> -> vector<16x32xf32>
    %76 = vector.broadcast %73 : vector<16x1xf32> to vector<16x32xf32>
    %77 = arith.mulf %75, %76 : vector<16x32xf32>
    %78 = arith.truncf %77 : vector<16x32xf32> to vector<16x32xbf16>
    %c0_31 = arith.constant 0 : index
    %c32 = arith.constant 32 : index
    %79 = vector.load %arg24[%c0_31, %c32] : memref<16x128xbf16, #tpu.memory_space<vmem>>, vector<16x32xbf16>
    tpu.vector_store %arg24[%c0_31, %c32], %78 {strides = array<i32>} : memref<16x128xbf16, #tpu.memory_space<vmem>>, vector<16x32xbf16>,
    %80 = vector.extract_strided_slice %38 {offsets = [0, 64], sizes = [16, 32], strides = [1, 1]} : vector<16x384xbf16> to vector<16x32xbf16>
    %81 = vector.extract_strided_slice %38 {offsets = [0, 192], sizes = [16, 32], strides = [1, 1]} : vector<16x384xbf16> to vector<16x32xbf16>
    %82 = vector.extract_strided_slice %38 {offsets = [0, 320], sizes = [16, 32], strides = [1, 1]} : vector<16x384xbf16> to vector<16x32xbf16>
    %83 = tpu.transpose %81, [1, 0] : vector<16x32xbf16> -> vector<32x16xbf16>
    %cst_32 = arith.constant dense<0.000000e+00> : vector<16x16xf32>
    %84 = tpu.matmul %80, %83, %cst_32 {dimension_numbers = #tpu.dot_dimension_numbers<[1], [0], [0], [1], [0, 0, 1, 1], [], []>} : vector<16x32xbf16>, vector<32x16xbf16>, vector<16x16xf32> -> vector<16x16xf32>
    %85 = arith.addf %84, %39 : vector<16x16xf32>
    %cst_33 = arith.constant dense<0xFF800000> : vector<16xf32>
    %86 = vector.multi_reduction <maximumf>, %85, %cst_33 [1] : vector<16x16xf32> to vector<16xf32>
    %87 = vector.shape_cast %86 : vector<16xf32> to vector<16x1xf32>
    %88 = vector.broadcast %87 : vector<16x1xf32> to vector<16x16xf32>
    %89 = arith.subf %85, %88 : vector<16x16xf32>
    %90 = math.exp %89 : vector<16x16xf32>
    %cst_34 = arith.constant dense<0.000000e+00> : vector<16xf32>
    %91 = vector.multi_reduction <add>, %90, %cst_34 [1] : vector<16x16xf32> to vector<16xf32>
    %92 = vector.shape_cast %91 : vector<16xf32> to vector<16x1xf32>
    %93 = tpu.reciprocal %92 {approx = true} : vector<16x1xf32> -> vector<16x1xf32>
    %94 = arith.truncf %90 : vector<16x16xf32> to vector<16x16xbf16>
    %cst_35 = arith.constant dense<0.000000e+00> : vector<16x32xf32>
    %95 = tpu.matmul %94, %82, %cst_35 {dimension_numbers = #tpu.dot_dimension_numbers<[1], [0], [0], [1], [0, 0, 1, 1], [], []>} : vector<16x16xbf16>, vector<16x32xbf16>, vector<16x32xf32> -> vector<16x32xf32>
    %96 = vector.broadcast %93 : vector<16x1xf32> to vector<16x32xf32>
    %97 = arith.mulf %95, %96 : vector<16x32xf32>
    %98 = arith.truncf %97 : vector<16x32xf32> to vector<16x32xbf16>
    %c0_36 = arith.constant 0 : index
    %c64 = arith.constant 64 : index
    %99 = vector.load %arg24[%c0_36, %c64] : memref<16x128xbf16, #tpu.memory_space<vmem>>, vector<16x32xbf16>
    tpu.vector_store %arg24[%c0_36, %c64], %98 {strides = array<i32>} : memref<16x128xbf16, #tpu.memory_space<vmem>>, vector<16x32xbf16>,
    %100 = vector.extract_strided_slice %38 {offsets = [0, 96], sizes = [16, 32], strides = [1, 1]} : vector<16x384xbf16> to vector<16x32xbf16>
    %101 = vector.extract_strided_slice %38 {offsets = [0, 224], sizes = [16, 32], strides = [1, 1]} : vector<16x384xbf16> to vector<16x32xbf16>
    %102 = vector.extract_strided_slice %38 {offsets = [0, 352], sizes = [16, 32], strides = [1, 1]} : vector<16x384xbf16> to vector<16x32xbf16>
    %103 = tpu.transpose %101, [1, 0] : vector<16x32xbf16> -> vector<32x16xbf16>
    %cst_37 = arith.constant dense<0.000000e+00> : vector<16x16xf32>
    %104 = tpu.matmul %100, %103, %cst_37 {dimension_numbers = #tpu.dot_dimension_numbers<[1], [0], [0], [1], [0, 0, 1, 1], [], []>} : vector<16x32xbf16>, vector<32x16xbf16>, vector<16x16xf32> -> vector<16x16xf32>
    %105 = arith.addf %104, %39 : vector<16x16xf32>
    %cst_38 = arith.constant dense<0xFF800000> : vector<16xf32>
    %106 = vector.multi_reduction <maximumf>, %105, %cst_38 [1] : vector<16x16xf32> to vector<16xf32>
    %107 = vector.shape_cast %106 : vector<16xf32> to vector<16x1xf32>
    %108 = vector.broadcast %107 : vector<16x1xf32> to vector<16x16xf32>
    %109 = arith.subf %105, %108 : vector<16x16xf32>
    %110 = math.exp %109 : vector<16x16xf32>
    %cst_39 = arith.constant dense<0.000000e+00> : vector<16xf32>
    %111 = vector.multi_reduction <add>, %110, %cst_39 [1] : vector<16x16xf32> to vector<16xf32>
    %112 = vector.shape_cast %111 : vector<16xf32> to vector<16x1xf32>
    %113 = tpu.reciprocal %112 {approx = true} : vector<16x1xf32> -> vector<16x1xf32>
    %114 = arith.truncf %110 : vector<16x16xf32> to vector<16x16xbf16>
    %cst_40 = arith.constant dense<0.000000e+00> : vector<16x32xf32>
    %115 = tpu.matmul %114, %102, %cst_40 {dimension_numbers = #tpu.dot_dimension_numbers<[1], [0], [0], [1], [0, 0, 1, 1], [], []>} : vector<16x16xbf16>, vector<16x32xbf16>, vector<16x32xf32> -> vector<16x32xf32>
    %116 = vector.broadcast %113 : vector<16x1xf32> to vector<16x32xf32>
    %117 = arith.mulf %115, %116 : vector<16x32xf32>
    %118 = arith.truncf %117 : vector<16x32xf32> to vector<16x32xbf16>
    %c0_41 = arith.constant 0 : index
    %c96 = arith.constant 96 : index
    %119 = vector.load %arg24[%c0_41, %c96] : memref<16x128xbf16, #tpu.memory_space<vmem>>, vector<16x32xbf16>
    tpu.vector_store %arg24[%c0_41, %c96], %118 {strides = array<i32>} : memref<16x128xbf16, #tpu.memory_space<vmem>>, vector<16x32xbf16>,
    %c0_42 = arith.constant 0 : index
    %c0_43 = arith.constant 0 : index
    %120 = vector.load %arg24[%c0_42, %c0_43] : memref<16x128xbf16, #tpu.memory_space<vmem>>, vector<16x128xbf16>
    %c0_44 = arith.constant 0 : index
    %c0_45 = arith.constant 0 : index
    %c0_46 = arith.constant 0 : index
    %121 = vector.load %arg12[%c0_44, %c0_45, %c0_46] : memref<1x128x128xbf16, #tpu.memory_space<vmem>>, vector<1x128x128xbf16>
    %122 = vector.shape_cast %121 : vector<1x128x128xbf16> to vector<128x128xbf16>
    %cst_47 = arith.constant dense<0.000000e+00> : vector<16x128xf32>
    %123 = tpu.matmul %120, %122, %cst_47 {dimension_numbers = #tpu.dot_dimension_numbers<[1], [0], [0], [1], [0, 0, 1, 1], [], []>} : vector<16x128xbf16>, vector<128x128xbf16>, vector<16x128xf32> -> vector<16x128xf32>
    %124 = arith.addf %3, %123 : vector<16x128xf32>
    %c0_48 = arith.constant 0 : index
    %c0_49 = arith.constant 0 : index
    %c0_50 = arith.constant 0 : index
    %125 = vector.load %arg13[%c0_48, %c0_49, %c0_50] : memref<1x1x128xf32, #tpu.memory_space<vmem>>, vector<1x1x128xf32>
    %126 = vector.shape_cast %125 : vector<1x1x128xf32> to vector<1x128xf32>
    %127 = vector.broadcast %126 : vector<1x128xf32> to vector<16x128xf32>
    %128 = arith.addf %124, %127 : vector<16x128xf32>
    %c0_51 = arith.constant 0 : index
    %c0_52 = arith.constant 0 : index
    %c0_53 = arith.constant 0 : index
    %129 = vector.load %arg14[%c0_51, %c0_52, %c0_53] : memref<1x1x128xf32, #tpu.memory_space<vmem>>, vector<1x1x128xf32>
    %130 = vector.shape_cast %129 : vector<1x1x128xf32> to vector<1x128xf32>
    %c0_54 = arith.constant 0 : index
    %c0_55 = arith.constant 0 : index
    %c0_56 = arith.constant 0 : index
    %131 = vector.load %arg15[%c0_54, %c0_55, %c0_56] : memref<1x1x128xf32, #tpu.memory_space<vmem>>, vector<1x1x128xf32>
    %132 = vector.shape_cast %131 : vector<1x1x128xf32> to vector<1x128xf32>
    %cst_57 = arith.constant dense<0.000000e+00> : vector<16xf32>
    %133 = vector.multi_reduction <add>, %128, %cst_57 [1] : vector<16x128xf32> to vector<16xf32>
    %134 = vector.shape_cast %133 : vector<16xf32> to vector<16x1xf32>
    %cst_58 = arith.constant 1.280000e+02 : f32
    %135 = vector.broadcast %cst_58 : f32 to vector<16x1xf32>
    %136 = arith.divf %134, %135 : vector<16x1xf32>
    %137 = vector.broadcast %136 : vector<16x1xf32> to vector<16x128xf32>
    %138 = arith.subf %128, %137 : vector<16x128xf32>
    %139 = arith.mulf %138, %138 : vector<16x128xf32>
    %cst_59 = arith.constant dense<0.000000e+00> : vector<16xf32>
    %140 = vector.multi_reduction <add>, %139, %cst_59 [1] : vector<16x128xf32> to vector<16xf32>
    %141 = vector.shape_cast %140 : vector<16xf32> to vector<16x1xf32>
    %cst_60 = arith.constant 1.280000e+02 : f32
    %142 = vector.broadcast %cst_60 : f32 to vector<16x1xf32>
    %143 = arith.divf %141, %142 : vector<16x1xf32>
    %144 = vector.broadcast %136 : vector<16x1xf32> to vector<16x128xf32>
    %145 = arith.subf %128, %144 : vector<16x128xf32>
    %cst_61 = arith.constant 9.99999974E-6 : f32
    %146 = vector.broadcast %cst_61 : f32 to vector<16x1xf32>
    %147 = arith.addf %143, %146 : vector<16x1xf32>
    %148 = math.rsqrt %147 : vector<16x1xf32>
    %149 = vector.broadcast %148 : vector<16x1xf32> to vector<16x128xf32>
    %150 = arith.mulf %145, %149 : vector<16x128xf32>
    %151 = vector.broadcast %130 : vector<1x128xf32> to vector<16x128xf32>
    %152 = arith.mulf %150, %151 : vector<16x128xf32>
    %153 = vector.broadcast %132 : vector<1x128xf32> to vector<16x128xf32>
    %154 = arith.addf %152, %153 : vector<16x128xf32>
    %155 = arith.truncf %154 : vector<16x128xf32> to vector<16x128xbf16>
    %c0_62 = arith.constant 0 : index
    %c0_63 = arith.constant 0 : index
    %c0_64 = arith.constant 0 : index
    %156 = vector.load %arg16[%c0_62, %c0_63, %c0_64] : memref<1x128x512xbf16, #tpu.memory_space<vmem>>, vector<1x128x512xbf16>
    %157 = vector.shape_cast %156 : vector<1x128x512xbf16> to vector<128x512xbf16>
    %cst_65 = arith.constant dense<0.000000e+00> : vector<16x512xf32>
    %158 = tpu.matmul %155, %157, %cst_65 {dimension_numbers = #tpu.dot_dimension_numbers<[1], [0], [0], [1], [0, 0, 1, 1], [], []>} : vector<16x128xbf16>, vector<128x512xbf16>, vector<16x512xf32> -> vector<16x512xf32>
    %c0_66 = arith.constant 0 : index
    %c0_67 = arith.constant 0 : index
    %c0_68 = arith.constant 0 : index
    %159 = vector.load %arg17[%c0_66, %c0_67, %c0_68] : memref<1x1x512xf32, #tpu.memory_space<vmem>>, vector<1x1x512xf32>
    %160 = vector.shape_cast %159 : vector<1x1x512xf32> to vector<1x512xf32>
    %161 = vector.broadcast %160 : vector<1x512xf32> to vector<16x512xf32>
    %162 = arith.addf %158, %161 : vector<16x512xf32>
    %cst_69 = arith.constant 1.702000e+00 : f32
    %163 = vector.broadcast %cst_69 : f32 to vector<16x512xf32>
    %164 = arith.mulf %163, %162 : vector<16x512xf32>
    %165 = arith.negf %164 : vector<16x512xf32>
    %166 = math.exp %165 : vector<16x512xf32>
    %cst_70 = arith.constant 1.000000e+00 : f32
    %167 = vector.broadcast %cst_70 : f32 to vector<16x512xf32>
    %168 = arith.addf %167, %166 : vector<16x512xf32>
    %169 = arith.divf %167, %168 : vector<16x512xf32>
    %170 = arith.mulf %162, %169 : vector<16x512xf32>
    %171 = arith.truncf %170 : vector<16x512xf32> to vector<16x512xbf16>
    %c0_71 = arith.constant 0 : index
    %c0_72 = arith.constant 0 : index
    %c0_73 = arith.constant 0 : index
    %172 = vector.load %arg18[%c0_71, %c0_72, %c0_73] : memref<1x512x128xbf16, #tpu.memory_space<vmem>>, vector<1x512x128xbf16>
    %173 = vector.shape_cast %172 : vector<1x512x128xbf16> to vector<512x128xbf16>
    %cst_74 = arith.constant dense<0.000000e+00> : vector<16x128xf32>
    %174 = tpu.matmul %171, %173, %cst_74 {dimension_numbers = #tpu.dot_dimension_numbers<[1], [0], [0], [1], [0, 0, 1, 1], [], []>} : vector<16x512xbf16>, vector<512x128xbf16>, vector<16x128xf32> -> vector<16x128xf32>
    %c0_75 = arith.constant 0 : index
    %c0_76 = arith.constant 0 : index
    %c0_77 = arith.constant 0 : index
    %175 = vector.load %arg19[%c0_75, %c0_76, %c0_77] : memref<1x1x128xf32, #tpu.memory_space<vmem>>, vector<1x1x128xf32>
    %176 = vector.shape_cast %175 : vector<1x1x128xf32> to vector<1x128xf32>
    %177 = vector.broadcast %176 : vector<1x128xf32> to vector<16x128xf32>
    %178 = arith.addf %174, %177 : vector<16x128xf32>
    %179 = arith.addf %128, %178 : vector<16x128xf32>
    %c0_78 = arith.constant 0 : index
    %c0_79 = arith.constant 0 : index
    %180 = vector.load %arg23[%c0_78, %c0_79] : memref<16x128xf32, #tpu.memory_space<vmem>>, vector<16x128xf32>
    tpu.vector_store %arg23[%c0_78, %c0_79], %179 {strides = array<i32>} : memref<16x128xf32, #tpu.memory_space<vmem>>, vector<16x128xf32>,
    %c1_i32 = arith.constant 1 : i32
    %181 = arith.cmpi eq, %arg1, %c1_i32 : i32
    %182 = arith.extui %181 : i1 to i32
    %c0_i32_80 = arith.constant 0 : i32
    %183 = arith.cmpi ne, %182, %c0_i32_80 : i32
    scf.if %183 {
      %184 = arith.truncf %179 : vector<16x128xf32> to vector<16x128xbf16>
      %c0_81 = arith.constant 0 : index
      %c0_82 = arith.constant 0 : index
      %185 = vector.load %arg20[%c0_81, %c0_82] : memref<128x128xbf16, #tpu.memory_space<vmem>>, vector<128x128xbf16>
      %cst_83 = arith.constant dense<0.000000e+00> : vector<16x128xf32>
      %186 = tpu.matmul %184, %185, %cst_83 {dimension_numbers = #tpu.dot_dimension_numbers<[1], [0], [0], [1], [0, 0, 1, 1], [], []>} : vector<16x128xbf16>, vector<128x128xbf16>, vector<16x128xf32> -> vector<16x128xf32>
      %c0_84 = arith.constant 0 : index
      %c0_85 = arith.constant 0 : index
      %187 = vector.load %arg21[%c0_84, %c0_85] : memref<1x128xf32, #tpu.memory_space<vmem>>, vector<1x128xf32>
      %188 = vector.broadcast %187 : vector<1x128xf32> to vector<16x128xf32>
      %189 = arith.addf %186, %188 : vector<16x128xf32>
      %c0_86 = arith.constant 0 : index
      %c0_87 = arith.constant 0 : index
      %c0_88 = arith.constant 0 : index
      %190 = vector.load %arg22[%c0_86, %c0_87, %c0_88] : memref<1x16x128xf32, #tpu.memory_space<vmem>>, vector<1x16x128xf32>
      %191 = vector.shape_cast %190 : vector<1x16x128xf32> to vector<16x128xf32>
      %192 = vector.shape_cast %189 : vector<16x128xf32> to vector<1x16x128xf32>
      tpu.vector_store %arg22[%c0_86, %c0_87, %c0_88], %192 {strides = array<i32>} : memref<1x16x128xf32, #tpu.memory_space<vmem>>, vector<1x16x128xf32>,
    } else {
    }
    return
  }
  func.func @transform_0(%arg0: i32, %arg1: i32) -> (i32, i32, i32) {
    %c0_i32 = arith.constant 0 : i32
    %c0_i32_0 = arith.constant 0 : i32
    %c0_i32_1 = arith.constant 0 : i32
    return %arg0, %c0_i32, %c0_i32_0 : i32, i32, i32
  }
  func.func @transform_1(%arg0: i32, %arg1: i32) -> (i32, i32) {
    %c0_i32 = arith.constant 0 : i32
    %c0_i32_0 = arith.constant 0 : i32
    %c0_i32_1 = arith.constant 0 : i32
    return %c0_i32, %c0_i32_0 : i32, i32
  }
  func.func @transform_2(%arg0: i32, %arg1: i32) -> (i32, i32) {
    %c0_i32 = arith.constant 0 : i32
    %c0_i32_0 = arith.constant 0 : i32
    %c0_i32_1 = arith.constant 0 : i32
    return %c0_i32, %c0_i32_0 : i32, i32
  }
  func.func @transform_3(%arg0: i32, %arg1: i32) -> (i32, i32) {
    %c0_i32 = arith.constant 0 : i32
    %c0_i32_0 = arith.constant 0 : i32
    %c0_i32_1 = arith.constant 0 : i32
    return %c0_i32, %c0_i32_0 : i32, i32
  }
  func.func @transform_4(%arg0: i32, %arg1: i32) -> (i32, i32) {
    %c0_i32 = arith.constant 0 : i32
    %c0_i32_0 = arith.constant 0 : i32
    %c0_i32_1 = arith.constant 0 : i32
    return %c0_i32, %c0_i32_0 : i32, i32
  }
  func.func @transform_5(%arg0: i32, %arg1: i32) -> (i32, i32) {
    %c0_i32 = arith.constant 0 : i32
    %c0_i32_0 = arith.constant 0 : i32
    %c0_i32_1 = arith.constant 0 : i32
    return %c0_i32, %c0_i32_0 : i32, i32
  }
  func.func @transform_6(%arg0: i32, %arg1: i32) -> (i32, i32, i32) {
    %c0_i32 = arith.constant 0 : i32
    %c0_i32_0 = arith.constant 0 : i32
    %c0_i32_1 = arith.constant 0 : i32
    return %arg1, %c0_i32, %c0_i32_0 : i32, i32, i32
  }
  func.func @transform_7(%arg0: i32, %arg1: i32) -> (i32, i32, i32) {
    %c0_i32 = arith.constant 0 : i32
    %c0_i32_0 = arith.constant 0 : i32
    %c0_i32_1 = arith.constant 0 : i32
    return %arg1, %c0_i32, %c0_i32_0 : i32, i32, i32
  }
  func.func @transform_8(%arg0: i32, %arg1: i32) -> (i32, i32, i32) {
    %c0_i32 = arith.constant 0 : i32
    %c0_i32_0 = arith.constant 0 : i32
    %c0_i32_1 = arith.constant 0 : i32
    return %arg1, %c0_i32, %c0_i32_0 : i32, i32, i32
  }
  func.func @transform_9(%arg0: i32, %arg1: i32) -> (i32, i32, i32) {
    %c0_i32 = arith.constant 0 : i32
    %c0_i32_0 = arith.constant 0 : i32
    %c0_i32_1 = arith.constant 0 : i32
    return %arg1, %c0_i32, %c0_i32_0 : i32, i32, i32
  }
  func.func @transform_10(%arg0: i32, %arg1: i32) -> (i32, i32, i32) {
    %c0_i32 = arith.constant 0 : i32
    %c0_i32_0 = arith.constant 0 : i32
    %c0_i32_1 = arith.constant 0 : i32
    return %arg1, %c0_i32, %c0_i32_0 : i32, i32, i32
  }
  func.func @transform_11(%arg0: i32, %arg1: i32) -> (i32, i32, i32) {
    %c0_i32 = arith.constant 0 : i32
    %c0_i32_0 = arith.constant 0 : i32
    %c0_i32_1 = arith.constant 0 : i32
    return %arg1, %c0_i32, %c0_i32_0 : i32, i32, i32
  }
  func.func @transform_12(%arg0: i32, %arg1: i32) -> (i32, i32, i32) {
    %c0_i32 = arith.constant 0 : i32
    %c0_i32_0 = arith.constant 0 : i32
    %c0_i32_1 = arith.constant 0 : i32
    return %arg1, %c0_i32, %c0_i32_0 : i32, i32, i32
  }
  func.func @transform_13(%arg0: i32, %arg1: i32) -> (i32, i32, i32) {
    %c0_i32 = arith.constant 0 : i32
    %c0_i32_0 = arith.constant 0 : i32
    %c0_i32_1 = arith.constant 0 : i32
    return %arg1, %c0_i32, %c0_i32_0 : i32, i32, i32
  }
  func.func @transform_14(%arg0: i32, %arg1: i32) -> (i32, i32, i32) {
    %c0_i32 = arith.constant 0 : i32
    %c0_i32_0 = arith.constant 0 : i32
    %c0_i32_1 = arith.constant 0 : i32
    return %arg1, %c0_i32, %c0_i32_0 : i32, i32, i32
  }
  func.func @transform_15(%arg0: i32, %arg1: i32) -> (i32, i32, i32) {
    %c0_i32 = arith.constant 0 : i32
    %c0_i32_0 = arith.constant 0 : i32
    %c0_i32_1 = arith.constant 0 : i32
    return %arg1, %c0_i32, %c0_i32_0 : i32, i32, i32
  }
  func.func @transform_16(%arg0: i32, %arg1: i32) -> (i32, i32, i32) {
    %c0_i32 = arith.constant 0 : i32
    %c0_i32_0 = arith.constant 0 : i32
    %c0_i32_1 = arith.constant 0 : i32
    return %arg1, %c0_i32, %c0_i32_0 : i32, i32, i32
  }
  func.func @transform_17(%arg0: i32, %arg1: i32) -> (i32, i32, i32) {
    %c0_i32 = arith.constant 0 : i32
    %c0_i32_0 = arith.constant 0 : i32
    %c0_i32_1 = arith.constant 0 : i32
    return %arg1, %c0_i32, %c0_i32_0 : i32, i32, i32
  }
  func.func @transform_18(%arg0: i32, %arg1: i32) -> (i32, i32) {
    %c0_i32 = arith.constant 0 : i32
    %c0_i32_0 = arith.constant 0 : i32
    %c0_i32_1 = arith.constant 0 : i32
    return %c0_i32, %c0_i32_0 : i32, i32
  }
  func.func @transform_19(%arg0: i32, %arg1: i32) -> (i32, i32) {
    %c0_i32 = arith.constant 0 : i32
    %c0_i32_0 = arith.constant 0 : i32
    %c0_i32_1 = arith.constant 0 : i32
    return %c0_i32, %c0_i32_0 : i32, i32
  }
  func.func @transform_20(%arg0: i32, %arg1: i32) -> (i32, i32, i32) {
    %c0_i32 = arith.constant 0 : i32
    %c0_i32_0 = arith.constant 0 : i32
    %c0_i32_1 = arith.constant 0 : i32
    return %arg0, %c0_i32, %c0_i32_0 : i32, i32, i32
  }
}

</mosaic_0001>

<llo_original>
// kernel: _lambda_.1
$region0: #{_lambda_.1}
  #allocation0 [shape = 'u32[]', space=smem, size = 0x4, offset = 0x4, fixed_abs, tag = 'smem constant byte address 0x4 - core index']
  #allocation1 [shape = 'u32[144,128]{1,0:T(1,128)}', space=vmem, size = 0x12000, scoped, tag = 'internal scratch']
  #allocation2 [shape = 'f32[16,128]{1,0:T(8,128)}', space=vmem, size = 0x2000, scoped, tag = 'scratch operand']
  #allocation3 [shape = 'bf16[16,128]{1,0:T(16,128)(2,1)}', space=vmem, size = 0x1000, scoped, tag = 'scratch operand']
  %s0 = inlined_call_operand.vmem [shape: bf16[1,16,640], index: 0, kind: input, shape index: {}]
  %s1 = inlined_call_operand.vmem [shape: f32[16,128], index: 1, kind: input, shape index: {}]
  %s2 = inlined_call_operand.vmem [shape: f32[16,16], index: 2, kind: input, shape index: {}]
  %s3 = inlined_call_operand.vmem [shape: bf16[640,128], index: 3, kind: input, shape index: {}]
  %s4 = inlined_call_operand.vmem [shape: f32[1,128], index: 4, kind: input, shape index: {}]
  %s5 = inlined_call_operand.vmem [shape: f32[1,128], index: 5, kind: input, shape index: {}]
  %s6 = inlined_call_operand.vmem [shape: f32[2,1,128], index: 6, kind: input, shape index: {}, may-alias: {6,12}]
  %s7 = inlined_call_operand.vmem [shape: f32[2,1,128], index: 7, kind: input, shape index: {}, may-alias: {7,11,13,17}]
  %s8 = inlined_call_operand.vmem [shape: bf16[2,128,384], index: 8, kind: input, shape index: {}]
  %s9 = inlined_call_operand.vmem [shape: f32[2,1,384], index: 9, kind: input, shape index: {}]
  %s10 = inlined_call_operand.vmem [shape: bf16[2,128,128], index: 10, kind: input, shape index: {}]
  %s11 = inlined_call_operand.vmem [shape: f32[2,1,128], index: 11, kind: input, shape index: {}, may-alias: {7,11,13,17}]
  %s12 = inlined_call_operand.vmem [shape: f32[2,1,128], index: 12, kind: input, shape index: {}, may-alias: {6,12}]
  %s13 = inlined_call_operand.vmem [shape: f32[2,1,128], index: 13, kind: input, shape index: {}, may-alias: {7,11,13,17}]
  %s14 = inlined_call_operand.vmem [shape: bf16[2,128,512], index: 14, kind: input, shape index: {}]
  %s15 = inlined_call_operand.vmem [shape: f32[2,1,512], index: 15, kind: input, shape index: {}]
  %s16 = inlined_call_operand.vmem [shape: bf16[2,512,128], index: 16, kind: input, shape index: {}]
  %s17 = inlined_call_operand.vmem [shape: f32[2,1,128], index: 17, kind: input, shape index: {}, may-alias: {7,11,13,17}]
  %s18 = inlined_call_operand.vmem [shape: bf16[128,128], index: 18, kind: input, shape index: {}]
  %s19 = inlined_call_operand.vmem [shape: f32[1,128], index: 19, kind: input, shape index: {}]
  %s20 = inlined_call_operand.vmem [shape: f32[1,16,128], index: 20, kind: output, shape index: {}]
  %s21 = sld [smem:[#allocation0]]
  $region121: #{_lambda_.1} parent=0
    _
  %s23 = ssub.s32 1, %s21
  %s24 = scalar_select 0, %s23, %s21
  loop: start=0, step=1, limit=4
  $region2: #{_lambda_.1} parent=0 // loop_pre_header
    _
  $region3: #{_lambda_.1} parent=0 // loop_header
    %s26 = sphi 0, %s30
    %p27 = scmp.ge.s32.totalorder %s26, 4
    %s33 = sphi 0, %s45
    %s34 = sphi 0, %s41
    %s35 = sphi 0, %s33
    %s36 = sphi 0, %s34
    %s37 = sphi 0, %s35
    %s38 = sphi 0, %s36
    %s48 = sphi 0, %s50
    %s51 = sphi 0, %s48
    %s52 = sphi 0, %s51
    %s68 = sphi 0, %s52
    %s72 = sphi 0, %s72
    %s74 = sphi 0, %s72
    %s75 = sphi 0, %s74
    %s89 = sphi 0, %s75
    %s93 = sphi 0, %s93
    %s95 = sphi 0, %s93
    %s96 = sphi 0, %s95
    %s110 = sphi 0, %s96
    %s114 = sphi 0, %s114
    %s116 = sphi 0, %s114
    %s117 = sphi 0, %s116
    %s131 = sphi 0, %s117
    %s135 = sphi 0, %s135
    %s137 = sphi 0, %s135
    %s138 = sphi 0, %s137
    %s152 = sphi 0, %s138
    %s156 = sphi 0, %s156
    %s158 = sphi 0, %s156
    %s159 = sphi 0, %s158
    %s173 = sphi 0, %s159
    %s179 = sphi 0, %s181
    %s182 = sphi 0, %s179
    %s183 = sphi 0, %s182
    %s199 = sphi 0, %s183
    %s205 = sphi 0, %s207
    %s208 = sphi 0, %s205
    %s209 = sphi 0, %s208
    %s225 = sphi 0, %s209
    %s231 = sphi 0, %s233
    %s234 = sphi 0, %s231
    %s235 = sphi 0, %s234
    %s251 = sphi 0, %s235
    %s257 = sphi 0, %s259
    %s260 = sphi 0, %s257
    %s261 = sphi 0, %s260
    %s277 = sphi 0, %s261
    %s283 = sphi 0, %s285
    %s286 = sphi 0, %s283
    %s287 = sphi 0, %s286
    %s303 = sphi 0, %s287
    %s309 = sphi 0, %s311
    %s312 = sphi 0, %s309
    %s313 = sphi 0, %s312
    %s329 = sphi 0, %s313
    %s335 = sphi 0, %s337
    %s338 = sphi 0, %s335
    %s339 = sphi 0, %s338
    %s355 = sphi 0, %s339
    %s361 = sphi 0, %s363
    %s364 = sphi 0, %s361
    %s365 = sphi 0, %s364
    %s381 = sphi 0, %s365
    %s387 = sphi 0, %s389
    %s390 = sphi 0, %s387
    %s391 = sphi 0, %s390
    %s407 = sphi 0, %s391
    %s413 = sphi 0, %s415
    %s416 = sphi 0, %s413
    %s417 = sphi 0, %s416
    %s433 = sphi 0, %s417
    %s439 = sphi 0, %s441
    %s442 = sphi 0, %s439
    %s443 = sphi 0, %s442
    %s459 = sphi 0, %s443
    %s465 = sphi 0, %s467
    %s468 = sphi 0, %s465
    %s469 = sphi 0, %s468
    %s485 = sphi 0, %s469
    %s489 = sphi 0, %s489
    %s491 = sphi 0, %s489
    %s492 = sphi 0, %s491
    %s506 = sphi 0, %s492
    %s510 = sphi 0, %s510
    %s512 = sphi 0, %s510
    %s513 = sphi 0, %s512
    %s527 = sphi 0, %s513
    %s533 = sphi 0, %s535
    %s536 = sphi 0, %s533
    %s537 = sphi 0, %s536
    %s553 = sphi 0, %s537
  $region4: #{_lambda_.1} parent=0 // loop_header_branch
    %29 = sbr.rel (%p27) target = $region8
  $region5: #{_lambda_.1} parent=0 // loop_body
    %s31 = ssub.s32 %s26, 1
    %s32 = ssub.s32 %s26, 2
    %s39 = sadd.s32 1, %s34
    %p40 = scmp.ge.s32.totalorder %s39, 2
    %s41 = scalar_select %p40, 0, %s39
    %s42 = sadd.s32 1, %s33
    %s43 = scalar_select %p40, %s42, %s33
    %p44 = scmp.ge.s32.totalorder %s43, 1
    %s45 = scalar_select %p44, 0, %s43
    %s46 = ssub.s32 %s33, %s45
    %p47 = scmp.eq.s32.totalorder %s46, 0
    %s49 = sadd.s32 %s48, 1
    %s50 = scalar_select %p47, %s48, %s49
    %p53 = pneg %p47
    %p54 = scmp.eq.s32.totalorder %s26, 1
    %p55 = por %p53, %p54
    %p56 = scmp.ne.s32.totalorder %s48, %s51
    %p57 = scmp.eq.s32.totalorder %s26, 0
    %p58 = por %p56, %p57
    %p59 = scmp.ne.s32.totalorder %s48, %s51
    %p60 = scmp.eq.s32.totalorder %s31, 1
    %p61 = por %p59, %p60
    %p62 = scmp.ne.s32.totalorder %s51, %s52
    %p63 = scmp.eq.s32.totalorder %s31, 0
    %p64 = por %p62, %p63
    %p65 = scmp.ne.s32.totalorder %s51, %s52
    %p66 = scmp.eq.s32.totalorder %s32, 1
    %p67 = por %p65, %p66
    %p69 = scmp.ne.s32.totalorder %s52, %s68
    %p70 = scmp.eq.s32.totalorder %s32, 0
    %p71 = por %p69, %p70
    %s73 = sadd.s32 %s72, 1
    %p76 = scmp.eq.s32.totalorder %s26, 1
    %p77 = scmp.ne.s32.totalorder %s72, %s74
    %p78 = scmp.eq.s32.totalorder %s26, 0
    %p79 = por %p77, %p78
    %p80 = scmp.ne.s32.totalorder %s72, %s74
    %p81 = scmp.eq.s32.totalorder %s31, 1
    %p82 = por %p80, %p81
    %p83 = scmp.ne.s32.totalorder %s74, %s75
    %p84 = scmp.eq.s32.totalorder %s31, 0
    %p85 = por %p83, %p84
    %p86 = scmp.ne.s32.totalorder %s74, %s75
    %p87 = scmp.eq.s32.totalorder %s32, 1
    %p88 = por %p86, %p87
    %p90 = scmp.ne.s32.totalorder %s75, %s89
    %p91 = scmp.eq.s32.totalorder %s32, 0
    %p92 = por %p90, %p91
    %s94 = sadd.s32 %s93, 1
    %p97 = scmp.eq.s32.totalorder %s26, 1
    %p98 = scmp.ne.s32.totalorder %s93, %s95
    %p99 = scmp.eq.s32.totalorder %s26, 0
    %p100 = por %p98, %p99
    %p101 = scmp.ne.s32.totalorder %s93, %s95
    %p102 = scmp.eq.s32.totalorder %s31, 1
    %p103 = por %p101, %p102
    %p104 = scmp.ne.s32.totalorder %s95, %s96
    %p105 = scmp.eq.s32.totalorder %s31, 0
    %p106 = por %p104, %p105
    %p107 = scmp.ne.s32.totalorder %s95, %s96
    %p108 = scmp.eq.s32.totalorder %s32, 1
    %p109 = por %p107, %p108
    %p111 = scmp.ne.s32.totalorder %s96, %s110
    %p112 = scmp.eq.s32.totalorder %s32, 0
    %p113 = por %p111, %p112
    %s115 = sadd.s32 %s114, 1
    %p118 = scmp.eq.s32.totalorder %s26, 1
    %p119 = scmp.ne.s32.totalorder %s114, %s116
    %p120 = scmp.eq.s32.totalorder %s26, 0
    %p121 = por %p119, %p120
    %p122 = scmp.ne.s32.totalorder %s114, %s116
    %p123 = scmp.eq.s32.totalorder %s31, 1
    %p124 = por %p122, %p123
    %p125 = scmp.ne.s32.totalorder %s116, %s117
    %p126 = scmp.eq.s32.totalorder %s31, 0
    %p127 = por %p125, %p126
    %p128 = scmp.ne.s32.totalorder %s116, %s117
    %p129 = scmp.eq.s32.totalorder %s32, 1
    %p130 = por %p128, %p129
    %p132 = scmp.ne.s32.totalorder %s117, %s131
    %p133 = scmp.eq.s32.totalorder %s32, 0
    %p134 = por %p132, %p133
    %s136 = sadd.s32 %s135, 1
    %p139 = scmp.eq.s32.totalorder %s26, 1
    %p140 = scmp.ne.s32.totalorder %s135, %s137
    %p141 = scmp.eq.s32.totalorder %s26, 0
    %p142 = por %p140, %p141
    %p143 = scmp.ne.s32.totalorder %s135, %s137
    %p144 = scmp.eq.s32.totalorder %s31, 1
    %p145 = por %p143, %p144
    %p146 = scmp.ne.s32.totalorder %s137, %s138
    %p147 = scmp.eq.s32.totalorder %s31, 0
    %p148 = por %p146, %p147
    %p149 = scmp.ne.s32.totalorder %s137, %s138
    %p150 = scmp.eq.s32.totalorder %s32, 1
    %p151 = por %p149, %p150
    %p153 = scmp.ne.s32.totalorder %s138, %s152
    %p154 = scmp.eq.s32.totalorder %s32, 0
    %p155 = por %p153, %p154
    %s157 = sadd.s32 %s156, 1
    %p160 = scmp.eq.s32.totalorder %s26, 1
    %p161 = scmp.ne.s32.totalorder %s156, %s158
    %p162 = scmp.eq.s32.totalorder %s26, 0
    %p163 = por %p161, %p162
    %p164 = scmp.ne.s32.totalorder %s156, %s158
    %p165 = scmp.eq.s32.totalorder %s31, 1
    %p166 = por %p164, %p165
    %p167 = scmp.ne.s32.totalorder %s158, %s159
    %p168 = scmp.eq.s32.totalorder %s31, 0
    %p169 = por %p167, %p168
    %p170 = scmp.ne.s32.totalorder %s158, %s159
    %p171 = scmp.eq.s32.totalorder %s32, 1
    %p172 = por %p170, %p171
    %p174 = scmp.ne.s32.totalorder %s159, %s173
    %p175 = scmp.eq.s32.totalorder %s32, 0
    %p176 = por %p174, %p175
    %s177 = ssub.s32 %s34, %s41
    %p178 = scmp.eq.s32.totalorder %s177, 0
    %s180 = sadd.s32 %s179, 1
    %s181 = scalar_select %p178, %s179, %s180
    %p184 = pneg %p178
    %p185 = scmp.eq.s32.totalorder %s26, 1
    %p186 = por %p184, %p185
    %p187 = scmp.ne.s32.totalorder %s179, %s182
    %p188 = scmp.eq.s32.totalorder %s26, 0
    %p189 = por %p187, %p188
    %p190 = scmp.ne.s32.totalorder %s179, %s182
    %p191 = scmp.eq.s32.totalorder %s31, 1
    %p192 = por %p190, %p191
    %p193 = scmp.ne.s32.totalorder %s182, %s183
    %p194 = scmp.eq.s32.totalorder %s31, 0
    %p195 = por %p193, %p194
    %p196 = scmp.ne.s32.totalorder %s182, %s183
    %p197 = scmp.eq.s32.totalorder %s32, 1
    %p198 = por %p196, %p197
    %p200 = scmp.ne.s32.totalorder %s183, %s199
    %p201 = scmp.eq.s32.totalorder %s32, 0
    %p202 = por %p200, %p201
    %s203 = ssub.s32 %s34, %s41
    %p204 = scmp.eq.s32.totalorder %s203, 0
    %s206 = sadd.s32 %s205, 1
    %s207 = scalar_select %p204, %s205, %s206
    %p210 = pneg %p204
    %p211 = scmp.eq.s32.totalorder %s26, 1
    %p212 = por %p210, %p211
    %p213 = scmp.ne.s32.totalorder %s205, %s208
    %p214 = scmp.eq.s32.totalorder %s26, 0
    %p215 = por %p213, %p214
    %p216 = scmp.ne.s32.totalorder %s205, %s208
    %p217 = scmp.eq.s32.totalorder %s31, 1
    %p218 = por %p216, %p217
    %p219 = scmp.ne.s32.totalorder %s208, %s209
    %p220 = scmp.eq.s32.totalorder %s31, 0
    %p221 = por %p219, %p220
    %p222 = scmp.ne.s32.totalorder %s208, %s209
    %p223 = scmp.eq.s32.totalorder %s32, 1
    %p224 = por %p222, %p223
    %p226 = scmp.ne.s32.totalorder %s209, %s225
    %p227 = scmp.eq.s32.totalorder %s32, 0
    %p228 = por %p226, %p227
    %s229 = ssub.s32 %s34, %s41
    %p230 = scmp.eq.s32.totalorder %s229, 0
    %s232 = sadd.s32 %s231, 1
    %s233 = scalar_select %p230, %s231, %s232
    %p236 = pneg %p230
    %p237 = scmp.eq.s32.totalorder %s26, 1
    %p238 = por %p236, %p237
    %p239 = scmp.ne.s32.totalorder %s231, %s234
    %p240 = scmp.eq.s32.totalorder %s26, 0
    %p241 = por %p239, %p240
    %p242 = scmp.ne.s32.totalorder %s231, %s234
    %p243 = scmp.eq.s32.totalorder %s31, 1
    %p244 = por %p242, %p243
    %p245 = scmp.ne.s32.totalorder %s234, %s235
    %p246 = scmp.eq.s32.totalorder %s31, 0
    %p247 = por %p245, %p246
    %p248 = scmp.ne.s32.totalorder %s234, %s235
    %p249 = scmp.eq.s32.totalorder %s32, 1
    %p250 = por %p248, %p249
    %p252 = scmp.ne.s32.totalorder %s235, %s251
    %p253 = scmp.eq.s32.totalorder %s32, 0
    %p254 = por %p252, %p253
    %s255 = ssub.s32 %s34, %s41
    %p256 = scmp.eq.s32.totalorder %s255, 0
    %s258 = sadd.s32 %s257, 1
    %s259 = scalar_select %p256, %s257, %s258
    %p262 = pneg %p256
    %p263 = scmp.eq.s32.totalorder %s26, 1
    %p264 = por %p262, %p263
    %p265 = scmp.ne.s32.totalorder %s257, %s260
    %p266 = scmp.eq.s32.totalorder %s26, 0
    %p267 = por %p265, %p266
    %p268 = scmp.ne.s32.totalorder %s257, %s260
    %p269 = scmp.eq.s32.totalorder %s31, 1
    %p270 = por %p268, %p269
    %p271 = scmp.ne.s32.totalorder %s260, %s261
    %p272 = scmp.eq.s32.totalorder %s31, 0
    %p273 = por %p271, %p272
    %p274 = scmp.ne.s32.totalorder %s260, %s261
    %p275 = scmp.eq.s32.totalorder %s32, 1
    %p276 = por %p274, %p275
    %p278 = scmp.ne.s32.totalorder %s261, %s277
    %p279 = scmp.eq.s32.totalorder %s32, 0
    %p280 = por %p278, %p279
    %s281 = ssub.s32 %s34, %s41
    %p282 = scmp.eq.s32.totalorder %s281, 0
    %s284 = sadd.s32 %s283, 1
    %s285 = scalar_select %p282, %s283, %s284
    %p288 = pneg %p282
    %p289 = scmp.eq.s32.totalorder %s26, 1
    %p290 = por %p288, %p289
    %p291 = scmp.ne.s32.totalorder %s283, %s286
    %p292 = scmp.eq.s32.totalorder %s26, 0
    %p293 = por %p291, %p292
    %p294 = scmp.ne.s32.totalorder %s283, %s286
    %p295 = scmp.eq.s32.totalorder %s31, 1
    %p296 = por %p294, %p295
    %p297 = scmp.ne.s32.totalorder %s286, %s287
    %p298 = scmp.eq.s32.totalorder %s31, 0
    %p299 = por %p297, %p298
    %p300 = scmp.ne.s32.totalorder %s286, %s287
    %p301 = scmp.eq.s32.totalorder %s32, 1
    %p302 = por %p300, %p301
    %p304 = scmp.ne.s32.totalorder %s287, %s303
    %p305 = scmp.eq.s32.totalorder %s32, 0
    %p306 = por %p304, %p305
    %s307 = ssub.s32 %s34, %s41
    %p308 = scmp.eq.s32.totalorder %s307, 0
    %s310 = sadd.s32 %s309, 1
    %s311 = scalar_select %p308, %s309, %s310
    %p314 = pneg %p308
    %p315 = scmp.eq.s32.totalorder %s26, 1
    %p316 = por %p314, %p315
    %p317 = scmp.ne.s32.totalorder %s309, %s312
    %p318 = scmp.eq.s32.totalorder %s26, 0
    %p319 = por %p317, %p318
    %p320 = scmp.ne.s32.totalorder %s309, %s312
    %p321 = scmp.eq.s32.totalorder %s31, 1
    %p322 = por %p320, %p321
    %p323 = scmp.ne.s32.totalorder %s312, %s313
    %p324 = scmp.eq.s32.totalorder %s31, 0
    %p325 = por %p323, %p324
    %p326 = scmp.ne.s32.totalorder %s312, %s313
    %p327 = scmp.eq.s32.totalorder %s32, 1
    %p328 = por %p326, %p327
    %p330 = scmp.ne.s32.totalorder %s313, %s329
    %p331 = scmp.eq.s32.totalorder %s32, 0
    %p332 = por %p330, %p331
    %s333 = ssub.s32 %s34, %s41
    %p334 = scmp.eq.s32.totalorder %s333, 0
    %s336 = sadd.s32 %s335, 1
    %s337 = scalar_select %p334, %s335, %s336
    %p340 = pneg %p334
    %p341 = scmp.eq.s32.totalorder %s26, 1
    %p342 = por %p340, %p341
    %p343 = scmp.ne.s32.totalorder %s335, %s338
    %p344 = scmp.eq.s32.totalorder %s26, 0
    %p345 = por %p343, %p344
    %p346 = scmp.ne.s32.totalorder %s335, %s338
    %p347 = scmp.eq.s32.totalorder %s31, 1
    %p348 = por %p346, %p347
    %p349 = scmp.ne.s32.totalorder %s338, %s339
    %p350 = scmp.eq.s32.totalorder %s31, 0
    %p351 = por %p349, %p350
    %p352 = scmp.ne.s32.totalorder %s338, %s339
    %p353 = scmp.eq.s32.totalorder %s32, 1
    %p354 = por %p352, %p353
    %p356 = scmp.ne.s32.totalorder %s339, %s355
    %p357 = scmp.eq.s32.totalorder %s32, 0
    %p358 = por %p356, %p357
    %s359 = ssub.s32 %s34, %s41
    %p360 = scmp.eq.s32.totalorder %s359, 0
    %s362 = sadd.s32 %s361, 1
    %s363 = scalar_select %p360, %s361, %s362
    %p366 = pneg %p360
    %p367 = scmp.eq.s32.totalorder %s26, 1
    %p368 = por %p366, %p367
    %p369 = scmp.ne.s32.totalorder %s361, %s364
    %p370 = scmp.eq.s32.totalorder %s26, 0
    %p371 = por %p369, %p370
    %p372 = scmp.ne.s32.totalorder %s361, %s364
    %p373 = scmp.eq.s32.totalorder %s31, 1
    %p374 = por %p372, %p373
    %p375 = scmp.ne.s32.totalorder %s364, %s365
    %p376 = scmp.eq.s32.totalorder %s31, 0
    %p377 = por %p375, %p376
    %p378 = scmp.ne.s32.totalorder %s364, %s365
    %p379 = scmp.eq.s32.totalorder %s32, 1
    %p380 = por %p378, %p379
    %p382 = scmp.ne.s32.totalorder %s365, %s381
    %p383 = scmp.eq.s32.totalorder %s32, 0
    %p384 = por %p382, %p383
    %s385 = ssub.s32 %s34, %s41
    %p386 = scmp.eq.s32.totalorder %s385, 0
    %s388 = sadd.s32 %s387, 1
    %s389 = scalar_select %p386, %s387, %s388
    %p392 = pneg %p386
    %p393 = scmp.eq.s32.totalorder %s26, 1
    %p394 = por %p392, %p393
    %p395 = scmp.ne.s32.totalorder %s387, %s390
    %p396 = scmp.eq.s32.totalorder %s26, 0
    %p397 = por %p395, %p396
    %p398 = scmp.ne.s32.totalorder %s387, %s390
    %p399 = scmp.eq.s32.totalorder %s31, 1
    %p400 = por %p398, %p399
    %p401 = scmp.ne.s32.totalorder %s390, %s391
    %p402 = scmp.eq.s32.totalorder %s31, 0
    %p403 = por %p401, %p402
    %p404 = scmp.ne.s32.totalorder %s390, %s391
    %p405 = scmp.eq.s32.totalorder %s32, 1
    %p406 = por %p404, %p405
    %p408 = scmp.ne.s32.totalorder %s391, %s407
    %p409 = scmp.eq.s32.totalorder %s32, 0
    %p410 = por %p408, %p409
    %s411 = ssub.s32 %s34, %s41
    %p412 = scmp.eq.s32.totalorder %s411, 0
    %s414 = sadd.s32 %s413, 1
    %s415 = scalar_select %p412, %s413, %s414
    %p418 = pneg %p412
    %p419 = scmp.eq.s32.totalorder %s26, 1
    %p420 = por %p418, %p419
    %p421 = scmp.ne.s32.totalorder %s413, %s416
    %p422 = scmp.eq.s32.totalorder %s26, 0
    %p423 = por %p421, %p422
    %p424 = scmp.ne.s32.totalorder %s413, %s416
    %p425 = scmp.eq.s32.totalorder %s31, 1
    %p426 = por %p424, %p425
    %p427 = scmp.ne.s32.totalorder %s416, %s417
    %p428 = scmp.eq.s32.totalorder %s31, 0
    %p429 = por %p427, %p428
    %p430 = scmp.ne.s32.totalorder %s416, %s417
    %p431 = scmp.eq.s32.totalorder %s32, 1
    %p432 = por %p430, %p431
    %p434 = scmp.ne.s32.totalorder %s417, %s433
    %p435 = scmp.eq.s32.totalorder %s32, 0
    %p436 = por %p434, %p435
    %s437 = ssub.s32 %s34, %s41
    %p438 = scmp.eq.s32.totalorder %s437, 0
    %s440 = sadd.s32 %s439, 1
    %s441 = scalar_select %p438, %s439, %s440
    %p444 = pneg %p438
    %p445 = scmp.eq.s32.totalorder %s26, 1
    %p446 = por %p444, %p445
    %p447 = scmp.ne.s32.totalorder %s439, %s442
    %p448 = scmp.eq.s32.totalorder %s26, 0
    %p449 = por %p447, %p448
    %p450 = scmp.ne.s32.totalorder %s439, %s442
    %p451 = scmp.eq.s32.totalorder %s31, 1
    %p452 = por %p450, %p451
    %p453 = scmp.ne.s32.totalorder %s442, %s443
    %p454 = scmp.eq.s32.totalorder %s31, 0
    %p455 = por %p453, %p454
    %p456 = scmp.ne.s32.totalorder %s442, %s443
    %p457 = scmp.eq.s32.totalorder %s32, 1
    %p458 = por %p456, %p457
    %p460 = scmp.ne.s32.totalorder %s443, %s459
    %p461 = scmp.eq.s32.totalorder %s32, 0
    %p462 = por %p460, %p461
    %s463 = ssub.s32 %s34, %s41
    %p464 = scmp.eq.s32.totalorder %s463, 0
    %s466 = sadd.s32 %s465, 1
    %s467 = scalar_select %p464, %s465, %s466
    %p470 = pneg %p464
    %p471 = scmp.eq.s32.totalorder %s26, 1
    %p472 = por %p470, %p471
    %p473 = scmp.ne.s32.totalorder %s465, %s468
    %p474 = scmp.eq.s32.totalorder %s26, 0
    %p475 = por %p473, %p474
    %p476 = scmp.ne.s32.totalorder %s465, %s468
    %p477 = scmp.eq.s32.totalorder %s31, 1
    %p478 = por %p476, %p477
    %p479 = scmp.ne.s32.totalorder %s468, %s469
    %p480 = scmp.eq.s32.totalorder %s31, 0
    %p481 = por %p479, %p480
    %p482 = scmp.ne.s32.totalorder %s468, %s469
    %p483 = scmp.eq.s32.totalorder %s32, 1
    %p484 = por %p482, %p483
    %p486 = scmp.ne.s32.totalorder %s469, %s485
    %p487 = scmp.eq.s32.totalorder %s32, 0
    %p488 = por %p486, %p487
    %s490 = sadd.s32 %s489, 1
    %p493 = scmp.eq.s32.totalorder %s26, 1
    %p494 = scmp.ne.s32.totalorder %s489, %s491
    %p495 = scmp.eq.s32.totalorder %s26, 0
    %p496 = por %p494, %p495
    %p497 = scmp.ne.s32.totalorder %s489, %s491
    %p498 = scmp.eq.s32.totalorder %s31, 1
    %p499 = por %p497, %p498
    %p500 = scmp.ne.s32.totalorder %s491, %s492
    %p501 = scmp.eq.s32.totalorder %s31, 0
    %p502 = por %p500, %p501
    %p503 = scmp.ne.s32.totalorder %s491, %s492
    %p504 = scmp.eq.s32.totalorder %s32, 1
    %p505 = por %p503, %p504
    %p507 = scmp.ne.s32.totalorder %s492, %s506
    %p508 = scmp.eq.s32.totalorder %s32, 0
    %p509 = por %p507, %p508
    %s511 = sadd.s32 %s510, 1
    %p514 = scmp.eq.s32.totalorder %s26, 1
    %p515 = scmp.ne.s32.totalorder %s510, %s512
    %p516 = scmp.eq.s32.totalorder %s26, 0
    %p517 = por %p515, %p516
    %p518 = scmp.ne.s32.totalorder %s510, %s512
    %p519 = scmp.eq.s32.totalorder %s31, 1
    %p520 = por %p518, %p519
    %p521 = scmp.ne.s32.totalorder %s512, %s513
    %p522 = scmp.eq.s32.totalorder %s31, 0
    %p523 = por %p521, %p522
    %p524 = scmp.ne.s32.totalorder %s512, %s513
    %p525 = scmp.eq.s32.totalorder %s32, 1
    %p526 = por %p524, %p525
    %p528 = scmp.ne.s32.totalorder %s513, %s527
    %p529 = scmp.eq.s32.totalorder %s32, 0
    %p530 = por %p528, %p529
    %s531 = ssub.s32 %s33, %s45
    %p532 = scmp.eq.s32.totalorder %s531, 0
    %s534 = sadd.s32 %s533, 1
    %s535 = scalar_select %p532, %s533, %s534
    %p538 = pneg %p532
    %p539 = scmp.eq.s32.totalorder %s26, 1
    %p540 = por %p538, %p539
    %p541 = scmp.ne.s32.totalorder %s533, %s536
    %p542 = scmp.eq.s32.totalorder %s26, 0
    %p543 = por %p541, %p542
    %p544 = scmp.ne.s32.totalorder %s533, %s536
    %p545 = scmp.eq.s32.totalorder %s31, 1
    %p546 = por %p544, %p545
    %p547 = scmp.ne.s32.totalorder %s536, %s537
    %p548 = scmp.eq.s32.totalorder %s31, 0
    %p549 = por %p547, %p548
    %p550 = scmp.ne.s32.totalorder %s536, %s537
    %p551 = scmp.eq.s32.totalorder %s32, 1
    %p552 = por %p550, %p551
    %p554 = scmp.ne.s32.totalorder %s537, %s553
    %p555 = scmp.eq.s32.totalorder %s32, 0
    %p556 = por %p554, %p555
    %p557 = scmp.le.s32.totalorder 1, %s26
    %p558 = scmp.lt.s32.totalorder %s26, 3
    %p559 = pnand %p557, %p558
    %p560 = pneg %p559
    // Predicated region
    $region9: #{_lambda_.1} parent=5 // pred_check
      _
    $region10: #{_lambda_.1} parent=5 // pred_check_branch
      %562 = sbr.rel (%p559) target = $region12
    $region11: #{_lambda_.1} parent=5 // pred_region
      %s563 = ssub.s32 %s26, 1
      // Predicated region
      $region13: #{_lambda_.1} parent=11 // pred_check
        %p564 = pneg %p64
      $region14: #{_lambda_.1} parent=11 // pred_check_branch
        %566 = sbr.rel (%p564) target = $region16
      $region15: #{_lambda_.1} parent=11 // pred_region
        %p567 = scmp.lt.s32.totalorder %s35, 0
        %s568 = scalar_select %p567, %s35, 0
        %s569 = smul.addr %s568, 10
        %s570 = smul.addr %s569, 4
        %s571 = scalar_lea.vmem %s0, %s570
      $region16: #{_lambda_.1} parent=11 // pred_fallthru
        _
      // Predicated region
      $region17: #{_lambda_.1} parent=11 // pred_check
        %p572 = pneg %p85
      $region18: #{_lambda_.1} parent=11 // pred_check_branch
        %574 = sbr.rel (%p572) target = $region20
      $region19: #{_lambda_.1} parent=11 // pred_region
        _
      $region20: #{_lambda_.1} parent=11 // pred_fallthru
        _
      // Predicated region
      $region21: #{_lambda_.1} parent=11 // pred_check
        %p575 = pneg %p106
      $region22: #{_lambda_.1} parent=11 // pred_check_branch
        %577 = sbr.rel (%p575) target = $region24
      $region23: #{_lambda_.1} parent=11 // pred_region
        _
      $region24: #{_lambda_.1} parent=11 // pred_fallthru
        _
      // Predicated region
      $region25: #{_lambda_.1} parent=11 // pred_check
        %p578 = pneg %p127
      $region26: #{_lambda_.1} parent=11 // pred_check_branch
        %580 = sbr.rel (%p578) target = $region28
      $region27: #{_lambda_.1} parent=11 // pred_region
        _
      $region28: #{_lambda_.1} parent=11 // pred_fallthru
        _
      // Predicated region
      $region29: #{_lambda_.1} parent=11 // pred_check
        %p581 = pneg %p148
      $region30: #{_lambda_.1} parent=11 // pred_check_branch
        %583 = sbr.rel (%p581) target = $region32
      $region31: #{_lambda_.1} parent=11 // pred_region
        _
      $region32: #{_lambda_.1} parent=11 // pred_fallthru
        _
      // Predicated region
      $region33: #{_lambda_.1} parent=11 // pred_check
        %p584 = pneg %p169
      $region34: #{_lambda_.1} parent=11 // pred_check_branch
        %586 = sbr.rel (%p584) target = $region36
      $region35: #{_lambda_.1} parent=11 // pred_region
        _
      $region36: #{_lambda_.1} parent=11 // pred_fallthru
        _
      // Predicated region
      $region37: #{_lambda_.1} parent=11 // pred_check
        %p587 = pneg %p502
      $region38: #{_lambda_.1} parent=11 // pred_check_branch
        %589 = sbr.rel (%p587) target = $region40
      $region39: #{_lambda_.1} parent=11 // pred_region
        _
      $region40: #{_lambda_.1} parent=11 // pred_fallthru
        _
      // Predicated region
      $region41: #{_lambda_.1} parent=11 // pred_check
        %p590 = pneg %p523
      $region42: #{_lambda_.1} parent=11 // pred_check_branch
        %592 = sbr.rel (%p590) target = $region44
      $region43: #{_lambda_.1} parent=11 // pred_region
        _
      $region44: #{_lambda_.1} parent=11 // pred_fallthru
        _
    $region12: #{_lambda_.1} parent=5 // pred_fallthru
      _
    %p593 = scmp.lt.s32.totalorder %s26, 2
    // Predicated region
    $region45: #{_lambda_.1} parent=5 // pred_check
      %p594 = pneg %p593
    $region46: #{_lambda_.1} parent=5 // pred_check_branch
      %596 = sbr.rel (%p594) target = $region48
    $region47: #{_lambda_.1} parent=5 // pred_region
      // Predicated region
      $region49: #{_lambda_.1} parent=47 // pred_check
        %p597 = pneg %p189
      $region50: #{_lambda_.1} parent=47 // pred_check_branch
        %599 = sbr.rel (%p597) target = $region52
      $region51: #{_lambda_.1} parent=47 // pred_region
        %p600 = scmp.lt.s32.totalorder %s34, 1
        %s601 = scalar_select %p600, %s34, 1
        %s602 = scalar_lea.vmem %s6, %s601
      $region52: #{_lambda_.1} parent=47 // pred_fallthru
        _
      // Predicated region
      $region53: #{_lambda_.1} parent=47 // pred_check
        %p603 = pneg %p215
      $region54: #{_lambda_.1} parent=47 // pred_check_branch
        %605 = sbr.rel (%p603) target = $region56
      $region55: #{_lambda_.1} parent=47 // pred_region
        %p606 = scmp.lt.s32.totalorder %s34, 1
        %s607 = scalar_select %p606, %s34, 1
        %s608 = scalar_lea.vmem %s7, %s607
      $region56: #{_lambda_.1} parent=47 // pred_fallthru
        _
      // Predicated region
      $region57: #{_lambda_.1} parent=47 // pred_check
        %p609 = pneg %p241
      $region58: #{_lambda_.1} parent=47 // pred_check_branch
        %611 = sbr.rel (%p609) target = $region60
      $region59: #{_lambda_.1} parent=47 // pred_region
        %p612 = scmp.lt.s32.totalorder %s34, 1
        %s613 = scalar_select %p612, %s34, 1
        %s614 = smul.addr %s613, 48
        %s615 = smul.addr %s614, 4
        %s616 = scalar_lea.vmem %s8, %s615
      $region60: #{_lambda_.1} parent=47 // pred_fallthru
        _
      // Predicated region
      $region61: #{_lambda_.1} parent=47 // pred_check
        %p617 = pneg %p267
      $region62: #{_lambda_.1} parent=47 // pred_check_branch
        %619 = sbr.rel (%p617) target = $region64
      $region63: #{_lambda_.1} parent=47 // pred_region
        %p620 = scmp.lt.s32.totalorder %s34, 1
        %s621 = scalar_select %p620, %s34, 1
        %s622 = smul.addr %s621, 3
        %s623 = scalar_lea.vmem %s9, %s622
      $region64: #{_lambda_.1} parent=47 // pred_fallthru
        _
      // Predicated region
      $region65: #{_lambda_.1} parent=47 // pred_check
        %p624 = pneg %p293
      $region66: #{_lambda_.1} parent=47 // pred_check_branch
        %626 = sbr.rel (%p624) target = $region68
      $region67: #{_lambda_.1} parent=47 // pred_region
        %p627 = scmp.lt.s32.totalorder %s34, 1
        %s628 = scalar_select %p627, %s34, 1
        %s629 = smul.addr %s628, 16
        %s630 = smul.addr %s629, 4
        %s631 = scalar_lea.vmem %s10, %s630
      $region68: #{_lambda_.1} parent=47 // pred_fallthru
        _
      // Predicated region
      $region69: #{_lambda_.1} parent=47 // pred_check
        %p632 = pneg %p319
      $region70: #{_lambda_.1} parent=47 // pred_check_branch
        %634 = sbr.rel (%p632) target = $region72
      $region71: #{_lambda_.1} parent=47 // pred_region
        %p635 = scmp.lt.s32.totalorder %s34, 1
        %s636 = scalar_select %p635, %s34, 1
        %s637 = scalar_lea.vmem %s11, %s636
      $region72: #{_lambda_.1} parent=47 // pred_fallthru
        _
      // Predicated region
      $region73: #{_lambda_.1} parent=47 // pred_check
        %p638 = pneg %p345
      $region74: #{_lambda_.1} parent=47 // pred_check_branch
        %640 = sbr.rel (%p638) target = $region76
      $region75: #{_lambda_.1} parent=47 // pred_region
        %p641 = scmp.lt.s32.totalorder %s34, 1
        %s642 = scalar_select %p641, %s34, 1
        %s643 = scalar_lea.vmem %s12, %s642
      $region76: #{_lambda_.1} parent=47 // pred_fallthru
        _
      // Predicated region
      $region77: #{_lambda_.1} parent=47 // pred_check
        %p644 = pneg %p371
      $region78: #{_lambda_.1} parent=47 // pred_check_branch
        %646 = sbr.rel (%p644) target = $region80
      $region79: #{_lambda_.1} parent=47 // pred_region
        %p647 = scmp.lt.s32.totalorder %s34, 1
        %s648 = scalar_select %p647, %s34, 1
        %s649 = scalar_lea.vmem %s13, %s648
      $region80: #{_lambda_.1} parent=47 // pred_fallthru
        _
      // Predicated region
      $region81: #{_lambda_.1} parent=47 // pred_check
        %p650 = pneg %p397
      $region82: #{_lambda_.1} parent=47 // pred_check_branch
        %652 = sbr.rel (%p650) target = $region84
      $region83: #{_lambda_.1} parent=47 // pred_region
        %p653 = scmp.lt.s32.totalorder %s34, 1
        %s654 = scalar_select %p653, %s34, 1
        %s655 = smul.addr %s654, 64
        %s656 = smul.addr %s655, 4
        %s657 = scalar_lea.vmem %s14, %s656
      $region84: #{_lambda_.1} parent=47 // pred_fallthru
        _
      // Predicated region
      $region85: #{_lambda_.1} parent=47 // pred_check
        %p658 = pneg %p423
      $region86: #{_lambda_.1} parent=47 // pred_check_branch
        %660 = sbr.rel (%p658) target = $region88
      $region87: #{_lambda_.1} parent=47 // pred_region
        %p661 = scmp.lt.s32.totalorder %s34, 1
        %s662 = scalar_select %p661, %s34, 1
        %s663 = smul.addr %s662, 4
        %s664 = scalar_lea.vmem %s15, %s663
      $region88: #{_lambda_.1} parent=47 // pred_fallthru
        _
      // Predicated region
      $region89: #{_lambda_.1} parent=47 // pred_check
        %p665 = pneg %p449
      $region90: #{_lambda_.1} parent=47 // pred_check_branch
        %667 = sbr.rel (%p665) target = $region92
      $region91: #{_lambda_.1} parent=47 // pred_region
        %p668 = scmp.lt.s32.totalorder %s34, 1
        %s669 = scalar_select %p668, %s34, 1
        %s670 = smul.addr %s669, 64
        %s671 = smul.addr %s670, 4
        %s672 = scalar_lea.vmem %s16, %s671
      $region92: #{_lambda_.1} parent=47 // pred_fallthru
        _
      // Predicated region
      $region93: #{_lambda_.1} parent=47 // pred_check
        %p673 = pneg %p475
      $region94: #{_lambda_.1} parent=47 // pred_check_branch
        %675 = sbr.rel (%p673) target = $region96
      $region95: #{_lambda_.1} parent=47 // pred_region
        %p676 = scmp.lt.s32.totalorder %s34, 1
        %s677 = scalar_select %p676, %s34, 1
        %s678 = scalar_lea.vmem %s17, %s677
      $region96: #{_lambda_.1} parent=47 // pred_fallthru
        _
    $region48: #{_lambda_.1} parent=5 // pred_fallthru
      _
    %p679 = scmp.le.s32.totalorder 1, %s26
    %p680 = scmp.lt.s32.totalorder %s26, 3
    %p681 = pnand %p679, %p680
    %p682 = pneg %p681
    // Predicated region
    $region97: #{_lambda_.1} parent=5 // pred_check
      _
    $region98: #{_lambda_.1} parent=5 // pred_check_branch
      %684 = sbr.rel (%p681) target = $region100
    $region99: #{_lambda_.1} parent=5 // pred_region
      %s685 = ssub.s32 %s26, 1
      %p686 = scmp.lt.s32.totalorder %s35, 0
      %s687 = scalar_select %p686, %s35, 0
      %s688 = smul.addr %s687, 10
      %s689 = smul.addr %s688, 4
      %s690 = scalar_lea.vmem %s0, %s689
      %p691 = pneg %p64
      %p692 = pneg %p61
      %p693 = pneg %p85
      %p694 = pneg %p82
      %p695 = pneg %p106
      %p696 = pneg %p103
      %p697 = pneg %p127
      %p698 = pneg %p124
      %p699 = pneg %p148
      %p700 = pneg %p145
      %p701 = pneg %p169
      %p702 = pneg %p166
      %p703 = scmp.lt.s32.totalorder %s36, 1
      %s704 = scalar_select %p703, %s36, 1
      %s705 = scalar_lea.vmem %s6, %s704
      %p706 = pneg %p195
      %p707 = pneg %p192
      %p708 = scmp.lt.s32.totalorder %s36, 1
      %s709 = scalar_select %p708, %s36, 1
      %s710 = scalar_lea.vmem %s7, %s709
      %p711 = pneg %p221
      %p712 = pneg %p218
      %p713 = scmp.lt.s32.totalorder %s36, 1
      %s714 = scalar_select %p713, %s36, 1
      %s715 = smul.addr %s714, 48
      %s716 = smul.addr %s715, 4
      %s717 = scalar_lea.vmem %s8, %s716
      %p718 = pneg %p247
      %p719 = pneg %p244
      %p720 = scmp.lt.s32.totalorder %s36, 1
      %s721 = scalar_select %p720, %s36, 1
      %s722 = smul.addr %s721, 3
      %s723 = scalar_lea.vmem %s9, %s722
      %p724 = pneg %p273
      %p725 = pneg %p270
      %p726 = scmp.lt.s32.totalorder %s36, 1
      %s727 = scalar_select %p726, %s36, 1
      %s728 = smul.addr %s727, 16
      %s729 = smul.addr %s728, 4
      %s730 = scalar_lea.vmem %s10, %s729
      %p731 = pneg %p299
      %p732 = pneg %p296
      %p733 = scmp.lt.s32.totalorder %s36, 1
      %s734 = scalar_select %p733, %s36, 1
      %s735 = scalar_lea.vmem %s11, %s734
      %p736 = pneg %p325
      %p737 = pneg %p322
      %p738 = scmp.lt.s32.totalorder %s36, 1
      %s739 = scalar_select %p738, %s36, 1
      %s740 = scalar_lea.vmem %s12, %s739
      %p741 = pneg %p351
      %p742 = pneg %p348
      %p743 = scmp.lt.s32.totalorder %s36, 1
      %s744 = scalar_select %p743, %s36, 1
      %s745 = scalar_lea.vmem %s13, %s744
      %p746 = pneg %p377
      %p747 = pneg %p374
      %p748 = scmp.lt.s32.totalorder %s36, 1
      %s749 = scalar_select %p748, %s36, 1
      %s750 = smul.addr %s749, 64
      %s751 = smul.addr %s750, 4
      %s752 = scalar_lea.vmem %s14, %s751
      %p753 = pneg %p403
      %p754 = pneg %p400
      %p755 = scmp.lt.s32.totalorder %s36, 1
      %s756 = scalar_select %p755, %s36, 1
      %s757 = smul.addr %s756, 4
      %s758 = scalar_lea.vmem %s15, %s757
      %p759 = pneg %p429
      %p760 = pneg %p426
      %p761 = scmp.lt.s32.totalorder %s36, 1
      %s762 = scalar_select %p761, %s36, 1
      %s763 = smul.addr %s762, 64
      %s764 = smul.addr %s763, 4
      %s765 = scalar_lea.vmem %s16, %s764
      %p766 = pneg %p455
      %p767 = pneg %p452
      %p768 = scmp.lt.s32.totalorder %s36, 1
      %s769 = scalar_select %p768, %s36, 1
      %s770 = scalar_lea.vmem %s17, %s769
      %p771 = pneg %p481
      %p772 = pneg %p478
      %p773 = pneg %p502
      %p774 = pneg %p499
      %p775 = pneg %p523
      %p776 = pneg %p520
      %p777 = pneg %p549
      %p778 = pneg %p546
      %p779 = scmp.lt.s32.totalorder %s35, 0
      %s780 = scalar_select %p779, %s35, 0
      %s781 = smul.addr %s780, 2
      %s782 = smul.addr %s781, 8
      %s783 = scalar_lea.vmem %s20, %s782
      %p784 = scmp.lt.s32.totalorder %s35, 0
      %s785 = scalar_select %p784, %s35, 0
      %s786 = smul.addr %s785, 10
      %s787 = smul.addr %s786, 4
      %s788 = scalar_lea.vmem %s0, %s787
      %p789 = scmp.lt.s32.totalorder %s36, 1
      %s790 = scalar_select %p789, %s36, 1
      %s791 = scalar_lea.vmem %s6, %s790
      %p792 = scmp.lt.s32.totalorder %s36, 1
      %s793 = scalar_select %p792, %s36, 1
      %s794 = scalar_lea.vmem %s7, %s793
      %p795 = scmp.lt.s32.totalorder %s36, 1
      %s796 = scalar_select %p795, %s36, 1
      %s797 = smul.addr %s796, 48
      %s798 = smul.addr %s797, 4
      %s799 = scalar_lea.vmem %s8, %s798
      %p800 = scmp.lt.s32.totalorder %s36, 1
      %s801 = scalar_select %p800, %s36, 1
      %s802 = smul.addr %s801, 3
      %s803 = scalar_lea.vmem %s9, %s802
      %p804 = scmp.lt.s32.totalorder %s36, 1
      %s805 = scalar_select %p804, %s36, 1
      %s806 = smul.addr %s805, 16
      %s807 = smul.addr %s806, 4
      %s808 = scalar_lea.vmem %s10, %s807
      %p809 = scmp.lt.s32.totalorder %s36, 1
      %s810 = scalar_select %p809, %s36, 1
      %s811 = scalar_lea.vmem %s11, %s810
      %p812 = scmp.lt.s32.totalorder %s36, 1
      %s813 = scalar_select %p812, %s36, 1
      %s814 = scalar_lea.vmem %s12, %s813
      %p815 = scmp.lt.s32.totalorder %s36, 1
      %s816 = scalar_select %p815, %s36, 1
      %s817 = scalar_lea.vmem %s13, %s816
      %p818 = scmp.lt.s32.totalorder %s36, 1
      %s819 = scalar_select %p818, %s36, 1
      %s820 = smul.addr %s819, 64
      %s821 = smul.addr %s820, 4
      %s822 = scalar_lea.vmem %s14, %s821
      %p823 = scmp.lt.s32.totalorder %s36, 1
      %s824 = scalar_select %p823, %s36, 1
      %s825 = smul.addr %s824, 4
      %s826 = scalar_lea.vmem %s15, %s825
      %p827 = scmp.lt.s32.totalorder %s36, 1
      %s828 = scalar_select %p827, %s36, 1
      %s829 = smul.addr %s828, 64
      %s830 = smul.addr %s829, 4
      %s831 = scalar_lea.vmem %s16, %s830
      %p832 = scmp.lt.s32.totalorder %s36, 1
      %s833 = scalar_select %p832, %s36, 1
      %s834 = scalar_lea.vmem %s17, %s833
      %p835 = scmp.lt.s32.totalorder %s35, 0
      %s836 = scalar_select %p835, %s35, 0
      %s837 = smul.addr %s836, 2
      %s838 = smul.addr %s837, 8
      %s839 = scalar_lea.vmem %s20, %s838
      %p841 = scmp.eq.s32.totalorder %s36, 0
      // Predicated region
      $region101: #{_lambda_.1} parent=99 // pred_check
        %p842 = pneg %p841
      $region102: #{_lambda_.1} parent=99 // pred_check_branch
        %844 = sbr.rel (%p842) target = $region104
      $region103: #{_lambda_.1} parent=99 // pred_region
        %v845 = vld [vmem:[%s788] sm:$0xff]
        %v846 = vld [vmem:[%s788 + $0x8] sm:$0xff]
        %v847 = vld [vmem:[%s788 + $0x10] sm:$0xf]
        %v848 = vld [vmem:[%s788 + $0x14] sm:$0xff]
        %v849 = vld [vmem:[%s788 + $0x1c] sm:$0xff]
        %v850 = vld [vmem:[%s788 + $0x24] sm:$0xf]
        %v851 = vld [vmem:[%s3] sm:$0xf]
        %v852 = vld [vmem:[%s3 + $0x4] sm:$0xf]
        %v853 = vld [vmem:[%s3 + $0x8] sm:$0xf]
        %v854 = vld [vmem:[%s3 + $0xc] sm:$0xf]
        %v855 = vld [vmem:[%s3 + $0x10] sm:$0xf]
        %v856 = vld [vmem:[%s3 + $0x14] sm:$0xf]
        %v857 = vld [vmem:[%s3 + $0x18] sm:$0xf]
        %v858 = vld [vmem:[%s3 + $0x1c] sm:$0xf]
        %v859 = vld [vmem:[%s3 + $0x20] sm:$0xf]
        %v860 = vld [vmem:[%s3 + $0x24] sm:$0xf]
        %v861 = vld [vmem:[%s3 + $0x28] sm:$0xf]
        %v862 = vld [vmem:[%s3 + $0x2c] sm:$0xf]
        %v863 = vld [vmem:[%s3 + $0x30] sm:$0xf]
        %v864 = vld [vmem:[%s3 + $0x34] sm:$0xf]
        %v865 = vld [vmem:[%s3 + $0x38] sm:$0xf]
        %v866 = vld [vmem:[%s3 + $0x3c] sm:$0xf]
        %v867 = vld [vmem:[%s3 + $0x40] sm:$0xf]
        %v868 = vld [vmem:[%s3 + $0x44] sm:$0xf]
        %v869 = vld [vmem:[%s3 + $0x48] sm:$0xf]
        %v870 = vld [vmem:[%s3 + $0x4c] sm:$0xf]
        %v871 = vld [vmem:[%s3 + $0x50] sm:$0xf]
        %v872 = vld [vmem:[%s3 + $0x54] sm:$0xf]
        %v873 = vld [vmem:[%s3 + $0x58] sm:$0xf]
        %v874 = vld [vmem:[%s3 + $0x5c] sm:$0xf]
        %v875 = vld [vmem:[%s3 + $0x60] sm:$0xf]
        %v876 = vld [vmem:[%s3 + $0x64] sm:$0xf]
        %v877 = vld [vmem:[%s3 + $0x68] sm:$0xf]
        %v878 = vld [vmem:[%s3 + $0x6c] sm:$0xf]
        %v879 = vld [vmem:[%s3 + $0x70] sm:$0xf]
        %v880 = vld [vmem:[%s3 + $0x74] sm:$0xf]
        %v881 = vld [vmem:[%s3 + $0x78] sm:$0xf]
        %v882 = vld [vmem:[%s3 + $0x7c] sm:$0xf]
        %v883 = vld [vmem:[%s3 + $0x80] sm:$0xf]
        %v884 = vld [vmem:[%s3 + $0x84] sm:$0xf]
        %v885 = vld [vmem:[%s3 + $0x88] sm:$0xf]
        %v886 = vld [vmem:[%s3 + $0x8c] sm:$0xf]
        %v887 = vld [vmem:[%s3 + $0x90] sm:$0xf]
        %v888 = vld [vmem:[%s3 + $0x94] sm:$0xf]
        %v889 = vld [vmem:[%s3 + $0x98] sm:$0xf]
        %v890 = vld [vmem:[%s3 + $0x9c] sm:$0xf]
        %v891 = vld [vmem:[%s3 + $0xa0] sm:$0xf]
        %v892 = vld [vmem:[%s3 + $0xa4] sm:$0xf]
        %v893 = vld [vmem:[%s3 + $0xa8] sm:$0xf]
        %v894 = vld [vmem:[%s3 + $0xac] sm:$0xf]
        %v895 = vld [vmem:[%s3 + $0xb0] sm:$0xf]
        %v896 = vld [vmem:[%s3 + $0xb4] sm:$0xf]
        %v897 = vld [vmem:[%s3 + $0xb8] sm:$0xf]
        %v898 = vld [vmem:[%s3 + $0xbc] sm:$0xf]
        %v899 = vld [vmem:[%s3 + $0xc0] sm:$0xf]
        %v900 = vld [vmem:[%s3 + $0xc4] sm:$0xf]
        %v901 = vld [vmem:[%s3 + $0xc8] sm:$0xf]
        %v902 = vld [vmem:[%s3 + $0xcc] sm:$0xf]
        %v903 = vld [vmem:[%s3 + $0xd0] sm:$0xf]
        %v904 = vld [vmem:[%s3 + $0xd4] sm:$0xf]
        %v905 = vld [vmem:[%s3 + $0xd8] sm:$0xf]
        %v906 = vld [vmem:[%s3 + $0xdc] sm:$0xf]
        %v907 = vld [vmem:[%s3 + $0xe0] sm:$0xf]
        %v908 = vld [vmem:[%s3 + $0xe4] sm:$0xf]
        %v909 = vld [vmem:[%s3 + $0xe8] sm:$0xf]
        %v910 = vld [vmem:[%s3 + $0xec] sm:$0xf]
        %v911 = vld [vmem:[%s3 + $0xf0] sm:$0xf]
        %v912 = vld [vmem:[%s3 + $0xf4] sm:$0xf]
        %v913 = vld [vmem:[%s3 + $0xf8] sm:$0xf]
        %v914 = vld [vmem:[%s3 + $0xfc] sm:$0xf]
        %v915 = vld [vmem:[%s3 + $0x100] sm:$0xf]
        %v916 = vld [vmem:[%s3 + $0x104] sm:$0xf]
        %v917 = vld [vmem:[%s3 + $0x108] sm:$0xf]
        %v918 = vld [vmem:[%s3 + $0x10c] sm:$0xf]
        %v919 = vld [vmem:[%s3 + $0x110] sm:$0xf]
        %v920 = vld [vmem:[%s3 + $0x114] sm:$0xf]
        %v921 = vld [vmem:[%s3 + $0x118] sm:$0xf]
        %v922 = vld [vmem:[%s3 + $0x11c] sm:$0xf]
        %v923 = vld [vmem:[%s3 + $0x120] sm:$0xf]
        %v924 = vld [vmem:[%s3 + $0x124] sm:$0xf]
        %v925 = vld [vmem:[%s3 + $0x128] sm:$0xf]
        %v926 = vld [vmem:[%s3 + $0x12c] sm:$0xf]
        %v927 = vld [vmem:[%s3 + $0x130] sm:$0xf]
        %v928 = vld [vmem:[%s3 + $0x134] sm:$0xf]
        %v929 = vld [vmem:[%s3 + $0x138] sm:$0xf]
        %v930 = vld [vmem:[%s3 + $0x13c] sm:$0xf]
        %v931 = vld [vmem:[%s1] sm:$0xff]
        %v932 = vld [vmem:[%s1 + $0x8] sm:$0xff]
        %v939 = vunpack.c.l.b16 %v845
        %v940 = vunpack.c.h.b16 %v845
        %v941 = vunpack.c.l.b16 %v846
        %v942 = vunpack.c.h.b16 %v846
        %v943 = vunpack.c.l.b16 %v847
        %v944 = vunpack.c.l.b16 %v848
        %v945 = vunpack.c.h.b16 %v848
        %v946 = vunpack.c.l.b16 %v849
        %v947 = vunpack.c.h.b16 %v849
        %v948 = vunpack.c.l.b16 %v850
        %v949 = vpack.c.b16 %v944, %v939
        %v950 = vpack.c.b16 %v945, %v940
        %v951 = vpack.c.b16 %v946, %v941
        %v952 = vpack.c.b16 %v947, %v942
        %v953 = vpack.c.b16 %v948, %v943
        %v1039 = vunpack.c.l.b16 %v851
        %v1040 = vunpack.c.l.b16 %v852
        %v1041 = vunpack.c.l.b16 %v853
        %v1042 = vunpack.c.l.b16 %v854
        %v1043 = vunpack.c.l.b16 %v855
        %v1044 = vunpack.c.l.b16 %v856
        %v1045 = vunpack.c.l.b16 %v857
        %v1046 = vunpack.c.l.b16 %v858
        %v1047 = vunpack.c.l.b16 %v859
        %v1048 = vunpack.c.l.b16 %v860
        %v1049 = vunpack.c.l.b16 %v861
        %v1050 = vunpack.c.l.b16 %v862
        %v1051 = vunpack.c.l.b16 %v863
        %v1052 = vunpack.c.l.b16 %v864
        %v1053 = vunpack.c.l.b16 %v865
        %v1054 = vunpack.c.l.b16 %v866
        %v1055 = vunpack.c.l.b16 %v867
        %v1056 = vunpack.c.l.b16 %v868
        %v1057 = vunpack.c.l.b16 %v869
        %v1058 = vunpack.c.l.b16 %v870
        %v1059 = vunpack.c.l.b16 %v871
        %v1060 = vunpack.c.l.b16 %v872
        %v1061 = vunpack.c.l.b16 %v873
        %v1062 = vunpack.c.l.b16 %v874
        %v1063 = vunpack.c.l.b16 %v875
        %v1064 = vunpack.c.l.b16 %v876
        %v1065 = vunpack.c.l.b16 %v877
        %v1066 = vunpack.c.l.b16 %v878
        %v1067 = vunpack.c.l.b16 %v879
        %v1068 = vunpack.c.l.b16 %v880
        %v1069 = vunpack.c.l.b16 %v881
        %v1070 = vunpack.c.l.b16 %v882
        %v1071 = vunpack.c.l.b16 %v883
        %v1072 = vunpack.c.l.b16 %v884
        %v1073 = vunpack.c.l.b16 %v885
        %v1074 = vunpack.c.l.b16 %v886
        %v1075 = vunpack.c.l.b16 %v887
        %v1076 = vunpack.c.l.b16 %v888
        %v1077 = vunpack.c.l.b16 %v889
        %v1078 = vunpack.c.l.b16 %v890
        %v1079 = vunpack.c.l.b16 %v891
        %v1080 = vunpack.c.l.b16 %v892
        %v1081 = vunpack.c.l.b16 %v893
        %v1082 = vunpack.c.l.b16 %v894
        %v1083 = vunpack.c.l.b16 %v895
        %v1084 = vunpack.c.l.b16 %v896
        %v1085 = vunpack.c.l.b16 %v897
        %v1086 = vunpack.c.l.b16 %v898
        %v1087 = vunpack.c.l.b16 %v899
        %v1088 = vunpack.c.l.b16 %v900
        %v1089 = vunpack.c.l.b16 %v901
        %v1090 = vunpack.c.l.b16 %v902
        %v1091 = vunpack.c.l.b16 %v903
        %v1092 = vunpack.c.l.b16 %v904
        %v1093 = vunpack.c.l.b16 %v905
        %v1094 = vunpack.c.l.b16 %v906
        %v1095 = vunpack.c.l.b16 %v907
        %v1096 = vunpack.c.l.b16 %v908
        %v1097 = vunpack.c.l.b16 %v909
        %v1098 = vunpack.c.l.b16 %v910
        %v1099 = vunpack.c.l.b16 %v911
        %v1100 = vunpack.c.l.b16 %v912
        %v1101 = vunpack.c.l.b16 %v913
        %v1102 = vunpack.c.l.b16 %v914
        %v1103 = vunpack.c.l.b16 %v915
        %v1104 = vunpack.c.l.b16 %v916
        %v1105 = vunpack.c.l.b16 %v917
        %v1106 = vunpack.c.l.b16 %v918
        %v1107 = vunpack.c.l.b16 %v919
        %v1108 = vunpack.c.l.b16 %v920
        %v1109 = vunpack.c.l.b16 %v921
        %v1110 = vunpack.c.l.b16 %v922
        %v1111 = vunpack.c.l.b16 %v923
        %v1112 = vunpack.c.l.b16 %v924
        %v1113 = vunpack.c.l.b16 %v925
        %v1114 = vunpack.c.l.b16 %v926
        %v1115 = vunpack.c.l.b16 %v927
        %v1116 = vunpack.c.l.b16 %v928
        %v1117 = vunpack.c.l.b16 %v929
        %v1118 = vunpack.c.l.b16 %v930
        %v1119 = vpack.c.b16 %v1040, %v1039
        %v1120 = vpack.c.b16 %v1042, %v1041
        %v1121 = vpack.c.b16 %v1044, %v1043
        %v1122 = vpack.c.b16 %v1046, %v1045
        %v1123 = vpack.c.b16 %v1048, %v1047
        %v1124 = vpack.c.b16 %v1050, %v1049
        %v1125 = vpack.c.b16 %v1052, %v1051
        %v1126 = vpack.c.b16 %v1054, %v1053
        %v1127 = vpack.c.b16 %v1056, %v1055
        %v1128 = vpack.c.b16 %v1058, %v1057
        %v1129 = vpack.c.b16 %v1060, %v1059
        %v1130 = vpack.c.b16 %v1062, %v1061
        %v1131 = vpack.c.b16 %v1064, %v1063
        %v1132 = vpack.c.b16 %v1066, %v1065
        %v1133 = vpack.c.b16 %v1068, %v1067
        %v1134 = vpack.c.b16 %v1070, %v1069
        %v1135 = vpack.c.b16 %v1072, %v1071
        %v1136 = vpack.c.b16 %v1074, %v1073
        %v1137 = vpack.c.b16 %v1076, %v1075
        %v1138 = vpack.c.b16 %v1078, %v1077
        %v1139 = vpack.c.b16 %v1080, %v1079
        %v1140 = vpack.c.b16 %v1082, %v1081
        %v1141 = vpack.c.b16 %v1084, %v1083
        %v1142 = vpack.c.b16 %v1086, %v1085
        %v1143 = vpack.c.b16 %v1088, %v1087
        %v1144 = vpack.c.b16 %v1090, %v1089
        %v1145 = vpack.c.b16 %v1092, %v1091
        %v1146 = vpack.c.b16 %v1094, %v1093
        %v1147 = vpack.c.b16 %v1096, %v1095
        %v1148 = vpack.c.b16 %v1098, %v1097
        %v1149 = vpack.c.b16 %v1100, %v1099
        %v1150 = vpack.c.b16 %v1102, %v1101
        %v1151 = vpack.c.b16 %v1104, %v1103
        %v1152 = vpack.c.b16 %v1106, %v1105
        %v1153 = vpack.c.b16 %v1108, %v1107
        %v1154 = vpack.c.b16 %v1110, %v1109
        %v1155 = vpack.c.b16 %v1112, %v1111
        %v1156 = vpack.c.b16 %v1114, %v1113
        %v1157 = vpack.c.b16 %v1116, %v1115
        %v1158 = vpack.c.b16 %v1118, %v1117
        %1199 = vmatprep.subr.bf16.mxu0 0
        %1200 = vmatpush1.bf16.msra.mxu0 %v1119
        %1201 = vmatprep.subr.bf16.mxu0 0
        %1202 = vmatpush1.bf16.msra.mxu0 %v1120
        %1203 = vmatprep.subr.bf16.mxu0 0
        %1204 = vmatpush1.bf16.msra.mxu0 %v1121
        %1205 = vmatprep.subr.bf16.mxu0 0
        %1206 = vmatpush1.bf16.msra.mxu0 %v1122
        %1207 = vmatprep.subr.bf16.mxu0 0
        %1208 = vmatpush1.bf16.msra.mxu0 %v1123
        %1209 = vmatprep.subr.bf16.mxu0 0
        %1210 = vmatpush1.bf16.msra.mxu0 %v1124
        %1211 = vmatprep.subr.bf16.mxu0 0
        %1212 = vmatpush1.bf16.msra.mxu0 %v1125
        %1213 = vmatprep.subr.bf16.mxu0 0
        %1214 = vmatpush1.bf16.msra.mxu0 %v1126
        %1215 = vmatprep.subr.bf16.mxu0 0
        %1216 = vmatpush1.bf16.msra.mxu0 %v1127
        %1217 = vmatprep.subr.bf16.mxu0 0
        %1218 = vmatpush1.bf16.msra.mxu0 %v1128
        %1219 = vmatprep.subr.bf16.mxu0 0
        %1220 = vmatpush1.bf16.msra.mxu0 %v1129
        %1221 = vmatprep.subr.bf16.mxu0 0
        %1222 = vmatpush1.bf16.msra.mxu0 %v1130
        %1223 = vmatprep.subr.bf16.mxu0 0
        %1224 = vmatpush1.bf16.msra.mxu0 %v1131
        %1225 = vmatprep.subr.bf16.mxu0 0
        %1226 = vmatpush1.bf16.msra.mxu0 %v1132
        %1227 = vmatprep.subr.bf16.mxu0 0
        %1228 = vmatpush1.bf16.msra.mxu0 %v1133
        %1229 = vmatprep.subr.bf16.mxu0 0
        %1230 = vmatpush1.bf16.msra.mxu0 %v1134
        %1231 = vmatprep.mubr.bf16.mxu0 %v950
        %1232 = vmatmul.mubr.bf16.gmra.mrb[0].mxu0 %v949
        %v1233 = vpop.f32.mrb[0].mxu0
        %v1234 = vadd.f32 %v931, %v1233
        %v1235 = vpop.f32.mrb[0].mxu0
        %v1236 = vpop.f32.mrb[0].mxu0
        %v1237 = vadd.f32 %v932, %v1236
        %v1238 = vpop.f32.mrb[0].mxu0
        %1239 = vdwg.mxu0
        %1240 = vmatprep.subr.bf16.mxu0 0
        %1241 = vmatpush1.bf16.msra.mxu0 %v1135
        %1242 = vmatprep.subr.bf16.mxu0 0
        %1243 = vmatpush1.bf16.msra.mxu0 %v1136
        %1244 = vmatprep.subr.bf16.mxu0 0
        %1245 = vmatpush1.bf16.msra.mxu0 %v1137
        %1246 = vmatprep.subr.bf16.mxu0 0
        %1247 = vmatpush1.bf16.msra.mxu0 %v1138
        %1248 = vmatprep.subr.bf16.mxu0 0
        %1249 = vmatpush1.bf16.msra.mxu0 %v1139
        %1250 = vmatprep.subr.bf16.mxu0 0
        %1251 = vmatpush1.bf16.msra.mxu0 %v1140
        %1252 = vmatprep.subr.bf16.mxu0 0
        %1253 = vmatpush1.bf16.msra.mxu0 %v1141
        %1254 = vmatprep.subr.bf16.mxu0 0
        %1255 = vmatpush1.bf16.msra.mxu0 %v1142
        %1256 = vmatprep.subr.bf16.mxu0 0
        %1257 = vmatpush1.bf16.msra.mxu0 %v1143
        %1258 = vmatprep.subr.bf16.mxu0 0
        %1259 = vmatpush1.bf16.msra.mxu0 %v1144
        %1260 = vmatprep.subr.bf16.mxu0 0
        %1261 = vmatpush1.bf16.msra.mxu0 %v1145
        %1262 = vmatprep.subr.bf16.mxu0 0
        %1263 = vmatpush1.bf16.msra.mxu0 %v1146
        %1264 = vmatprep.subr.bf16.mxu0 0
        %1265 = vmatpush1.bf16.msra.mxu0 %v1147
        %1266 = vmatprep.subr.bf16.mxu0 0
        %1267 = vmatpush1.bf16.msra.mxu0 %v1148
        %1268 = vmatprep.subr.bf16.mxu0 0
        %1269 = vmatpush1.bf16.msra.mxu0 %v1149
        %1270 = vmatprep.subr.bf16.mxu0 0
        %1271 = vmatpush1.bf16.msra.mxu0 %v1150
        %1272 = vmatprep.mubr.bf16.mxu0 %v952
        %1273 = vmatmul.mubr.bf16.gmra.mrb[0].mxu0 %v951
        %v1274 = vpop.f32.mrb[0].mxu0
        %v1275 = vadd.f32 %v1234, %v1274
        %v1276 = vpop.f32.mrb[0].mxu0
        %v1277 = vpop.f32.mrb[0].mxu0
        %v1278 = vadd.f32 %v1237, %v1277
        %v1279 = vpop.f32.mrb[0].mxu0
        %1280 = vdwg.mxu0
        %1281 = vmatprep.subr.bf16.mxu0 0
        %1282 = vmatpush1.bf16.msra.mxu0 %v1151
        %1283 = vmatprep.subr.bf16.mxu0 0
        %1284 = vmatpush1.bf16.msra.mxu0 %v1152
        %1285 = vmatprep.subr.bf16.mxu0 0
        %1286 = vmatpush1.bf16.msra.mxu0 %v1153
        %1287 = vmatprep.subr.bf16.mxu0 0
        %1288 = vmatpush1.bf16.msra.mxu0 %v1154
        %1289 = vmatprep.subr.bf16.mxu0 0
        %1290 = vmatpush1.bf16.msra.mxu0 %v1155
        %1291 = vmatprep.subr.bf16.mxu0 0
        %1292 = vmatpush1.bf16.msra.mxu0 %v1156
        %1293 = vmatprep.subr.bf16.mxu0 0
        %1294 = vmatpush1.bf16.msra.mxu0 %v1157
        %1295 = vmatprep.subr.bf16.mxu0 0
        %1296 = vmatpush1.bf16.msra.mxu0 %v1158
        %1297 = vmatprep.subr.bf16.mxu0 0
        %1298 = vmatpush1.bf16.msra.mxu0 0
        %1299 = vmatprep.subr.bf16.mxu0 0
        %1300 = vmatpush1.bf16.msra.mxu0 0
        %1301 = vmatprep.subr.bf16.mxu0 0
        %1302 = vmatpush1.bf16.msra.mxu0 0
        %1303 = vmatprep.subr.bf16.mxu0 0
        %1304 = vmatpush1.bf16.msra.mxu0 0
        %1305 = vmatprep.subr.bf16.mxu0 0
        %1306 = vmatpush1.bf16.msra.mxu0 0
        %1307 = vmatprep.subr.bf16.mxu0 0
        %1308 = vmatpush1.bf16.msra.mxu0 0
        %1309 = vmatprep.subr.bf16.mxu0 0
        %1310 = vmatpush1.bf16.msra.mxu0 0
        %1311 = vmatprep.subr.bf16.mxu0 0
        %1312 = vmatpush1.bf16.msra.mxu0 0
        %1313 = vmatprep.mubr.bf16.mxu0 0
        %1314 = vmatmul.mubr.bf16.gmra.mrb[0].mxu0 %v953
        %v1315 = vpop.f32.mrb[0].mxu0
        %v1316 = vadd.f32 %v1275, %v1315
        %v1317 = vpop.f32.mrb[0].mxu0
        %v1318 = vpop.f32.mrb[0].mxu0
        %v1319 = vadd.f32 %v1278, %v1318
        %v1320 = vpop.f32.mrb[0].mxu0
        %1321 = vdwg.mxu0
        %v1322 = vld [vmem:[%s4] sm:$0x1]
        %v1323 = vld [vmem:[%s5] sm:$0x1]
        %1324 = vadd.xlane.f32.xlu0 %v1316
        %v1325 = vpop.xlane.xlu0 %1324
        %1326 = vadd.xlane.f32.xlu0 %v1319
        %v1327 = vpop.xlane.xlu0 %1326
        %v1328 = vrcp.pop 128.0
        %v1329 = vmul.f32 %v1325, %v1328
        %v1330 = vmul.f32 %v1327, %v1328
        %v1331 = vsub.f32 %v1316, %v1329
        %v1332 = vsub.f32 %v1319, %v1330
        %v1333 = vmul.f32 %v1331, %v1331
        %v1334 = vmul.f32 %v1332, %v1332
        %1335 = vadd.xlane.f32.xlu0 %v1333
        %v1336 = vpop.xlane.xlu0 %1335
        %1337 = vadd.xlane.f32.xlu0 %v1334
        %v1338 = vpop.xlane.xlu0 %1337
        %v1339 = vmul.f32 %v1336, %v1328
        %v1340 = vmul.f32 %v1338, %v1328
        %v1341 = vadd.f32 %v1339, 1e-05
        %v1342 = vadd.f32 %v1340, 1e-05
        %v1343 = vrsqrt.pop %v1341
        %v1344 = vrsqrt.pop %v1342
        %v1345 = vmul.f32 %v1331, %v1343
        %v1346 = vmul.f32 %v1332, %v1344
        %v1348 = vlaneseq
        %v1349 = vshrl.u32 %v1348, 7
        %v1350 = vsub.s32 0, %v1349
        %v1351 = vrot.slane %v1322, %v1350
        %v1353 = vmul.f32 %v1345, %v1351
        %v1354 = vmul.f32 %v1346, %v1351
        %v1356 = vlaneseq
        %v1357 = vshrl.u32 %v1356, 7
        %v1358 = vsub.s32 0, %v1357
        %v1359 = vrot.slane %v1323, %v1358
        %v1361 = vadd.f32 %v1353, %v1359
        %v1362 = vadd.f32 %v1354, %v1359
        %1363 = vst [vmem:[#allocation2] sm:$0xff] %v1361
        %1364 = vst [vmem:[#allocation2 + $0x8] sm:$0xff] %v1362
      $region104: #{_lambda_.1} parent=99 // pred_fallthru
        _
      %v1365 = vld [vmem:[#allocation2] sm:$0xff]
      %v1366 = vld [vmem:[#allocation2 + $0x8] sm:$0xff]
      %v1367 = vld [vmem:[%s791] sm:$0x1]
      %v1368 = vld [vmem:[%s794] sm:$0x1]
      %1369 = vadd.xlane.f32.xlu0 %v1365
      %v1370 = vpop.xlane.xlu0 %1369
      %1371 = vadd.xlane.f32.xlu0 %v1366
      %v1372 = vpop.xlane.xlu0 %1371
      %v1373 = vrcp.pop 128.0
      %v1374 = vmul.f32 %v1370, %v1373
      %v1375 = vmul.f32 %v1372, %v1373
      %v1376 = vsub.f32 %v1365, %v1374
      %v1377 = vsub.f32 %v1366, %v1375
      %v1378 = vmul.f32 %v1376, %v1376
      %v1379 = vmul.f32 %v1377, %v1377
      %1380 = vadd.xlane.f32.xlu0 %v1378
      %v1381 = vpop.xlane.xlu0 %1380
      %1382 = vadd.xlane.f32.xlu0 %v1379
      %v1383 = vpop.xlane.xlu0 %1382
      %v1384 = vmul.f32 %v1381, %v1373
      %v1385 = vmul.f32 %v1383, %v1373
      %v1386 = vadd.f32 %v1384, 1e-05
      %v1387 = vadd.f32 %v1385, 1e-05
      %v1388 = vrsqrt.pop %v1386
      %v1389 = vrsqrt.pop %v1387
      %v1390 = vmul.f32 %v1376, %v1388
      %v1391 = vmul.f32 %v1377, %v1389
      %v1393 = vlaneseq
      %v1394 = vshrl.u32 %v1393, 7
      %v1395 = vsub.s32 0, %v1394
      %v1396 = vrot.slane %v1367, %v1395
      %v1398 = vmul.f32 %v1390, %v1396
      %v1399 = vmul.f32 %v1391, %v1396
      %v1401 = vlaneseq
      %v1402 = vshrl.u32 %v1401, 7
      %v1403 = vsub.s32 0, %v1402
      %v1404 = vrot.slane %v1368, %v1403
      %v1406 = vadd.f32 %v1398, %v1404
      %v1407 = vadd.f32 %v1399, %v1404
      %v1408 = vpack.c.bf16 %v1407, %v1406
      %v1409 = vld [vmem:[%s799] sm:$0xff]
      %v1410 = vld [vmem:[%s799 + $0x8] sm:$0xf]
      %v1411 = vld [vmem:[%s799 + $0xc] sm:$0xff]
      %v1412 = vld [vmem:[%s799 + $0x14] sm:$0xf]
      %v1413 = vld [vmem:[%s799 + $0x18] sm:$0xff]
      %v1414 = vld [vmem:[%s799 + $0x20] sm:$0xf]
      %v1415 = vld [vmem:[%s799 + $0x24] sm:$0xff]
      %v1416 = vld [vmem:[%s799 + $0x2c] sm:$0xf]
      %v1417 = vld [vmem:[%s799 + $0x30] sm:$0xff]
      %v1418 = vld [vmem:[%s799 + $0x38] sm:$0xf]
      %v1419 = vld [vmem:[%s799 + $0x3c] sm:$0xff]
      %v1420 = vld [vmem:[%s799 + $0x44] sm:$0xf]
      %v1421 = vld [vmem:[%s799 + $0x48] sm:$0xff]
      %v1422 = vld [vmem:[%s799 + $0x50] sm:$0xf]
      %v1423 = vld [vmem:[%s799 + $0x54] sm:$0xff]
      %v1424 = vld [vmem:[%s799 + $0x5c] sm:$0xf]
      %v1425 = vld [vmem:[%s799 + $0x60] sm:$0xff]
      %v1426 = vld [vmem:[%s799 + $0x68] sm:$0xf]
      %v1427 = vld [vmem:[%s799 + $0x6c] sm:$0xff]
      %v1428 = vld [vmem:[%s799 + $0x74] sm:$0xf]
      %v1429 = vld [vmem:[%s799 + $0x78] sm:$0xff]
      %v1430 = vld [vmem:[%s799 + $0x80] sm:$0xf]
      %v1431 = vld [vmem:[%s799 + $0x84] sm:$0xff]
      %v1432 = vld [vmem:[%s799 + $0x8c] sm:$0xf]
      %v1433 = vld [vmem:[%s799 + $0x90] sm:$0xff]
      %v1434 = vld [vmem:[%s799 + $0x98] sm:$0xf]
      %v1435 = vld [vmem:[%s799 + $0x9c] sm:$0xff]
      %v1436 = vld [vmem:[%s799 + $0xa4] sm:$0xf]
      %v1437 = vld [vmem:[%s799 + $0xa8] sm:$0xff]
      %v1438 = vld [vmem:[%s799 + $0xb0] sm:$0xf]
      %v1439 = vld [vmem:[%s799 + $0xb4] sm:$0xff]
      %v1440 = vld [vmem:[%s799 + $0xbc] sm:$0xf]
      %v1441 = vld [vmem:[%s803] sm:$0x7]
      %v1443 = vlaneseq
      %v1444 = vshrl.u32 %v1443, 7
      %v1445 = vsub.s32 0, %v1444
      %v1446 = vrot.slane %v1441, %v1445
      %v1447 = vlaneseq
      %v1448 = vshrl.u32 %v1447, 7
      %v1449 = vsub.s32 1, %v1448
      %v1450 = vrot.slane %v1441, %v1449
      %v1451 = vlaneseq
      %v1452 = vshrl.u32 %v1451, 7
      %v1453 = vsub.s32 2, %v1452
      %v1454 = vrot.slane %v1441, %v1453
      %v1490 = vunpack.c.l.b16 %v1409
      %v1491 = vunpack.c.h.b16 %v1409
      %v1492 = vunpack.c.l.b16 %v1410
      %v1493 = vunpack.c.l.b16 %v1411
      %v1494 = vunpack.c.h.b16 %v1411
      %v1495 = vunpack.c.l.b16 %v1412
      %v1496 = vunpack.c.l.b16 %v1413
      %v1497 = vunpack.c.h.b16 %v1413
      %v1498 = vunpack.c.l.b16 %v1414
      %v1499 = vunpack.c.l.b16 %v1415
      %v1500 = vunpack.c.h.b16 %v1415
      %v1501 = vunpack.c.l.b16 %v1416
      %v1502 = vunpack.c.l.b16 %v1417
      %v1503 = vunpack.c.h.b16 %v1417
      %v1504 = vunpack.c.l.b16 %v1418
      %v1505 = vunpack.c.l.b16 %v1419
      %v1506 = vunpack.c.h.b16 %v1419
      %v1507 = vunpack.c.l.b16 %v1420
      %v1508 = vunpack.c.l.b16 %v1421
      %v1509 = vunpack.c.h.b16 %v1421
      %v1510 = vunpack.c.l.b16 %v1422
      %v1511 = vunpack.c.l.b16 %v1423
      %v1512 = vunpack.c.h.b16 %v1423
      %v1513 = vunpack.c.l.b16 %v1424
      %v1514 = vunpack.c.l.b16 %v1425
      %v1515 = vunpack.c.h.b16 %v1425
      %v1516 = vunpack.c.l.b16 %v1426
      %v1517 = vunpack.c.l.b16 %v1427
      %v1518 = vunpack.c.h.b16 %v1427
      %v1519 = vunpack.c.l.b16 %v1428
      %v1520 = vunpack.c.l.b16 %v1429
      %v1521 = vunpack.c.h.b16 %v1429
      %v1522 = vunpack.c.l.b16 %v1430
      %v1523 = vunpack.c.l.b16 %v1431
      %v1524 = vunpack.c.h.b16 %v1431
      %v1525 = vunpack.c.l.b16 %v1432
      %v1526 = vunpack.c.l.b16 %v1433
      %v1527 = vunpack.c.h.b16 %v1433
      %v1528 = vunpack.c.l.b16 %v1434
      %v1529 = vunpack.c.l.b16 %v1435
      %v1530 = vunpack.c.h.b16 %v1435
      %v1531 = vunpack.c.l.b16 %v1436
      %v1532 = vunpack.c.l.b16 %v1437
      %v1533 = vunpack.c.h.b16 %v1437
      %v1534 = vunpack.c.l.b16 %v1438
      %v1535 = vunpack.c.l.b16 %v1439
      %v1536 = vunpack.c.h.b16 %v1439
      %v1537 = vunpack.c.l.b16 %v1440
      %v1538 = vpack.c.b16 %v1493, %v1490
      %v1539 = vpack.c.b16 %v1494, %v1491
      %v1540 = vpack.c.b16 %v1495, %v1492
      %v1541 = vpack.c.b16 %v1499, %v1496
      %v1542 = vpack.c.b16 %v1500, %v1497
      %v1543 = vpack.c.b16 %v1501, %v1498
      %v1544 = vpack.c.b16 %v1505, %v1502
      %v1545 = vpack.c.b16 %v1506, %v1503
      %v1546 = vpack.c.b16 %v1507, %v1504
      %v1547 = vpack.c.b16 %v1511, %v1508
      %v1548 = vpack.c.b16 %v1512, %v1509
      %v1549 = vpack.c.b16 %v1513, %v1510
      %v1550 = vpack.c.b16 %v1517, %v1514
      %v1551 = vpack.c.b16 %v1518, %v1515
      %v1552 = vpack.c.b16 %v1519, %v1516
      %v1553 = vpack.c.b16 %v1523, %v1520
      %v1554 = vpack.c.b16 %v1524, %v1521
      %v1555 = vpack.c.b16 %v1525, %v1522
      %v1556 = vpack.c.b16 %v1529, %v1526
      %v1557 = vpack.c.b16 %v1530, %v1527
      %v1558 = vpack.c.b16 %v1531, %v1528
      %v1559 = vpack.c.b16 %v1535, %v1532
      %v1560 = vpack.c.b16 %v1536, %v1533
      %v1561 = vpack.c.b16 %v1537, %v1534
      %1586 = vmatprep.subr.bf16.mxu0 %v1539
      %1587 = vmatpush1.bf16.msra.mxu0 %v1538
      %1588 = vmatprep.subr.bf16.mxu0 %v1542
      %1589 = vmatpush1.bf16.msra.mxu0 %v1541
      %1590 = vmatprep.subr.bf16.mxu0 %v1545
      %1591 = vmatpush1.bf16.msra.mxu0 %v1544
      %1592 = vmatprep.subr.bf16.mxu0 %v1548
      %1593 = vmatpush1.bf16.msra.mxu0 %v1547
      %1594 = vmatprep.subr.bf16.mxu0 %v1551
      %1595 = vmatpush1.bf16.msra.mxu0 %v1550
      %1596 = vmatprep.subr.bf16.mxu0 %v1554
      %1597 = vmatpush1.bf16.msra.mxu0 %v1553
      %1598 = vmatprep.subr.bf16.mxu0 %v1557
      %1599 = vmatpush1.bf16.msra.mxu0 %v1556
      %1600 = vmatprep.subr.bf16.mxu0 %v1560
      %1601 = vmatpush1.bf16.msra.mxu0 %v1559
      %1602 = vmatprep.subr.bf16.mxu0 0
      %1603 = vmatpush1.bf16.msra.mxu0 0
      %1604 = vmatprep.subr.bf16.mxu0 0
      %1605 = vmatpush1.bf16.msra.mxu0 0
      %1606 = vmatprep.subr.bf16.mxu0 0
      %1607 = vmatpush1.bf16.msra.mxu0 0
      %1608 = vmatprep.subr.bf16.mxu0 0
      %1609 = vmatpush1.bf16.msra.mxu0 0
      %1610 = vmatprep.subr.bf16.mxu0 0
      %1611 = vmatpush1.bf16.msra.mxu0 0
      %1612 = vmatprep.subr.bf16.mxu0 0
      %1613 = vmatpush1.bf16.msra.mxu0 0
      %1614 = vmatprep.subr.bf16.mxu0 0
      %1615 = vmatpush1.bf16.msra.mxu0 0
      %1616 = vmatprep.subr.bf16.mxu0 0
      %1617 = vmatpush1.bf16.msra.mxu0 0
      %1618 = vmatprep.mubr.bf16.mxu0 0
      %1619 = vmatmul.mubr.bf16.gmra.mrb[0].mxu0 %v1408
      %v1620 = vpop.f32.mrb[0].mxu0
      %v1621 = vadd.f32 %v1446, %v1620
      %v1622 = vpop.f32.mrb[0].mxu0
      %v1623 = vadd.f32 %v1450, %v1622
      %v1624 = vpop.f32.mrb[0].mxu0
      %v1625 = vadd.f32 %v1446, %v1624
      %v1626 = vpop.f32.mrb[0].mxu0
      %v1627 = vadd.f32 %v1450, %v1626
      %1628 = vdwg.mxu0
      %1629 = vmatprep.subr.bf16.mxu0 0
      %1630 = vmatpush1.bf16.msra.mxu0 %v1540
      %1631 = vmatprep.subr.bf16.mxu0 0
      %1632 = vmatpush1.bf16.msra.mxu0 %v1543
      %1633 = vmatprep.subr.bf16.mxu0 0
      %1634 = vmatpush1.bf16.msra.mxu0 %v1546
      %1635 = vmatprep.subr.bf16.mxu0 0
      %1636 = vmatpush1.bf16.msra.mxu0 %v1549
      %1637 = vmatprep.subr.bf16.mxu0 0
      %1638 = vmatpush1.bf16.msra.mxu0 %v1552
      %1639 = vmatprep.subr.bf16.mxu0 0
      %1640 = vmatpush1.bf16.msra.mxu0 %v1555
      %1641 = vmatprep.subr.bf16.mxu0 0
      %1642 = vmatpush1.bf16.msra.mxu0 %v1558
      %1643 = vmatprep.subr.bf16.mxu0 0
      %1644 = vmatpush1.bf16.msra.mxu0 %v1561
      %1645 = vmatprep.subr.bf16.mxu0 0
      %1646 = vmatpush1.bf16.msra.mxu0 0
      %1647 = vmatprep.subr.bf16.mxu0 0
      %1648 = vmatpush1.bf16.msra.mxu0 0
      %1649 = vmatprep.subr.bf16.mxu0 0
      %1650 = vmatpush1.bf16.msra.mxu0 0
      %1651 = vmatprep.subr.bf16.mxu0 0
      %1652 = vmatpush1.bf16.msra.mxu0 0
      %1653 = vmatprep.subr.bf16.mxu0 0
      %1654 = vmatpush1.bf16.msra.mxu0 0
      %1655 = vmatprep.subr.bf16.mxu0 0
      %1656 = vmatpush1.bf16.msra.mxu0 0
      %1657 = vmatprep.subr.bf16.mxu0 0
      %1658 = vmatpush1.bf16.msra.mxu0 0
      %1659 = vmatprep.subr.bf16.mxu0 0
      %1660 = vmatpush1.bf16.msra.mxu0 0
      %1661 = vmatprep.mubr.bf16.mxu0 0
      %1662 = vmatmul.mubr.bf16.gmra.mrb[0].mxu0 %v1408
      %v1663 = vpop.f32.mrb[0].mxu0
      %v1664 = vadd.f32 %v1454, %v1663
      %v1665 = vpop.f32.mrb[0].mxu0
      %v1666 = vpop.f32.mrb[0].mxu0
      %v1667 = vadd.f32 %v1454, %v1666
      %v1668 = vpop.f32.mrb[0].mxu0
      %1669 = vdwg.mxu0
      %v1670 = vpack.c.bf16 %v1625, %v1621
      %v1671 = vpack.c.bf16 %v1627, %v1623
      %v1672 = vpack.c.bf16 %v1667, %v1664
      %v1673 = vld [vmem:[%s2] sm:$0xff]
      %v1674 = vld [vmem:[%s2 + $0x8] sm:$0xff]
      %vm1675 = vcmask 261120
      %v1677 = vsel %vm1675, %v1670, 0
      %v1680 = vsel %vm1675, %v1671, 0
      %1682 = vmatprep.subr.bf16.mxu0 0
      %1683 = vmatpush1.bf16.xpose.msra.mxu0 %v1680
      %1684 = vmatprep.subr.bf16.mxu0 0
      %1685 = vmatpush1.bf16.xpose.msra.mxu0 0
      %1686 = vmatprep.subr.bf16.mxu0 0
      %1687 = vmatpush1.bf16.xpose.msra.mxu0 0
      %1688 = vmatprep.subr.bf16.mxu0 0
      %1689 = vmatpush1.bf16.xpose.msra.mxu0 0
      %1690 = vmatprep.subr.bf16.mxu0 0
      %1691 = vmatpush1.bf16.xpose.msra.mxu0 0
      %1692 = vmatprep.subr.bf16.mxu0 0
      %1693 = vmatpush1.bf16.xpose.msra.mxu0 0
      %1694 = vmatprep.subr.bf16.mxu0 0
      %1695 = vmatpush1.bf16.xpose.msra.mxu0 0
      %1696 = vmatprep.subr.bf16.mxu0 0
      %1697 = vmatpush1.bf16.xpose.msra.mxu0 0
      %1698 = vmatprep.subr.bf16.mxu0 0
      %1699 = vmatpush1.bf16.xpose.msra.mxu0 0
      %1700 = vmatprep.subr.bf16.mxu0 0
      %1701 = vmatpush1.bf16.xpose.msra.mxu0 0
      %1702 = vmatprep.subr.bf16.mxu0 0
      %1703 = vmatpush1.bf16.xpose.msra.mxu0 0
      %1704 = vmatprep.subr.bf16.mxu0 0
      %1705 = vmatpush1.bf16.xpose.msra.mxu0 0
      %1706 = vmatprep.subr.bf16.mxu0 0
      %1707 = vmatpush1.bf16.xpose.msra.mxu0 0
      %1708 = vmatprep.subr.bf16.mxu0 0
      %1709 = vmatpush1.bf16.xpose.msra.mxu0 0
      %1710 = vmatprep.subr.bf16.mxu0 0
      %1711 = vmatpush1.bf16.xpose.msra.mxu0 0
      %1712 = vmatprep.subr.bf16.mxu0 0
      %1713 = vmatpush1.bf16.xpose.msra.mxu0 0
      %1714 = vmatprep.mubr.bf16.mxu0 0
      %1715 = vmatmul.mubr.bf16.gmra.mrb[0].mxu0 %v1677
      %v1716 = vpop.f32.mrb[0].mxu0
      %v1717 = vadd.f32 %v1673, %v1716
      %v1718 = vpop.f32.mrb[0].mxu0
      %v1719 = vpop.f32.mrb[0].mxu0
      %v1720 = vadd.f32 %v1674, %v1719
      %v1721 = vpop.f32.mrb[0].mxu0
      %1722 = vdwg.mxu0
      %vm1723 = vcmask 130048
      %v1724 = vsel %vm1723, %v1717, -inf
      %1725 = vmax.xlane.f32.xlu0 %v1724
      %v1726 = vpop.xlane.xlu0 %1725
      %v1727 = vsel %vm1723, %v1720, -inf
      %1728 = vmax.xlane.f32.xlu0 %v1727
      %v1729 = vpop.xlane.xlu0 %1728
      %v1730 = vsub.f32 %v1717, %v1726
      %v1731 = vsub.f32 %v1720, %v1729
      %v1732 = vmul.f32 %v1730, 1.442695
      %v1733 = vpow.pop %v1732
      %v1734 = vmul.f32 %v1731, 1.442695
      %v1735 = vpow.pop %v1734
      %v1736 = vsel %vm1723, %v1733, 0.0
      %1737 = vadd.xlane.f32.xlu0 %v1736
      %v1738 = vpop.xlane.xlu0 %1737
      %v1739 = vsel %vm1723, %v1735, 0.0
      %1740 = vadd.xlane.f32.xlu0 %v1739
      %v1741 = vpop.xlane.xlu0 %1740
      %v1742 = vrcp.pop %v1738
      %v1743 = vrcp.pop %v1741
      %v1744 = vpack.c.bf16 %v1735, %v1733
      %v1746 = vsel %vm1723, %v1744, 0
      %1748 = vmatprep.subr.bf16.mxu0 0
      %1749 = vmatpush1.bf16.msra.mxu0 %v1672
      %1750 = vmatprep.subr.bf16.mxu0 0
      %1751 = vmatpush1.bf16.msra.mxu0 0
      %1752 = vmatprep.subr.bf16.mxu0 0
      %1753 = vmatpush1.bf16.msra.mxu0 0
      %1754 = vmatprep.subr.bf16.mxu0 0
      %1755 = vmatpush1.bf16.msra.mxu0 0
      %1756 = vmatprep.subr.bf16.mxu0 0
      %1757 = vmatpush1.bf16.msra.mxu0 0
      %1758 = vmatprep.subr.bf16.mxu0 0
      %1759 = vmatpush1.bf16.msra.mxu0 0
      %1760 = vmatprep.subr.bf16.mxu0 0
      %1761 = vmatpush1.bf16.msra.mxu0 0
      %1762 = vmatprep.subr.bf16.mxu0 0
      %1763 = vmatpush1.bf16.msra.mxu0 0
      %1764 = vmatprep.subr.bf16.mxu0 0
      %1765 = vmatpush1.bf16.msra.mxu0 0
      %1766 = vmatprep.subr.bf16.mxu0 0
      %1767 = vmatpush1.bf16.msra.mxu0 0
      %1768 = vmatprep.subr.bf16.mxu0 0
      %1769 = vmatpush1.bf16.msra.mxu0 0
      %1770 = vmatprep.subr.bf16.mxu0 0
      %1771 = vmatpush1.bf16.msra.mxu0 0
      %1772 = vmatprep.subr.bf16.mxu0 0
      %1773 = vmatpush1.bf16.msra.mxu0 0
      %1774 = vmatprep.subr.bf16.mxu0 0
      %1775 = vmatpush1.bf16.msra.mxu0 0
      %1776 = vmatprep.subr.bf16.mxu0 0
      %1777 = vmatpush1.bf16.msra.mxu0 0
      %1778 = vmatprep.subr.bf16.mxu0 0
      %1779 = vmatpush1.bf16.msra.mxu0 0
      %1780 = vmatprep.mubr.bf16.mxu0 0
      %1781 = vmatmul.mubr.bf16.gmra.mrb[0].mxu0 %v1746
      %v1782 = vpop.f32.mrb[0].mxu0
      %v1783 = vadd.f32 0.0, %v1782
      %v1784 = vpop.f32.mrb[0].mxu0
      %v1785 = vpop.f32.mrb[0].mxu0
      %v1786 = vadd.f32 0.0, %v1785
      %v1787 = vpop.f32.mrb[0].mxu0
      %1788 = vdwg.mxu0
      %v1789 = vmul.f32 %v1783, %v1742
      %v1790 = vmul.f32 %v1786, %v1743
      %v1791 = vpack.c.bf16 %v1790, %v1789
      %1792 = vst.msk [vmem:[#allocation3] sm:$0xff] %vm1675, %v1791
      %1794 = vrot.lane.b32.xlu0 %v1670, 96
      %v1795 = vpop.permute.xlu0 %1794
      %1797 = vrot.lane.b32.xlu0 %v1671, 96
      %v1798 = vpop.permute.xlu0 %1797
      %v1800 = vsel %vm1675, %v1795, 0
      %v1803 = vsel %vm1675, %v1798, 0
      %1805 = vmatprep.subr.bf16.mxu0 0
      %1806 = vmatpush1.bf16.xpose.msra.mxu0 %v1803
      %1807 = vmatprep.subr.bf16.mxu0 0
      %1808 = vmatpush1.bf16.xpose.msra.mxu0 0
      %1809 = vmatprep.subr.bf16.mxu0 0
      %1810 = vmatpush1.bf16.xpose.msra.mxu0 0
      %1811 = vmatprep.subr.bf16.mxu0 0
      %1812 = vmatpush1.bf16.xpose.msra.mxu0 0
      %1813 = vmatprep.subr.bf16.mxu0 0
      %1814 = vmatpush1.bf16.xpose.msra.mxu0 0
      %1815 = vmatprep.subr.bf16.mxu0 0
      %1816 = vmatpush1.bf16.xpose.msra.mxu0 0
      %1817 = vmatprep.subr.bf16.mxu0 0
      %1818 = vmatpush1.bf16.xpose.msra.mxu0 0
      %1819 = vmatprep.subr.bf16.mxu0 0
      %1820 = vmatpush1.bf16.xpose.msra.mxu0 0
      %1821 = vmatprep.subr.bf16.mxu0 0
      %1822 = vmatpush1.bf16.xpose.msra.mxu0 0
      %1823 = vmatprep.subr.bf16.mxu0 0
      %1824 = vmatpush1.bf16.xpose.msra.mxu0 0
      %1825 = vmatprep.subr.bf16.mxu0 0
      %1826 = vmatpush1.bf16.xpose.msra.mxu0 0
      %1827 = vmatprep.subr.bf16.mxu0 0
      %1828 = vmatpush1.bf16.xpose.msra.mxu0 0
      %1829 = vmatprep.subr.bf16.mxu0 0
      %1830 = vmatpush1.bf16.xpose.msra.mxu0 0
      %1831 = vmatprep.subr.bf16.mxu0 0
      %1832 = vmatpush1.bf16.xpose.msra.mxu0 0
      %1833 = vmatprep.subr.bf16.mxu0 0
      %1834 = vmatpush1.bf16.xpose.msra.mxu0 0
      %1835 = vmatprep.subr.bf16.mxu0 0
      %1836 = vmatpush1.bf16.xpose.msra.mxu0 0
      %1837 = vmatprep.mubr.bf16.mxu0 0
      %1838 = vmatmul.mubr.bf16.gmra.mrb[0].mxu0 %v1800
      %v1839 = vpop.f32.mrb[0].mxu0
      %v1840 = vadd.f32 %v1673, %v1839
      %v1841 = vpop.f32.mrb[0].mxu0
      %v1842 = vpop.f32.mrb[0].mxu0
      %v1843 = vadd.f32 %v1674, %v1842
      %v1844 = vpop.f32.mrb[0].mxu0
      %1845 = vdwg.mxu0
      %v1846 = vsel %vm1723, %v1840, -inf
      %1847 = vmax.xlane.f32.xlu0 %v1846
      %v1848 = vpop.xlane.xlu0 %1847
      %v1849 = vsel %vm1723, %v1843, -inf
      %1850 = vmax.xlane.f32.xlu0 %v1849
      %v1851 = vpop.xlane.xlu0 %1850
      %v1852 = vsub.f32 %v1840, %v1848
      %v1853 = vsub.f32 %v1843, %v1851
      %v1854 = vmul.f32 %v1852, 1.442695
      %v1855 = vpow.pop %v1854
      %v1856 = vmul.f32 %v1853, 1.442695
      %v1857 = vpow.pop %v1856
      %v1858 = vsel %vm1723, %v1855, 0.0
      %1859 = vadd.xlane.f32.xlu0 %v1858
      %v1860 = vpop.xlane.xlu0 %1859
      %v1861 = vsel %vm1723, %v1857, 0.0
      %1862 = vadd.xlane.f32.xlu0 %v1861
      %v1863 = vpop.xlane.xlu0 %1862
      %v1864 = vrcp.pop %v1860
      %v1865 = vrcp.pop %v1863
      %v1866 = vpack.c.bf16 %v1857, %v1855
      %1868 = vrot.lane.b32.xlu0 %v1672, 96
      %v1869 = vpop.permute.xlu0 %1868
      %v1872 = vsel %vm1723, %v1866, 0
      %1874 = vmatprep.subr.bf16.mxu0 0
      %1875 = vmatpush1.bf16.msra.mxu0 %v1869
      %1876 = vmatprep.subr.bf16.mxu0 0
      %1877 = vmatpush1.bf16.msra.mxu0 0
      %1878 = vmatprep.subr.bf16.mxu0 0
      %1879 = vmatpush1.bf16.msra.mxu0 0
      %1880 = vmatprep.subr.bf16.mxu0 0
      %1881 = vmatpush1.bf16.msra.mxu0 0
      %1882 = vmatprep.subr.bf16.mxu0 0
      %1883 = vmatpush1.bf16.msra.mxu0 0
      %1884 = vmatprep.subr.bf16.mxu0 0
      %1885 = vmatpush1.bf16.msra.mxu0 0
      %1886 = vmatprep.subr.bf16.mxu0 0
      %1887 = vmatpush1.bf16.msra.mxu0 0
      %1888 = vmatprep.subr.bf16.mxu0 0
      %1889 = vmatpush1.bf16.msra.mxu0 0
      %1890 = vmatprep.subr.bf16.mxu0 0
      %1891 = vmatpush1.bf16.msra.mxu0 0
      %1892 = vmatprep.subr.bf16.mxu0 0
      %1893 = vmatpush1.bf16.msra.mxu0 0
      %1894 = vmatprep.subr.bf16.mxu0 0
      %1895 = vmatpush1.bf16.msra.mxu0 0
      %1896 = vmatprep.subr.bf16.mxu0 0
      %1897 = vmatpush1.bf16.msra.mxu0 0
      %1898 = vmatprep.subr.bf16.mxu0 0
      %1899 = vmatpush1.bf16.msra.mxu0 0
      %1900 = vmatprep.subr.bf16.mxu0 0
      %1901 = vmatpush1.bf16.msra.mxu0 0
      %1902 = vmatprep.subr.bf16.mxu0 0
      %1903 = vmatpush1.bf16.msra.mxu0 0
      %1904 = vmatprep.subr.bf16.mxu0 0
      %1905 = vmatpush1.bf16.msra.mxu0 0
      %1906 = vmatprep.mubr.bf16.mxu0 0
      %1907 = vmatmul.mubr.bf16.gmra.mrb[0].mxu0 %v1872
      %v1908 = vpop.f32.mrb[0].mxu0
      %v1909 = vadd.f32 0.0, %v1908
      %v1910 = vpop.f32.mrb[0].mxu0
      %v1911 = vpop.f32.mrb[0].mxu0
      %v1912 = vadd.f32 0.0, %v1911
      %v1913 = vpop.f32.mrb[0].mxu0
      %1914 = vdwg.mxu0
      %v1915 = vmul.f32 %v1909, %v1864
      %v1916 = vmul.f32 %v1912, %v1865
      %v1917 = vpack.c.bf16 %v1916, %v1915
      %1919 = vrot.lane.b32.xlu0 %v1917, 32
      %v1920 = vpop.permute.xlu0 %1919
      %vm1922 = vcmask 523520
      %1923 = vst.msk [vmem:[#allocation3] sm:$0xff] %vm1922, %v1920
      %1924 = vrot.lane.b32.xlu0 %v1670, 64
      %v1925 = vpop.permute.xlu0 %1924
      %1926 = vrot.lane.b32.xlu0 %v1671, 64
      %v1927 = vpop.permute.xlu0 %1926
      %v1929 = vsel %vm1675, %v1925, 0
      %v1932 = vsel %vm1675, %v1927, 0
      %1934 = vmatprep.subr.bf16.mxu0 0
      %1935 = vmatpush1.bf16.xpose.msra.mxu0 %v1932
      %1936 = vmatprep.subr.bf16.mxu0 0
      %1937 = vmatpush1.bf16.xpose.msra.mxu0 0
      %1938 = vmatprep.subr.bf16.mxu0 0
      %1939 = vmatpush1.bf16.xpose.msra.mxu0 0
      %1940 = vmatprep.subr.bf16.mxu0 0
      %1941 = vmatpush1.bf16.xpose.msra.mxu0 0
      %1942 = vmatprep.subr.bf16.mxu0 0
      %1943 = vmatpush1.bf16.xpose.msra.mxu0 0
      %1944 = vmatprep.subr.bf16.mxu0 0
      %1945 = vmatpush1.bf16.xpose.msra.mxu0 0
      %1946 = vmatprep.subr.bf16.mxu0 0
      %1947 = vmatpush1.bf16.xpose.msra.mxu0 0
      %1948 = vmatprep.subr.bf16.mxu0 0
      %1949 = vmatpush1.bf16.xpose.msra.mxu0 0
      %1950 = vmatprep.subr.bf16.mxu0 0
      %1951 = vmatpush1.bf16.xpose.msra.mxu0 0
      %1952 = vmatprep.subr.bf16.mxu0 0
      %1953 = vmatpush1.bf16.xpose.msra.mxu0 0
      %1954 = vmatprep.subr.bf16.mxu0 0
      %1955 = vmatpush1.bf16.xpose.msra.mxu0 0
      %1956 = vmatprep.subr.bf16.mxu0 0
      %1957 = vmatpush1.bf16.xpose.msra.mxu0 0
      %1958 = vmatprep.subr.bf16.mxu0 0
      %1959 = vmatpush1.bf16.xpose.msra.mxu0 0
      %1960 = vmatprep.subr.bf16.mxu0 0
      %1961 = vmatpush1.bf16.xpose.msra.mxu0 0
      %1962 = vmatprep.subr.bf16.mxu0 0
      %1963 = vmatpush1.bf16.xpose.msra.mxu0 0
      %1964 = vmatprep.subr.bf16.mxu0 0
      %1965 = vmatpush1.bf16.xpose.msra.mxu0 0
      %1966 = vmatprep.mubr.bf16.mxu0 0
      %1967 = vmatmul.mubr.bf16.gmra.mrb[0].mxu0 %v1929
      %v1968 = vpop.f32.mrb[0].mxu0
      %v1969 = vadd.f32 %v1673, %v1968
      %v1970 = vpop.f32.mrb[0].mxu0
      %v1971 = vpop.f32.mrb[0].mxu0
      %v1972 = vadd.f32 %v1674, %v1971
      %v1973 = vpop.f32.mrb[0].mxu0
      %1974 = vdwg.mxu0
      %v1975 = vsel %vm1723, %v1969, -inf
      %1976 = vmax.xlane.f32.xlu0 %v1975
      %v1977 = vpop.xlane.xlu0 %1976
      %v1978 = vsel %vm1723, %v1972, -inf
      %1979 = vmax.xlane.f32.xlu0 %v1978
      %v1980 = vpop.xlane.xlu0 %1979
      %v1981 = vsub.f32 %v1969, %v1977
      %v1982 = vsub.f32 %v1972, %v1980
      %v1983 = vmul.f32 %v1981, 1.442695
      %v1984 = vpow.pop %v1983
      %v1985 = vmul.f32 %v1982, 1.442695
      %v1986 = vpow.pop %v1985
      %v1987 = vsel %vm1723, %v1984, 0.0
      %1988 = vadd.xlane.f32.xlu0 %v1987
      %v1989 = vpop.xlane.xlu0 %1988
      %v1990 = vsel %vm1723, %v1986, 0.0
      %1991 = vadd.xlane.f32.xlu0 %v1990
      %v1992 = vpop.xlane.xlu0 %1991
      %v1993 = vrcp.pop %v1989
      %v1994 = vrcp.pop %v1992
      %v1995 = vpack.c.bf16 %v1986, %v1984
      %1996 = vrot.lane.b32.xlu0 %v1672, 64
      %v1997 = vpop.permute.xlu0 %1996
      %v2000 = vsel %vm1723, %v1995, 0
      %2002 = vmatprep.subr.bf16.mxu0 0
      %2003 = vmatpush1.bf16.msra.mxu0 %v1997
      %2004 = vmatprep.subr.bf16.mxu0 0
      %2005 = vmatpush1.bf16.msra.mxu0 0
      %2006 = vmatprep.subr.bf16.mxu0 0
      %2007 = vmatpush1.bf16.msra.mxu0 0
      %2008 = vmatprep.subr.bf16.mxu0 0
      %2009 = vmatpush1.bf16.msra.mxu0 0
      %2010 = vmatprep.subr.bf16.mxu0 0
      %2011 = vmatpush1.bf16.msra.mxu0 0
      %2012 = vmatprep.subr.bf16.mxu0 0
      %2013 = vmatpush1.bf16.msra.mxu0 0
      %2014 = vmatprep.subr.bf16.mxu0 0
      %2015 = vmatpush1.bf16.msra.mxu0 0
      %2016 = vmatprep.subr.bf16.mxu0 0
      %2017 = vmatpush1.bf16.msra.mxu0 0
      %2018 = vmatprep.subr.bf16.mxu0 0
      %2019 = vmatpush1.bf16.msra.mxu0 0
      %2020 = vmatprep.subr.bf16.mxu0 0
      %2021 = vmatpush1.bf16.msra.mxu0 0
      %2022 = vmatprep.subr.bf16.mxu0 0
      %2023 = vmatpush1.bf16.msra.mxu0 0
      %2024 = vmatprep.subr.bf16.mxu0 0
      %2025 = vmatpush1.bf16.msra.mxu0 0
      %2026 = vmatprep.subr.bf16.mxu0 0
      %2027 = vmatpush1.bf16.msra.mxu0 0
      %2028 = vmatprep.subr.bf16.mxu0 0
      %2029 = vmatpush1.bf16.msra.mxu0 0
      %2030 = vmatprep.subr.bf16.mxu0 0
      %2031 = vmatpush1.bf16.msra.mxu0 0
      %2032 = vmatprep.subr.bf16.mxu0 0
      %2033 = vmatpush1.bf16.msra.mxu0 0
      %2034 = vmatprep.mubr.bf16.mxu0 0
      %2035 = vmatmul.mubr.bf16.gmra.mrb[0].mxu0 %v2000
      %v2036 = vpop.f32.mrb[0].mxu0
      %v2037 = vadd.f32 0.0, %v2036
      %v2038 = vpop.f32.mrb[0].mxu0
      %v2039 = vpop.f32.mrb[0].mxu0
      %v2040 = vadd.f32 0.0, %v2039
      %v2041 = vpop.f32.mrb[0].mxu0
      %2042 = vdwg.mxu0
      %v2043 = vmul.f32 %v2037, %v1993
      %v2044 = vmul.f32 %v2040, %v1994
      %v2045 = vpack.c.bf16 %v2044, %v2043
      %2047 = vrot.lane.b32.xlu0 %v2045, 64
      %v2048 = vpop.permute.xlu0 %2047
      %vm2050 = vcmask 785920
      %2051 = vst.msk [vmem:[#allocation3] sm:$0xff] %vm2050, %v2048
      %2052 = vrot.lane.b32.xlu0 %v1670, 32
      %v2053 = vpop.permute.xlu0 %2052
      %2054 = vrot.lane.b32.xlu0 %v1671, 32
      %v2055 = vpop.permute.xlu0 %2054
      %v2057 = vsel %vm1675, %v2053, 0
      %v2060 = vsel %vm1675, %v2055, 0
      %2062 = vmatprep.subr.bf16.mxu0 0
      %2063 = vmatpush1.bf16.xpose.msra.mxu0 %v2060
      %2064 = vmatprep.subr.bf16.mxu0 0
      %2065 = vmatpush1.bf16.xpose.msra.mxu0 0
      %2066 = vmatprep.subr.bf16.mxu0 0
      %2067 = vmatpush1.bf16.xpose.msra.mxu0 0
      %2068 = vmatprep.subr.bf16.mxu0 0
      %2069 = vmatpush1.bf16.xpose.msra.mxu0 0
      %2070 = vmatprep.subr.bf16.mxu0 0
      %2071 = vmatpush1.bf16.xpose.msra.mxu0 0
      %2072 = vmatprep.subr.bf16.mxu0 0
      %2073 = vmatpush1.bf16.xpose.msra.mxu0 0
      %2074 = vmatprep.subr.bf16.mxu0 0
      %2075 = vmatpush1.bf16.xpose.msra.mxu0 0
      %2076 = vmatprep.subr.bf16.mxu0 0
      %2077 = vmatpush1.bf16.xpose.msra.mxu0 0
      %2078 = vmatprep.subr.bf16.mxu0 0
      %2079 = vmatpush1.bf16.xpose.msra.mxu0 0
      %2080 = vmatprep.subr.bf16.mxu0 0
      %2081 = vmatpush1.bf16.xpose.msra.mxu0 0
      %2082 = vmatprep.subr.bf16.mxu0 0
      %2083 = vmatpush1.bf16.xpose.msra.mxu0 0
      %2084 = vmatprep.subr.bf16.mxu0 0
      %2085 = vmatpush1.bf16.xpose.msra.mxu0 0
      %2086 = vmatprep.subr.bf16.mxu0 0
      %2087 = vmatpush1.bf16.xpose.msra.mxu0 0
      %2088 = vmatprep.subr.bf16.mxu0 0
      %2089 = vmatpush1.bf16.xpose.msra.mxu0 0
      %2090 = vmatprep.subr.bf16.mxu0 0
      %2091 = vmatpush1.bf16.xpose.msra.mxu0 0
      %2092 = vmatprep.subr.bf16.mxu0 0
      %2093 = vmatpush1.bf16.xpose.msra.mxu0 0
      %2094 = vmatprep.mubr.bf16.mxu0 0
      %2095 = vmatmul.mubr.bf16.gmra.mrb[0].mxu0 %v2057
      %v2096 = vpop.f32.mrb[0].mxu0
      %v2097 = vadd.f32 %v1673, %v2096
      %v2098 = vpop.f32.mrb[0].mxu0
      %v2099 = vpop.f32.mrb[0].mxu0
      %v2100 = vadd.f32 %v1674, %v2099
      %v2101 = vpop.f32.mrb[0].mxu0
      %2102 = vdwg.mxu0
      %v2103 = vsel %vm1723, %v2097, -inf
      %2104 = vmax.xlane.f32.xlu0 %v2103
      %v2105 = vpop.xlane.xlu0 %2104
      %v2106 = vsel %vm1723, %v2100, -inf
      %2107 = vmax.xlane.f32.xlu0 %v2106
      %v2108 = vpop.xlane.xlu0 %2107
      %v2109 = vsub.f32 %v2097, %v2105
      %v2110 = vsub.f32 %v2100, %v2108
      %v2111 = vmul.f32 %v2109, 1.442695
      %v2112 = vpow.pop %v2111
      %v2113 = vmul.f32 %v2110, 1.442695
      %v2114 = vpow.pop %v2113
      %v2115 = vsel %vm1723, %v2112, 0.0
      %2116 = vadd.xlane.f32.xlu0 %v2115
      %v2117 = vpop.xlane.xlu0 %2116
      %v2118 = vsel %vm1723, %v2114, 0.0
      %2119 = vadd.xlane.f32.xlu0 %v2118
      %v2120 = vpop.xlane.xlu0 %2119
      %v2121 = vrcp.pop %v2117
      %v2122 = vrcp.pop %v2120
      %v2123 = vpack.c.bf16 %v2114, %v2112
      %2124 = vrot.lane.b32.xlu0 %v1672, 32
      %v2125 = vpop.permute.xlu0 %2124
      %v2128 = vsel %vm1723, %v2123, 0
      %2130 = vmatprep.subr.bf16.mxu0 0
      %2131 = vmatpush1.bf16.msra.mxu0 %v2125
      %2132 = vmatprep.subr.bf16.mxu0 0
      %2133 = vmatpush1.bf16.msra.mxu0 0
      %2134 = vmatprep.subr.bf16.mxu0 0
      %2135 = vmatpush1.bf16.msra.mxu0 0
      %2136 = vmatprep.subr.bf16.mxu0 0
      %2137 = vmatpush1.bf16.msra.mxu0 0
      %2138 = vmatprep.subr.bf16.mxu0 0
      %2139 = vmatpush1.bf16.msra.mxu0 0
      %2140 = vmatprep.subr.bf16.mxu0 0
      %2141 = vmatpush1.bf16.msra.mxu0 0
      %2142 = vmatprep.subr.bf16.mxu0 0
      %2143 = vmatpush1.bf16.msra.mxu0 0
      %2144 = vmatprep.subr.bf16.mxu0 0
      %2145 = vmatpush1.bf16.msra.mxu0 0
      %2146 = vmatprep.subr.bf16.mxu0 0
      %2147 = vmatpush1.bf16.msra.mxu0 0
      %2148 = vmatprep.subr.bf16.mxu0 0
      %2149 = vmatpush1.bf16.msra.mxu0 0
      %2150 = vmatprep.subr.bf16.mxu0 0
      %2151 = vmatpush1.bf16.msra.mxu0 0
      %2152 = vmatprep.subr.bf16.mxu0 0
      %2153 = vmatpush1.bf16.msra.mxu0 0
      %2154 = vmatprep.subr.bf16.mxu0 0
      %2155 = vmatpush1.bf16.msra.mxu0 0
      %2156 = vmatprep.subr.bf16.mxu0 0
      %2157 = vmatpush1.bf16.msra.mxu0 0
      %2158 = vmatprep.subr.bf16.mxu0 0
      %2159 = vmatpush1.bf16.msra.mxu0 0
      %2160 = vmatprep.subr.bf16.mxu0 0
      %2161 = vmatpush1.bf16.msra.mxu0 0
      %2162 = vmatprep.mubr.bf16.mxu0 0
      %2163 = vmatmul.mubr.bf16.gmra.mrb[0].mxu0 %v2128
      %v2164 = vpop.f32.mrb[0].mxu0
      %v2165 = vadd.f32 0.0, %v2164
      %v2166 = vpop.f32.mrb[0].mxu0
      %v2167 = vpop.f32.mrb[0].mxu0
      %v2168 = vadd.f32 0.0, %v2167
      %v2169 = vpop.f32.mrb[0].mxu0
      %2170 = vdwg.mxu0
      %v2171 = vmul.f32 %v2165, %v2121
      %v2172 = vmul.f32 %v2168, %v2122
      %v2173 = vpack.c.bf16 %v2172, %v2171
      %2175 = vrot.lane.b32.xlu0 %v2173, 96
      %v2176 = vpop.permute.xlu0 %2175
      %vm2178 = vcmask 1048320
      %2179 = vst.msk [vmem:[#allocation3] sm:$0xff] %vm2178, %v2176
      %v2180 = vld [vmem:[#allocation3] sm:$0xff]
      %v2181 = vld [vmem:[%s808] sm:$0xf]
      %v2182 = vld [vmem:[%s808 + $0x4] sm:$0xf]
      %v2183 = vld [vmem:[%s808 + $0x8] sm:$0xf]
      %v2184 = vld [vmem:[%s808 + $0xc] sm:$0xf]
      %v2185 = vld [vmem:[%s808 + $0x10] sm:$0xf]
      %v2186 = vld [vmem:[%s808 + $0x14] sm:$0xf]
      %v2187 = vld [vmem:[%s808 + $0x18] sm:$0xf]
      %v2188 = vld [vmem:[%s808 + $0x1c] sm:$0xf]
      %v2189 = vld [vmem:[%s808 + $0x20] sm:$0xf]
      %v2190 = vld [vmem:[%s808 + $0x24] sm:$0xf]
      %v2191 = vld [vmem:[%s808 + $0x28] sm:$0xf]
      %v2192 = vld [vmem:[%s808 + $0x2c] sm:$0xf]
      %v2193 = vld [vmem:[%s808 + $0x30] sm:$0xf]
      %v2194 = vld [vmem:[%s808 + $0x34] sm:$0xf]
      %v2195 = vld [vmem:[%s808 + $0x38] sm:$0xf]
      %v2196 = vld [vmem:[%s808 + $0x3c] sm:$0xf]
      %v2213 = vunpack.c.l.b16 %v2181
      %v2214 = vunpack.c.l.b16 %v2182
      %v2215 = vunpack.c.l.b16 %v2183
      %v2216 = vunpack.c.l.b16 %v2184
      %v2217 = vunpack.c.l.b16 %v2185
      %v2218 = vunpack.c.l.b16 %v2186
      %v2219 = vunpack.c.l.b16 %v2187
      %v2220 = vunpack.c.l.b16 %v2188
      %v2221 = vunpack.c.l.b16 %v2189
      %v2222 = vunpack.c.l.b16 %v2190
      %v2223 = vunpack.c.l.b16 %v2191
      %v2224 = vunpack.c.l.b16 %v2192
      %v2225 = vunpack.c.l.b16 %v2193
      %v2226 = vunpack.c.l.b16 %v2194
      %v2227 = vunpack.c.l.b16 %v2195
      %v2228 = vunpack.c.l.b16 %v2196
      %v2229 = vpack.c.b16 %v2214, %v2213
      %v2230 = vpack.c.b16 %v2216, %v2215
      %v2231 = vpack.c.b16 %v2218, %v2217
      %v2232 = vpack.c.b16 %v2220, %v2219
      %v2233 = vpack.c.b16 %v2222, %v2221
      %v2234 = vpack.c.b16 %v2224, %v2223
      %v2235 = vpack.c.b16 %v2226, %v2225
      %v2236 = vpack.c.b16 %v2228, %v2227
      %2245 = vmatprep.subr.bf16.mxu0 0
      %2246 = vmatpush1.bf16.msra.mxu0 %v2229
      %2247 = vmatprep.subr.bf16.mxu0 0
      %2248 = vmatpush1.bf16.msra.mxu0 %v2230
      %2249 = vmatprep.subr.bf16.mxu0 0
      %2250 = vmatpush1.bf16.msra.mxu0 %v2231
      %2251 = vmatprep.subr.bf16.mxu0 0
      %2252 = vmatpush1.bf16.msra.mxu0 %v2232
      %2253 = vmatprep.subr.bf16.mxu0 0
      %2254 = vmatpush1.bf16.msra.mxu0 %v2233
      %2255 = vmatprep.subr.bf16.mxu0 0
      %2256 = vmatpush1.bf16.msra.mxu0 %v2234
      %2257 = vmatprep.subr.bf16.mxu0 0
      %2258 = vmatpush1.bf16.msra.mxu0 %v2235
      %2259 = vmatprep.subr.bf16.mxu0 0
      %2260 = vmatpush1.bf16.msra.mxu0 %v2236
      %2261 = vmatprep.subr.bf16.mxu0 0
      %2262 = vmatpush1.bf16.msra.mxu0 0
      %2263 = vmatprep.subr.bf16.mxu0 0
      %2264 = vmatpush1.bf16.msra.mxu0 0
      %2265 = vmatprep.subr.bf16.mxu0 0
      %2266 = vmatpush1.bf16.msra.mxu0 0
      %2267 = vmatprep.subr.bf16.mxu0 0
      %2268 = vmatpush1.bf16.msra.mxu0 0
      %2269 = vmatprep.subr.bf16.mxu0 0
      %2270 = vmatpush1.bf16.msra.mxu0 0
      %2271 = vmatprep.subr.bf16.mxu0 0
      %2272 = vmatpush1.bf16.msra.mxu0 0
      %2273 = vmatprep.subr.bf16.mxu0 0
      %2274 = vmatpush1.bf16.msra.mxu0 0
      %2275 = vmatprep.subr.bf16.mxu0 0
      %2276 = vmatpush1.bf16.msra.mxu0 0
      %2277 = vmatprep.mubr.bf16.mxu0 0
      %2278 = vmatmul.mubr.bf16.gmra.mrb[0].mxu0 %v2180
      %v2279 = vpop.f32.mrb[0].mxu0
      %v2280 = vadd.f32 0.0, %v2279
      %v2281 = vpop.f32.mrb[0].mxu0
      %v2282 = vpop.f32.mrb[0].mxu0
      %v2283 = vadd.f32 0.0, %v2282
      %v2284 = vpop.f32.mrb[0].mxu0
      %2285 = vdwg.mxu0
      %v2286 = vadd.f32 %v1365, %v2280
      %v2287 = vadd.f32 %v1366, %v2283
      %v2288 = vld [vmem:[%s811] sm:$0x1]
      %v2290 = vlaneseq
      %v2291 = vshrl.u32 %v2290, 7
      %v2292 = vsub.s32 0, %v2291
      %v2293 = vrot.slane %v2288, %v2292
      %v2295 = vadd.f32 %v2286, %v2293
      %v2296 = vadd.f32 %v2287, %v2293
      %v2297 = vld [vmem:[%s814] sm:$0x1]
      %v2298 = vld [vmem:[%s817] sm:$0x1]
      %2299 = vadd.xlane.f32.xlu0 %v2295
      %v2300 = vpop.xlane.xlu0 %2299
      %2301 = vadd.xlane.f32.xlu0 %v2296
      %v2302 = vpop.xlane.xlu0 %2301
      %v2303 = vmul.f32 %v2300, %v1373
      %v2304 = vmul.f32 %v2302, %v1373
      %v2305 = vsub.f32 %v2295, %v2303
      %v2306 = vsub.f32 %v2296, %v2304
      %v2307 = vmul.f32 %v2305, %v2305
      %v2308 = vmul.f32 %v2306, %v2306
      %2309 = vadd.xlane.f32.xlu0 %v2307
      %v2310 = vpop.xlane.xlu0 %2309
      %2311 = vadd.xlane.f32.xlu0 %v2308
      %v2312 = vpop.xlane.xlu0 %2311
      %v2313 = vmul.f32 %v2310, %v1373
      %v2314 = vmul.f32 %v2312, %v1373
      %v2315 = vadd.f32 %v2313, 1e-05
      %v2316 = vadd.f32 %v2314, 1e-05
      %v2317 = vrsqrt.pop %v2315
      %v2318 = vrsqrt.pop %v2316
      %v2319 = vmul.f32 %v2305, %v2317
      %v2320 = vmul.f32 %v2306, %v2318
      %v2322 = vlaneseq
      %v2323 = vshrl.u32 %v2322, 7
      %v2324 = vsub.s32 0, %v2323
      %v2325 = vrot.slane %v2297, %v2324
      %v2327 = vmul.f32 %v2319, %v2325
      %v2328 = vmul.f32 %v2320, %v2325
      %v2330 = vlaneseq
      %v2331 = vshrl.u32 %v2330, 7
      %v2332 = vsub.s32 0, %v2331
      %v2333 = vrot.slane %v2298, %v2332
      %v2335 = vadd.f32 %v2327, %v2333
      %v2336 = vadd.f32 %v2328, %v2333
      %v2337 = vpack.c.bf16 %v2336, %v2335
      %v2338 = vld [vmem:[%s822] sm:$0xff]
      %v2339 = vld [vmem:[%s822 + $0x8] sm:$0xff]
      %v2340 = vld [vmem:[%s822 + $0x10] sm:$0xff]
      %v2341 = vld [vmem:[%s822 + $0x18] sm:$0xff]
      %v2342 = vld [vmem:[%s822 + $0x20] sm:$0xff]
      %v2343 = vld [vmem:[%s822 + $0x28] sm:$0xff]
      %v2344 = vld [vmem:[%s822 + $0x30] sm:$0xff]
      %v2345 = vld [vmem:[%s822 + $0x38] sm:$0xff]
      %v2346 = vld [vmem:[%s822 + $0x40] sm:$0xff]
      %v2347 = vld [vmem:[%s822 + $0x48] sm:$0xff]
      %v2348 = vld [vmem:[%s822 + $0x50] sm:$0xff]
      %v2349 = vld [vmem:[%s822 + $0x58] sm:$0xff]
      %v2350 = vld [vmem:[%s822 + $0x60] sm:$0xff]
      %v2351 = vld [vmem:[%s822 + $0x68] sm:$0xff]
      %v2352 = vld [vmem:[%s822 + $0x70] sm:$0xff]
      %v2353 = vld [vmem:[%s822 + $0x78] sm:$0xff]
      %v2354 = vld [vmem:[%s822 + $0x80] sm:$0xff]
      %v2355 = vld [vmem:[%s822 + $0x88] sm:$0xff]
      %v2356 = vld [vmem:[%s822 + $0x90] sm:$0xff]
      %v2357 = vld [vmem:[%s822 + $0x98] sm:$0xff]
      %v2358 = vld [vmem:[%s822 + $0xa0] sm:$0xff]
      %v2359 = vld [vmem:[%s822 + $0xa8] sm:$0xff]
      %v2360 = vld [vmem:[%s822 + $0xb0] sm:$0xff]
      %v2361 = vld [vmem:[%s822 + $0xb8] sm:$0xff]
      %v2362 = vld [vmem:[%s822 + $0xc0] sm:$0xff]
      %v2363 = vld [vmem:[%s822 + $0xc8] sm:$0xff]
      %v2364 = vld [vmem:[%s822 + $0xd0] sm:$0xff]
      %v2365 = vld [vmem:[%s822 + $0xd8] sm:$0xff]
      %v2366 = vld [vmem:[%s822 + $0xe0] sm:$0xff]
      %v2367 = vld [vmem:[%s822 + $0xe8] sm:$0xff]
      %v2368 = vld [vmem:[%s822 + $0xf0] sm:$0xff]
      %v2369 = vld [vmem:[%s822 + $0xf8] sm:$0xff]
      %v2370 = vld [vmem:[%s826] sm:$0xf]
      %v2372 = vlaneseq
      %v2373 = vshrl.u32 %v2372, 7
      %v2374 = vsub.s32 0, %v2373
      %v2375 = vrot.slane %v2370, %v2374
      %v2376 = vlaneseq
      %v2377 = vshrl.u32 %v2376, 7
      %v2378 = vsub.s32 1, %v2377
      %v2379 = vrot.slane %v2370, %v2378
      %v2380 = vlaneseq
      %v2381 = vshrl.u32 %v2380, 7
      %v2382 = vsub.s32 2, %v2381
      %v2383 = vrot.slane %v2370, %v2382
      %v2384 = vlaneseq
      %v2385 = vshrl.u32 %v2384, 7
      %v2386 = vsub.s32 3, %v2385
      %v2387 = vrot.slane %v2370, %v2386
      %v2424 = vunpack.c.l.b16 %v2338
      %v2425 = vunpack.c.h.b16 %v2338
      %v2426 = vunpack.c.l.b16 %v2339
      %v2427 = vunpack.c.h.b16 %v2339
      %v2428 = vunpack.c.l.b16 %v2340
      %v2429 = vunpack.c.h.b16 %v2340
      %v2430 = vunpack.c.l.b16 %v2341
      %v2431 = vunpack.c.h.b16 %v2341
      %v2432 = vunpack.c.l.b16 %v2342
      %v2433 = vunpack.c.h.b16 %v2342
      %v2434 = vunpack.c.l.b16 %v2343
      %v2435 = vunpack.c.h.b16 %v2343
      %v2436 = vunpack.c.l.b16 %v2344
      %v2437 = vunpack.c.h.b16 %v2344
      %v2438 = vunpack.c.l.b16 %v2345
      %v2439 = vunpack.c.h.b16 %v2345
      %v2440 = vunpack.c.l.b16 %v2346
      %v2441 = vunpack.c.h.b16 %v2346
      %v2442 = vunpack.c.l.b16 %v2347
      %v2443 = vunpack.c.h.b16 %v2347
      %v2444 = vunpack.c.l.b16 %v2348
      %v2445 = vunpack.c.h.b16 %v2348
      %v2446 = vunpack.c.l.b16 %v2349
      %v2447 = vunpack.c.h.b16 %v2349
      %v2448 = vunpack.c.l.b16 %v2350
      %v2449 = vunpack.c.h.b16 %v2350
      %v2450 = vunpack.c.l.b16 %v2351
      %v2451 = vunpack.c.h.b16 %v2351
      %v2452 = vunpack.c.l.b16 %v2352
      %v2453 = vunpack.c.h.b16 %v2352
      %v2454 = vunpack.c.l.b16 %v2353
      %v2455 = vunpack.c.h.b16 %v2353
      %v2456 = vunpack.c.l.b16 %v2354
      %v2457 = vunpack.c.h.b16 %v2354
      %v2458 = vunpack.c.l.b16 %v2355
      %v2459 = vunpack.c.h.b16 %v2355
      %v2460 = vunpack.c.l.b16 %v2356
      %v2461 = vunpack.c.h.b16 %v2356
      %v2462 = vunpack.c.l.b16 %v2357
      %v2463 = vunpack.c.h.b16 %v2357
      %v2464 = vunpack.c.l.b16 %v2358
      %v2465 = vunpack.c.h.b16 %v2358
      %v2466 = vunpack.c.l.b16 %v2359
      %v2467 = vunpack.c.h.b16 %v2359
      %v2468 = vunpack.c.l.b16 %v2360
      %v2469 = vunpack.c.h.b16 %v2360
      %v2470 = vunpack.c.l.b16 %v2361
      %v2471 = vunpack.c.h.b16 %v2361
      %v2472 = vunpack.c.l.b16 %v2362
      %v2473 = vunpack.c.h.b16 %v2362
      %v2474 = vunpack.c.l.b16 %v2363
      %v2475 = vunpack.c.h.b16 %v2363
      %v2476 = vunpack.c.l.b16 %v2364
      %v2477 = vunpack.c.h.b16 %v2364
      %v2478 = vunpack.c.l.b16 %v2365
      %v2479 = vunpack.c.h.b16 %v2365
      %v2480 = vunpack.c.l.b16 %v2366
      %v2481 = vunpack.c.h.b16 %v2366
      %v2482 = vunpack.c.l.b16 %v2367
      %v2483 = vunpack.c.h.b16 %v2367
      %v2484 = vunpack.c.l.b16 %v2368
      %v2485 = vunpack.c.h.b16 %v2368
      %v2486 = vunpack.c.l.b16 %v2369
      %v2487 = vunpack.c.h.b16 %v2369
      %v2488 = vpack.c.b16 %v2428, %v2424
      %v2489 = vpack.c.b16 %v2429, %v2425
      %v2490 = vpack.c.b16 %v2430, %v2426
      %v2491 = vpack.c.b16 %v2431, %v2427
      %v2492 = vpack.c.b16 %v2436, %v2432
      %v2493 = vpack.c.b16 %v2437, %v2433
      %v2494 = vpack.c.b16 %v2438, %v2434
      %v2495 = vpack.c.b16 %v2439, %v2435
      %v2496 = vpack.c.b16 %v2444, %v2440
      %v2497 = vpack.c.b16 %v2445, %v2441
      %v2498 = vpack.c.b16 %v2446, %v2442
      %v2499 = vpack.c.b16 %v2447, %v2443
      %v2500 = vpack.c.b16 %v2452, %v2448
      %v2501 = vpack.c.b16 %v2453, %v2449
      %v2502 = vpack.c.b16 %v2454, %v2450
      %v2503 = vpack.c.b16 %v2455, %v2451
      %v2504 = vpack.c.b16 %v2460, %v2456
      %v2505 = vpack.c.b16 %v2461, %v2457
      %v2506 = vpack.c.b16 %v2462, %v2458
      %v2507 = vpack.c.b16 %v2463, %v2459
      %v2508 = vpack.c.b16 %v2468, %v2464
      %v2509 = vpack.c.b16 %v2469, %v2465
      %v2510 = vpack.c.b16 %v2470, %v2466
      %v2511 = vpack.c.b16 %v2471, %v2467
      %v2512 = vpack.c.b16 %v2476, %v2472
      %v2513 = vpack.c.b16 %v2477, %v2473
      %v2514 = vpack.c.b16 %v2478, %v2474
      %v2515 = vpack.c.b16 %v2479, %v2475
      %v2516 = vpack.c.b16 %v2484, %v2480
      %v2517 = vpack.c.b16 %v2485, %v2481
      %v2518 = vpack.c.b16 %v2486, %v2482
      %v2519 = vpack.c.b16 %v2487, %v2483
      %2552 = vmatprep.subr.bf16.mxu0 %v2489
      %2553 = vmatpush1.bf16.msra.mxu0 %v2488
      %2554 = vmatprep.subr.bf16.mxu0 %v2493
      %2555 = vmatpush1.bf16.msra.mxu0 %v2492
      %2556 = vmatprep.subr.bf16.mxu0 %v2497
      %2557 = vmatpush1.bf16.msra.mxu0 %v2496
      %2558 = vmatprep.subr.bf16.mxu0 %v2501
      %2559 = vmatpush1.bf16.msra.mxu0 %v2500
      %2560 = vmatprep.subr.bf16.mxu0 %v2505
      %2561 = vmatpush1.bf16.msra.mxu0 %v2504
      %2562 = vmatprep.subr.bf16.mxu0 %v2509
      %2563 = vmatpush1.bf16.msra.mxu0 %v2508
      %2564 = vmatprep.subr.bf16.mxu0 %v2513
      %2565 = vmatpush1.bf16.msra.mxu0 %v2512
      %2566 = vmatprep.subr.bf16.mxu0 %v2517
      %2567 = vmatpush1.bf16.msra.mxu0 %v2516
      %2568 = vmatprep.subr.bf16.mxu0 0
      %2569 = vmatpush1.bf16.msra.mxu0 0
      %2570 = vmatprep.subr.bf16.mxu0 0
      %2571 = vmatpush1.bf16.msra.mxu0 0
      %2572 = vmatprep.subr.bf16.mxu0 0
      %2573 = vmatpush1.bf16.msra.mxu0 0
      %2574 = vmatprep.subr.bf16.mxu0 0
      %2575 = vmatpush1.bf16.msra.mxu0 0
      %2576 = vmatprep.subr.bf16.mxu0 0
      %2577 = vmatpush1.bf16.msra.mxu0 0
      %2578 = vmatprep.subr.bf16.mxu0 0
      %2579 = vmatpush1.bf16.msra.mxu0 0
      %2580 = vmatprep.subr.bf16.mxu0 0
      %2581 = vmatpush1.bf16.msra.mxu0 0
      %2582 = vmatprep.subr.bf16.mxu0 0
      %2583 = vmatpush1.bf16.msra.mxu0 0
      %2584 = vmatprep.mubr.bf16.mxu0 0
      %2585 = vmatmul.mubr.bf16.gmra.mrb[0].mxu0 %v2337
      %v2586 = vpop.f32.mrb[0].mxu0
      %v2587 = vadd.f32 %v2375, %v2586
      %v2588 = vpop.f32.mrb[0].mxu0
      %v2589 = vadd.f32 %v2379, %v2588
      %v2590 = vpop.f32.mrb[0].mxu0
      %v2591 = vadd.f32 %v2375, %v2590
      %v2592 = vpop.f32.mrb[0].mxu0
      %v2593 = vadd.f32 %v2379, %v2592
      %2594 = vdwg.mxu0
      %2595 = vmatprep.subr.bf16.mxu0 %v2491
      %2596 = vmatpush1.bf16.msra.mxu0 %v2490
      %2597 = vmatprep.subr.bf16.mxu0 %v2495
      %2598 = vmatpush1.bf16.msra.mxu0 %v2494
      %2599 = vmatprep.subr.bf16.mxu0 %v2499
      %2600 = vmatpush1.bf16.msra.mxu0 %v2498
      %2601 = vmatprep.subr.bf16.mxu0 %v2503
      %2602 = vmatpush1.bf16.msra.mxu0 %v2502
      %2603 = vmatprep.subr.bf16.mxu0 %v2507
      %2604 = vmatpush1.bf16.msra.mxu0 %v2506
      %2605 = vmatprep.subr.bf16.mxu0 %v2511
      %2606 = vmatpush1.bf16.msra.mxu0 %v2510
      %2607 = vmatprep.subr.bf16.mxu0 %v2515
      %2608 = vmatpush1.bf16.msra.mxu0 %v2514
      %2609 = vmatprep.subr.bf16.mxu0 %v2519
      %2610 = vmatpush1.bf16.msra.mxu0 %v2518
      %2611 = vmatprep.subr.bf16.mxu0 0
      %2612 = vmatpush1.bf16.msra.mxu0 0
      %2613 = vmatprep.subr.bf16.mxu0 0
      %2614 = vmatpush1.bf16.msra.mxu0 0
      %2615 = vmatprep.subr.bf16.mxu0 0
      %2616 = vmatpush1.bf16.msra.mxu0 0
      %2617 = vmatprep.subr.bf16.mxu0 0
      %2618 = vmatpush1.bf16.msra.mxu0 0
      %2619 = vmatprep.subr.bf16.mxu0 0
      %2620 = vmatpush1.bf16.msra.mxu0 0
      %2621 = vmatprep.subr.bf16.mxu0 0
      %2622 = vmatpush1.bf16.msra.mxu0 0
      %2623 = vmatprep.subr.bf16.mxu0 0
      %2624 = vmatpush1.bf16.msra.mxu0 0
      %2625 = vmatprep.subr.bf16.mxu0 0
      %2626 = vmatpush1.bf16.msra.mxu0 0
      %2627 = vmatprep.mubr.bf16.mxu0 0
      %2628 = vmatmul.mubr.bf16.gmra.mrb[0].mxu0 %v2337
      %v2629 = vpop.f32.mrb[0].mxu0
      %v2630 = vadd.f32 %v2383, %v2629
      %v2631 = vpop.f32.mrb[0].mxu0
      %v2632 = vadd.f32 %v2387, %v2631
      %v2633 = vpop.f32.mrb[0].mxu0
      %v2634 = vadd.f32 %v2383, %v2633
      %v2635 = vpop.f32.mrb[0].mxu0
      %v2636 = vadd.f32 %v2387, %v2635
      %2637 = vdwg.mxu0
      %v2638 = vmul.f32 %v2587, 1.702
      %v2639 = vmul.f32 %v2589, 1.702
      %v2640 = vmul.f32 %v2630, 1.702
      %v2641 = vmul.f32 %v2632, 1.702
      %v2642 = vmul.f32 %v2591, 1.702
      %v2643 = vmul.f32 %v2593, 1.702
      %v2644 = vmul.f32 %v2634, 1.702
      %v2645 = vmul.f32 %v2636, 1.702
      %v2646 = vxor.u32 %v2638, 2147483648
      %v2647 = vxor.u32 %v2639, 2147483648
      %v2648 = vxor.u32 %v2640, 2147483648
      %v2649 = vxor.u32 %v2641, 2147483648
      %v2650 = vxor.u32 %v2642, 2147483648
      %v2651 = vxor.u32 %v2643, 2147483648
      %v2652 = vxor.u32 %v2644, 2147483648
      %v2653 = vxor.u32 %v2645, 2147483648
      %v2654 = vmul.f32 %v2646, 1.442695
      %v2655 = vpow.pop %v2654
      %v2656 = vmul.f32 %v2647, 1.442695
      %v2657 = vpow.pop %v2656
      %v2658 = vmul.f32 %v2648, 1.442695
      %v2659 = vpow.pop %v2658
      %v2660 = vmul.f32 %v2649, 1.442695
      %v2661 = vpow.pop %v2660
      %v2662 = vmul.f32 %v2650, 1.442695
      %v2663 = vpow.pop %v2662
      %v2664 = vmul.f32 %v2651, 1.442695
      %v2665 = vpow.pop %v2664
      %v2666 = vmul.f32 %v2652, 1.442695
      %v2667 = vpow.pop %v2666
      %v2668 = vmul.f32 %v2653, 1.442695
      %v2669 = vpow.pop %v2668
      %v2670 = vadd.f32 %v2655, 1.0
      %v2671 = vadd.f32 %v2657, 1.0
      %v2672 = vadd.f32 %v2659, 1.0
      %v2673 = vadd.f32 %v2661, 1.0
      %v2674 = vadd.f32 %v2663, 1.0
      %v2675 = vadd.f32 %v2665, 1.0
      %v2676 = vadd.f32 %v2667, 1.0
      %v2677 = vadd.f32 %v2669, 1.0
      %v2678 = vrcp.pop %v2670
      %v2679 = vmul.f32 1.0, %v2678
      %v2680 = vrcp.pop %v2671
      %v2681 = vmul.f32 1.0, %v2680
      %v2682 = vrcp.pop %v2672
      %v2683 = vmul.f32 1.0, %v2682
      %v2684 = vrcp.pop %v2673
      %v2685 = vmul.f32 1.0, %v2684
      %v2686 = vrcp.pop %v2674
      %v2687 = vmul.f32 1.0, %v2686
      %v2688 = vrcp.pop %v2675
      %v2689 = vmul.f32 1.0, %v2688
      %v2690 = vrcp.pop %v2676
      %v2691 = vmul.f32 1.0, %v2690
      %v2692 = vrcp.pop %v2677
      %v2693 = vmul.f32 1.0, %v2692
      %v2694 = vmul.f32 %v2587, %v2679
      %v2695 = vmul.f32 %v2589, %v2681
      %v2696 = vmul.f32 %v2630, %v2683
      %v2697 = vmul.f32 %v2632, %v2685
      %v2698 = vmul.f32 %v2591, %v2687
      %v2699 = vmul.f32 %v2593, %v2689
      %v2700 = vmul.f32 %v2634, %v2691
      %v2701 = vmul.f32 %v2636, %v2693
      %v2702 = vpack.c.bf16 %v2698, %v2694
      %v2703 = vpack.c.bf16 %v2699, %v2695
      %v2704 = vpack.c.bf16 %v2700, %v2696
      %v2705 = vpack.c.bf16 %v2701, %v2697
      %v2706 = vld [vmem:[%s831] sm:$0xf]
      %v2707 = vld [vmem:[%s831 + $0x4] sm:$0xf]
      %v2708 = vld [vmem:[%s831 + $0x8] sm:$0xf]
      %v2709 = vld [vmem:[%s831 + $0xc] sm:$0xf]
      %v2710 = vld [vmem:[%s831 + $0x10] sm:$0xf]
      %v2711 = vld [vmem:[%s831 + $0x14] sm:$0xf]
      %v2712 = vld [vmem:[%s831 + $0x18] sm:$0xf]
      %v2713 = vld [vmem:[%s831 + $0x1c] sm:$0xf]
      %v2714 = vld [vmem:[%s831 + $0x20] sm:$0xf]
      %v2715 = vld [vmem:[%s831 + $0x24] sm:$0xf]
      %v2716 = vld [vmem:[%s831 + $0x28] sm:$0xf]
      %v2717 = vld [vmem:[%s831 + $0x2c] sm:$0xf]
      %v2718 = vld [vmem:[%s831 + $0x30] sm:$0xf]
      %v2719 = vld [vmem:[%s831 + $0x34] sm:$0xf]
      %v2720 = vld [vmem:[%s831 + $0x38] sm:$0xf]
      %v2721 = vld [vmem:[%s831 + $0x3c] sm:$0xf]
      %v2722 = vld [vmem:[%s831 + $0x40] sm:$0xf]
      %v2723 = vld [vmem:[%s831 + $0x44] sm:$0xf]
      %v2724 = vld [vmem:[%s831 + $0x48] sm:$0xf]
      %v2725 = vld [vmem:[%s831 + $0x4c] sm:$0xf]
      %v2726 = vld [vmem:[%s831 + $0x50] sm:$0xf]
      %v2727 = vld [vmem:[%s831 + $0x54] sm:$0xf]
      %v2728 = vld [vmem:[%s831 + $0x58] sm:$0xf]
      %v2729 = vld [vmem:[%s831 + $0x5c] sm:$0xf]
      %v2730 = vld [vmem:[%s831 + $0x60] sm:$0xf]
      %v2731 = vld [vmem:[%s831 + $0x64] sm:$0xf]
      %v2732 = vld [vmem:[%s831 + $0x68] sm:$0xf]
      %v2733 = vld [vmem:[%s831 + $0x6c] sm:$0xf]
      %v2734 = vld [vmem:[%s831 + $0x70] sm:$0xf]
      %v2735 = vld [vmem:[%s831 + $0x74] sm:$0xf]
      %v2736 = vld [vmem:[%s831 + $0x78] sm:$0xf]
      %v2737 = vld [vmem:[%s831 + $0x7c] sm:$0xf]
      %v2738 = vld [vmem:[%s831 + $0x80] sm:$0xf]
      %v2739 = vld [vmem:[%s831 + $0x84] sm:$0xf]
      %v2740 = vld [vmem:[%s831 + $0x88] sm:$0xf]
      %v2741 = vld [vmem:[%s831 + $0x8c] sm:$0xf]
      %v2742 = vld [vmem:[%s831 + $0x90] sm:$0xf]
      %v2743 = vld [vmem:[%s831 + $0x94] sm:$0xf]
      %v2744 = vld [vmem:[%s831 + $0x98] sm:$0xf]
      %v2745 = vld [vmem:[%s831 + $0x9c] sm:$0xf]
      %v2746 = vld [vmem:[%s831 + $0xa0] sm:$0xf]
      %v2747 = vld [vmem:[%s831 + $0xa4] sm:$0xf]
      %v2748 = vld [vmem:[%s831 + $0xa8] sm:$0xf]
      %v2749 = vld [vmem:[%s831 + $0xac] sm:$0xf]
      %v2750 = vld [vmem:[%s831 + $0xb0] sm:$0xf]
      %v2751 = vld [vmem:[%s831 + $0xb4] sm:$0xf]
      %v2752 = vld [vmem:[%s831 + $0xb8] sm:$0xf]
      %v2753 = vld [vmem:[%s831 + $0xbc] sm:$0xf]
      %v2754 = vld [vmem:[%s831 + $0xc0] sm:$0xf]
      %v2755 = vld [vmem:[%s831 + $0xc4] sm:$0xf]
      %v2756 = vld [vmem:[%s831 + $0xc8] sm:$0xf]
      %v2757 = vld [vmem:[%s831 + $0xcc] sm:$0xf]
      %v2758 = vld [vmem:[%s831 + $0xd0] sm:$0xf]
      %v2759 = vld [vmem:[%s831 + $0xd4] sm:$0xf]
      %v2760 = vld [vmem:[%s831 + $0xd8] sm:$0xf]
      %v2761 = vld [vmem:[%s831 + $0xdc] sm:$0xf]
      %v2762 = vld [vmem:[%s831 + $0xe0] sm:$0xf]
      %v2763 = vld [vmem:[%s831 + $0xe4] sm:$0xf]
      %v2764 = vld [vmem:[%s831 + $0xe8] sm:$0xf]
      %v2765 = vld [vmem:[%s831 + $0xec] sm:$0xf]
      %v2766 = vld [vmem:[%s831 + $0xf0] sm:$0xf]
      %v2767 = vld [vmem:[%s831 + $0xf4] sm:$0xf]
      %v2768 = vld [vmem:[%s831 + $0xf8] sm:$0xf]
      %v2769 = vld [vmem:[%s831 + $0xfc] sm:$0xf]
      %v2770 = vld [vmem:[%s834] sm:$0x1]
      %v2772 = vlaneseq
      %v2773 = vshrl.u32 %v2772, 7
      %v2774 = vsub.s32 0, %v2773
      %v2775 = vrot.slane %v2770, %v2774
      %v2841 = vunpack.c.l.b16 %v2706
      %v2842 = vunpack.c.l.b16 %v2707
      %v2843 = vunpack.c.l.b16 %v2708
      %v2844 = vunpack.c.l.b16 %v2709
      %v2845 = vunpack.c.l.b16 %v2710
      %v2846 = vunpack.c.l.b16 %v2711
      %v2847 = vunpack.c.l.b16 %v2712
      %v2848 = vunpack.c.l.b16 %v2713
      %v2849 = vunpack.c.l.b16 %v2714
      %v2850 = vunpack.c.l.b16 %v2715
      %v2851 = vunpack.c.l.b16 %v2716
      %v2852 = vunpack.c.l.b16 %v2717
      %v2853 = vunpack.c.l.b16 %v2718
      %v2854 = vunpack.c.l.b16 %v2719
      %v2855 = vunpack.c.l.b16 %v2720
      %v2856 = vunpack.c.l.b16 %v2721
      %v2857 = vunpack.c.l.b16 %v2722
      %v2858 = vunpack.c.l.b16 %v2723
      %v2859 = vunpack.c.l.b16 %v2724
      %v2860 = vunpack.c.l.b16 %v2725
      %v2861 = vunpack.c.l.b16 %v2726
      %v2862 = vunpack.c.l.b16 %v2727
      %v2863 = vunpack.c.l.b16 %v2728
      %v2864 = vunpack.c.l.b16 %v2729
      %v2865 = vunpack.c.l.b16 %v2730
      %v2866 = vunpack.c.l.b16 %v2731
      %v2867 = vunpack.c.l.b16 %v2732
      %v2868 = vunpack.c.l.b16 %v2733
      %v2869 = vunpack.c.l.b16 %v2734
      %v2870 = vunpack.c.l.b16 %v2735
      %v2871 = vunpack.c.l.b16 %v2736
      %v2872 = vunpack.c.l.b16 %v2737
      %v2873 = vunpack.c.l.b16 %v2738
      %v2874 = vunpack.c.l.b16 %v2739
      %v2875 = vunpack.c.l.b16 %v2740
      %v2876 = vunpack.c.l.b16 %v2741
      %v2877 = vunpack.c.l.b16 %v2742
      %v2878 = vunpack.c.l.b16 %v2743
      %v2879 = vunpack.c.l.b16 %v2744
      %v2880 = vunpack.c.l.b16 %v2745
      %v2881 = vunpack.c.l.b16 %v2746
      %v2882 = vunpack.c.l.b16 %v2747
      %v2883 = vunpack.c.l.b16 %v2748
      %v2884 = vunpack.c.l.b16 %v2749
      %v2885 = vunpack.c.l.b16 %v2750
      %v2886 = vunpack.c.l.b16 %v2751
      %v2887 = vunpack.c.l.b16 %v2752
      %v2888 = vunpack.c.l.b16 %v2753
      %v2889 = vunpack.c.l.b16 %v2754
      %v2890 = vunpack.c.l.b16 %v2755
      %v2891 = vunpack.c.l.b16 %v2756
      %v2892 = vunpack.c.l.b16 %v2757
      %v2893 = vunpack.c.l.b16 %v2758
      %v2894 = vunpack.c.l.b16 %v2759
      %v2895 = vunpack.c.l.b16 %v2760
      %v2896 = vunpack.c.l.b16 %v2761
      %v2897 = vunpack.c.l.b16 %v2762
      %v2898 = vunpack.c.l.b16 %v2763
      %v2899 = vunpack.c.l.b16 %v2764
      %v2900 = vunpack.c.l.b16 %v2765
      %v2901 = vunpack.c.l.b16 %v2766
      %v2902 = vunpack.c.l.b16 %v2767
      %v2903 = vunpack.c.l.b16 %v2768
      %v2904 = vunpack.c.l.b16 %v2769
      %v2905 = vpack.c.b16 %v2842, %v2841
      %v2906 = vpack.c.b16 %v2844, %v2843
      %v2907 = vpack.c.b16 %v2846, %v2845
      %v2908 = vpack.c.b16 %v2848, %v2847
      %v2909 = vpack.c.b16 %v2850, %v2849
      %v2910 = vpack.c.b16 %v2852, %v2851
      %v2911 = vpack.c.b16 %v2854, %v2853
      %v2912 = vpack.c.b16 %v2856, %v2855
      %v2913 = vpack.c.b16 %v2858, %v2857
      %v2914 = vpack.c.b16 %v2860, %v2859
      %v2915 = vpack.c.b16 %v2862, %v2861
      %v2916 = vpack.c.b16 %v2864, %v2863
      %v2917 = vpack.c.b16 %v2866, %v2865
      %v2918 = vpack.c.b16 %v2868, %v2867
      %v2919 = vpack.c.b16 %v2870, %v2869
      %v2920 = vpack.c.b16 %v2872, %v2871
      %v2921 = vpack.c.b16 %v2874, %v2873
      %v2922 = vpack.c.b16 %v2876, %v2875
      %v2923 = vpack.c.b16 %v2878, %v2877
      %v2924 = vpack.c.b16 %v2880, %v2879
      %v2925 = vpack.c.b16 %v2882, %v2881
      %v2926 = vpack.c.b16 %v2884, %v2883
      %v2927 = vpack.c.b16 %v2886, %v2885
      %v2928 = vpack.c.b16 %v2888, %v2887
      %v2929 = vpack.c.b16 %v2890, %v2889
      %v2930 = vpack.c.b16 %v2892, %v2891
      %v2931 = vpack.c.b16 %v2894, %v2893
      %v2932 = vpack.c.b16 %v2896, %v2895
      %v2933 = vpack.c.b16 %v2898, %v2897
      %v2934 = vpack.c.b16 %v2900, %v2899
      %v2935 = vpack.c.b16 %v2902, %v2901
      %v2936 = vpack.c.b16 %v2904, %v2903
      %2969 = vmatprep.subr.bf16.mxu0 0
      %2970 = vmatpush1.bf16.msra.mxu0 %v2905
      %2971 = vmatprep.subr.bf16.mxu0 0
      %2972 = vmatpush1.bf16.msra.mxu0 %v2906
      %2973 = vmatprep.subr.bf16.mxu0 0
      %2974 = vmatpush1.bf16.msra.mxu0 %v2907
      %2975 = vmatprep.subr.bf16.mxu0 0
      %2976 = vmatpush1.bf16.msra.mxu0 %v2908
      %2977 = vmatprep.subr.bf16.mxu0 0
      %2978 = vmatpush1.bf16.msra.mxu0 %v2909
      %2979 = vmatprep.subr.bf16.mxu0 0
      %2980 = vmatpush1.bf16.msra.mxu0 %v2910
      %2981 = vmatprep.subr.bf16.mxu0 0
      %2982 = vmatpush1.bf16.msra.mxu0 %v2911
      %2983 = vmatprep.subr.bf16.mxu0 0
      %2984 = vmatpush1.bf16.msra.mxu0 %v2912
      %2985 = vmatprep.subr.bf16.mxu0 0
      %2986 = vmatpush1.bf16.msra.mxu0 %v2913
      %2987 = vmatprep.subr.bf16.mxu0 0
      %2988 = vmatpush1.bf16.msra.mxu0 %v2914
      %2989 = vmatprep.subr.bf16.mxu0 0
      %2990 = vmatpush1.bf16.msra.mxu0 %v2915
      %2991 = vmatprep.subr.bf16.mxu0 0
      %2992 = vmatpush1.bf16.msra.mxu0 %v2916
      %2993 = vmatprep.subr.bf16.mxu0 0
      %2994 = vmatpush1.bf16.msra.mxu0 %v2917
      %2995 = vmatprep.subr.bf16.mxu0 0
      %2996 = vmatpush1.bf16.msra.mxu0 %v2918
      %2997 = vmatprep.subr.bf16.mxu0 0
      %2998 = vmatpush1.bf16.msra.mxu0 %v2919
      %2999 = vmatprep.subr.bf16.mxu0 0
      %3000 = vmatpush1.bf16.msra.mxu0 %v2920
      %3001 = vmatprep.mubr.bf16.mxu0 %v2703
      %3002 = vmatmul.mubr.bf16.gmra.mrb[0].mxu0 %v2702
      %v3003 = vpop.f32.mrb[0].mxu0
      %v3004 = vadd.f32 %v2775, %v3003
      %v3005 = vpop.f32.mrb[0].mxu0
      %v3006 = vpop.f32.mrb[0].mxu0
      %v3007 = vadd.f32 %v2775, %v3006
      %v3008 = vpop.f32.mrb[0].mxu0
      %3009 = vdwg.mxu0
      %3010 = vmatprep.subr.bf16.mxu0 0
      %3011 = vmatpush1.bf16.msra.mxu0 %v2921
      %3012 = vmatprep.subr.bf16.mxu0 0
      %3013 = vmatpush1.bf16.msra.mxu0 %v2922
      %3014 = vmatprep.subr.bf16.mxu0 0
      %3015 = vmatpush1.bf16.msra.mxu0 %v2923
      %3016 = vmatprep.subr.bf16.mxu0 0
      %3017 = vmatpush1.bf16.msra.mxu0 %v2924
      %3018 = vmatprep.subr.bf16.mxu0 0
      %3019 = vmatpush1.bf16.msra.mxu0 %v2925
      %3020 = vmatprep.subr.bf16.mxu0 0
      %3021 = vmatpush1.bf16.msra.mxu0 %v2926
      %3022 = vmatprep.subr.bf16.mxu0 0
      %3023 = vmatpush1.bf16.msra.mxu0 %v2927
      %3024 = vmatprep.subr.bf16.mxu0 0
      %3025 = vmatpush1.bf16.msra.mxu0 %v2928
      %3026 = vmatprep.subr.bf16.mxu0 0
      %3027 = vmatpush1.bf16.msra.mxu0 %v2929
      %3028 = vmatprep.subr.bf16.mxu0 0
      %3029 = vmatpush1.bf16.msra.mxu0 %v2930
      %3030 = vmatprep.subr.bf16.mxu0 0
      %3031 = vmatpush1.bf16.msra.mxu0 %v2931
      %3032 = vmatprep.subr.bf16.mxu0 0
      %3033 = vmatpush1.bf16.msra.mxu0 %v2932
      %3034 = vmatprep.subr.bf16.mxu0 0
      %3035 = vmatpush1.bf16.msra.mxu0 %v2933
      %3036 = vmatprep.subr.bf16.mxu0 0
      %3037 = vmatpush1.bf16.msra.mxu0 %v2934
      %3038 = vmatprep.subr.bf16.mxu0 0
      %3039 = vmatpush1.bf16.msra.mxu0 %v2935
      %3040 = vmatprep.subr.bf16.mxu0 0
      %3041 = vmatpush1.bf16.msra.mxu0 %v2936
      %3042 = vmatprep.mubr.bf16.mxu0 %v2705
      %3043 = vmatmul.mubr.bf16.gmra.mrb[0].mxu0 %v2704
      %v3044 = vpop.f32.mrb[0].mxu0
      %v3045 = vadd.f32 %v3004, %v3044
      %v3046 = vpop.f32.mrb[0].mxu0
      %v3047 = vpop.f32.mrb[0].mxu0
      %v3048 = vadd.f32 %v3007, %v3047
      %v3049 = vpop.f32.mrb[0].mxu0
      %3050 = vdwg.mxu0
      %v3051 = vadd.f32 %v2295, %v3045
      %v3052 = vadd.f32 %v2296, %v3048
      %3053 = vst [vmem:[#allocation2] sm:$0xff] %v3051
      %3054 = vst [vmem:[#allocation2 + $0x8] sm:$0xff] %v3052
      %p3055 = scmp.eq.s32.totalorder %s36, 1
      // Predicated region
      $region105: #{_lambda_.1} parent=99 // pred_check
        %p3056 = pneg %p3055
      $region106: #{_lambda_.1} parent=99 // pred_check_branch
        %3058 = sbr.rel (%p3056) target = $region108
      $region107: #{_lambda_.1} parent=99 // pred_region
        %v3059 = vpack.c.bf16 %v3052, %v3051
        %v3060 = vld [vmem:[%s18] sm:$0xf]
        %v3061 = vld [vmem:[%s18 + $0x4] sm:$0xf]
        %v3062 = vld [vmem:[%s18 + $0x8] sm:$0xf]
        %v3063 = vld [vmem:[%s18 + $0xc] sm:$0xf]
        %v3064 = vld [vmem:[%s18 + $0x10] sm:$0xf]
        %v3065 = vld [vmem:[%s18 + $0x14] sm:$0xf]
        %v3066 = vld [vmem:[%s18 + $0x18] sm:$0xf]
        %v3067 = vld [vmem:[%s18 + $0x1c] sm:$0xf]
        %v3068 = vld [vmem:[%s18 + $0x20] sm:$0xf]
        %v3069 = vld [vmem:[%s18 + $0x24] sm:$0xf]
        %v3070 = vld [vmem:[%s18 + $0x28] sm:$0xf]
        %v3071 = vld [vmem:[%s18 + $0x2c] sm:$0xf]
        %v3072 = vld [vmem:[%s18 + $0x30] sm:$0xf]
        %v3073 = vld [vmem:[%s18 + $0x34] sm:$0xf]
        %v3074 = vld [vmem:[%s18 + $0x38] sm:$0xf]
        %v3075 = vld [vmem:[%s18 + $0x3c] sm:$0xf]
        %v3076 = vld [vmem:[%s19] sm:$0x1]
        %v3078 = vlaneseq
        %v3079 = vshrl.u32 %v3078, 7
        %v3080 = vsub.s32 0, %v3079
        %v3081 = vrot.slane %v3076, %v3080
        %v3099 = vunpack.c.l.b16 %v3060
        %v3100 = vunpack.c.l.b16 %v3061
        %v3101 = vunpack.c.l.b16 %v3062
        %v3102 = vunpack.c.l.b16 %v3063
        %v3103 = vunpack.c.l.b16 %v3064
        %v3104 = vunpack.c.l.b16 %v3065
        %v3105 = vunpack.c.l.b16 %v3066
        %v3106 = vunpack.c.l.b16 %v3067
        %v3107 = vunpack.c.l.b16 %v3068
        %v3108 = vunpack.c.l.b16 %v3069
        %v3109 = vunpack.c.l.b16 %v3070
        %v3110 = vunpack.c.l.b16 %v3071
        %v3111 = vunpack.c.l.b16 %v3072
        %v3112 = vunpack.c.l.b16 %v3073
        %v3113 = vunpack.c.l.b16 %v3074
        %v3114 = vunpack.c.l.b16 %v3075
        %v3115 = vpack.c.b16 %v3100, %v3099
        %v3116 = vpack.c.b16 %v3102, %v3101
        %v3117 = vpack.c.b16 %v3104, %v3103
        %v3118 = vpack.c.b16 %v3106, %v3105
        %v3119 = vpack.c.b16 %v3108, %v3107
        %v3120 = vpack.c.b16 %v3110, %v3109
        %v3121 = vpack.c.b16 %v3112, %v3111
        %v3122 = vpack.c.b16 %v3114, %v3113
        %3131 = vmatprep.subr.bf16.mxu0 0
        %3132 = vmatpush1.bf16.msra.mxu0 %v3115
        %3133 = vmatprep.subr.bf16.mxu0 0
        %3134 = vmatpush1.bf16.msra.mxu0 %v3116
        %3135 = vmatprep.subr.bf16.mxu0 0
        %3136 = vmatpush1.bf16.msra.mxu0 %v3117
        %3137 = vmatprep.subr.bf16.mxu0 0
        %3138 = vmatpush1.bf16.msra.mxu0 %v3118
        %3139 = vmatprep.subr.bf16.mxu0 0
        %3140 = vmatpush1.bf16.msra.mxu0 %v3119
        %3141 = vmatprep.subr.bf16.mxu0 0
        %3142 = vmatpush1.bf16.msra.mxu0 %v3120
        %3143 = vmatprep.subr.bf16.mxu0 0
        %3144 = vmatpush1.bf16.msra.mxu0 %v3121
        %3145 = vmatprep.subr.bf16.mxu0 0
        %3146 = vmatpush1.bf16.msra.mxu0 %v3122
        %3147 = vmatprep.subr.bf16.mxu0 0
        %3148 = vmatpush1.bf16.msra.mxu0 0
        %3149 = vmatprep.subr.bf16.mxu0 0
        %3150 = vmatpush1.bf16.msra.mxu0 0
        %3151 = vmatprep.subr.bf16.mxu0 0
        %3152 = vmatpush1.bf16.msra.mxu0 0
        %3153 = vmatprep.subr.bf16.mxu0 0
        %3154 = vmatpush1.bf16.msra.mxu0 0
        %3155 = vmatprep.subr.bf16.mxu0 0
        %3156 = vmatpush1.bf16.msra.mxu0 0
        %3157 = vmatprep.subr.bf16.mxu0 0
        %3158 = vmatpush1.bf16.msra.mxu0 0
        %3159 = vmatprep.subr.bf16.mxu0 0
        %3160 = vmatpush1.bf16.msra.mxu0 0
        %3161 = vmatprep.subr.bf16.mxu0 0
        %3162 = vmatpush1.bf16.msra.mxu0 0
        %3163 = vmatprep.mubr.bf16.mxu0 0
        %3164 = vmatmul.mubr.bf16.gmra.mrb[0].mxu0 %v3059
        %v3165 = vpop.f32.mrb[0].mxu0
        %v3166 = vadd.f32 %v3081, %v3165
        %v3167 = vpop.f32.mrb[0].mxu0
        %v3168 = vpop.f32.mrb[0].mxu0
        %v3169 = vadd.f32 %v3081, %v3168
        %v3170 = vpop.f32.mrb[0].mxu0
        %3171 = vdwg.mxu0
        %3172 = vst [vmem:[%s839] sm:$0xff] %v3166
        %3173 = vst [vmem:[%s839 + $0x8] sm:$0xff] %v3169
      $region108: #{_lambda_.1} parent=99 // pred_fallthru
        _
      %p3174 = scmp.lt.s32.totalorder %s35, 0
      %s3175 = scalar_select %p3174, %s35, 0
      %s3176 = smul.addr %s3175, 2
      %s3177 = smul.addr %s3176, 8
      %s3178 = scalar_lea.vmem %s20, %s3177
      // Predicated region
      $region109: #{_lambda_.1} parent=99 // pred_check
        %p3179 = pneg %p546
      $region110: #{_lambda_.1} parent=99 // pred_check_branch
        %3181 = sbr.rel (%p3179) target = $region112
      $region111: #{_lambda_.1} parent=99 // pred_region
        _
      $region112: #{_lambda_.1} parent=99 // pred_fallthru
        _
      // Predicated region
      $region113: #{_lambda_.1} parent=99 // pred_check
        %p3182 = pneg %p546
      $region114: #{_lambda_.1} parent=99 // pred_check_branch
        %3184 = sbr.rel (%p3182) target = $region116
      $region115: #{_lambda_.1} parent=99 // pred_region
        %p3185 = scmp.lt.s32.totalorder %s35, 0
        %s3186 = scalar_select %p3185, %s35, 0
        %s3187 = smul.addr %s3186, 2
        %s3188 = smul.addr %s3187, 8
        %s3189 = scalar_lea.vmem %s20, %s3188
      $region116: #{_lambda_.1} parent=99 // pred_fallthru
        _
    $region100: #{_lambda_.1} parent=5 // pred_fallthru
      _
    %p3190 = scmp.le.s32.totalorder 2, %s26
    // Predicated region
    $region117: #{_lambda_.1} parent=5 // pred_check
      %p3191 = pneg %p3190
    $region118: #{_lambda_.1} parent=5 // pred_check_branch
      %3193 = sbr.rel (%p3191) target = $region120
    $region119: #{_lambda_.1} parent=5 // pred_region
      %s3194 = ssub.s32 %s26, 2
    $region120: #{_lambda_.1} parent=5 // pred_fallthru
      _
  $region6: #{_lambda_.1} parent=0 // loop_footer
    %s30 = sadd.s32 1, %s26
  $region7: #{_lambda_.1} parent=0 // loop_footer_branch
    %25 = sbr.rel target = $region3
  $region8: #{_lambda_.1} parent=0 // loop_exit
    _

</llo_original>
